<compile_context>
chip_gen: v7x
topology: tpu7x:2x2x1
jax: 0.10.0
libtpu: 0.0.40
codegen_flags: <defaults>
</compile_context>

<pallas_src>
import functools
import math

import jax
import jax.numpy as jnp
from jax import lax
from jax.experimental import pallas as pl
from jax.experimental.pallas import tpu as pltpu

LN_EPS = 1e-12


def _layernorm(x, gamma, beta):
    mu = jnp.mean(x, axis=-1, keepdims=True)
    var = jnp.mean((x - mu) ** 2, axis=-1, keepdims=True)
    return (x - mu) * lax.rsqrt(var + LN_EPS) * gamma + beta


def _gelu_exact(x):
    # BERT / TinyBERT gelu: x * 0.5 * (1 + erf(x / sqrt(2)))
    return 0.5 * x * (1.0 + lax.erf(x / jnp.sqrt(jnp.float32(2.0))))


def _block_kernel(num_heads,
                  xq_ref, xf_ref, mask_ref,
                  wq_ref, bq_ref, wk_ref, bk_ref, wv_ref, bv_ref,
                  wo_ref, bo_ref, g1_ref, be1_ref,
                  w1_ref, b1_ref, w2_ref, b2_ref, g2_ref, be2_ref,
                  out_ref, score_ref):
    f32 = jnp.float32
    bf16 = jnp.bfloat16

    xq_f32 = xq_ref[...].astype(f32)          # (tq, H)  residual path, f32
    xq = xq_f32.astype(bf16)                  # (tq, H)  MXU operand
    xf = xf_ref[...].astype(bf16)             # (S,  H)  full sequence for K/V
    mask = mask_ref[...].astype(f32)          # (1,  S)  additive key mask

    tq, H = xq_f32.shape
    dh = H // num_heads
    scale = 1.0 / math.sqrt(dh)

    # ---- QKV projections: bf16 MXU, f32 accumulate --------------------------
    q = jnp.dot(xq, wq_ref[...], preferred_element_type=f32) + bq_ref[...]
    k = jnp.dot(xf, wk_ref[...], preferred_element_type=f32) + bk_ref[...]
    v = jnp.dot(xf, wv_ref[...], preferred_element_type=f32) + bv_ref[...]

    # Head split (N, H) -> (NH, N, dh).  Static lane slices + leading-dim stack:
    # the minor (lane) dim never changes size, so no unsupported lane reshape.
    def split_heads(t):
        return jnp.stack(
            [t[:, h * dh:(h + 1) * dh] for h in range(num_heads)], axis=0)

    q3 = split_heads(q).astype(bf16)          # (NH, tq, dh)
    k3 = split_heads(k).astype(bf16)          # (NH, S,  dh)
    v3 = split_heads(v).astype(bf16)          # (NH, S,  dh)

    # ---- attention scores, batched over heads --------------------------------
    s = jnp.einsum("hqd,hkd->hqk", q3, k3, preferred_element_type=f32) * scale
    s = s + mask[None, :, :]                  # broadcast over heads & queries
    score_ref[...] = s.astype(score_ref.dtype)  # single store for all heads

    # stable softmax in f32; reciprocal goes to the (idle) EUP slot
    m = jnp.max(s, axis=-1, keepdims=True)
    p = jnp.exp(s - m)
    p = p * pl.reciprocal(jnp.sum(p, axis=-1, keepdims=True), approx=True)

    ctx3 = jnp.einsum("hqk,hkd->hqd", p.astype(bf16), v3,
                      preferred_element_type=f32)            # (NH, tq, dh)
    ctx = jnp.concatenate([ctx3[h] for h in range(num_heads)], axis=-1)  # (tq, H)

    # ---- attention output projection + residual + LayerNorm ------------------
    attn = jnp.dot(ctx.astype(bf16), wo_ref[...], preferred_element_type=f32)
    attn = attn + bo_ref[...]
    ln1 = _layernorm(attn + xq_f32, g1_ref[...], be1_ref[...])

    # ---- feed-forward (exact-erf GELU) + residual + LayerNorm -----------------
    h1 = jnp.dot(ln1.astype(bf16), w1_ref[...], preferred_element_type=f32)
    h1 = _gelu_exact(h1 + b1_ref[...])
    h2 = jnp.dot(h1.astype(bf16), w2_ref[...], preferred_element_type=f32)
    h2 = h2 + b2_ref[...]
    out = _layernorm(h2 + ln1, g2_ref[...], be2_ref[...])

    out_ref[...] = out.astype(out_ref.dtype)


def _vmem_limit_bytes(S, H, I, num_heads, q_tile):
    """Rough VMEM footprint estimate (bytes) with headroom, clamped for v7x."""
    BF, F = 2, 4
    dh = H // num_heads
    weights = (4 * H * H + 2 * H * I) * BF + (6 * H + I) * F
    # pipelined input/output blocks (x-tile, x-full, mask, out, scores), 2 buffers
    io = 2 * F * (q_tile * H + S * H + S + q_tile * H + num_heads * q_tile * S)
    # largest in-kernel temporaries (q/k/v, head-split copies, probs, FFN h1)
    act = F * (3 * S * H + 3 * num_heads * S * dh
               + 2 * num_heads * q_tile * S + q_tile * I + 3 * q_tile * H)
    est = 2 * weights + io + 2 * act + (2 << 20)
    return int(min(max(est, 32 << 20), 56 << 20))


def tiny_bert_block(hidden_states, attn_mask, params, *, num_heads,
                    q_tile=None, score_dtype=jnp.float32):
    """hidden_states: [B, S, H] f32, attn_mask: [B, 1, S] additive f32 mask."""
    B, S, H = hidden_states.shape
    I = params["w_ffn1"].shape[1]
    assert H % num_heads == 0, "hidden size must be divisible by num_heads"

    # ---- sequence (query) tile: multiple of 8 that divides S, else whole S ---
    if q_tile is None:
        q_tile = min(S, 256)
    q_tile = max(1, min(q_tile, S))
    if S % q_tile != 0 or (q_tile % 8 != 0 and q_tile != S):
        q_tile = S
    n_q = S // q_tile

    # ---- bf16 weight matrices at the MXU boundary (biases / LN params in f32)
    bf = lambda a: a.astype(jnp.bfloat16)
    f32a = lambda a: a.astype(jnp.float32)
    weight_args = (
        bf(params["wq"]), f32a(params["bq"]),
        bf(params["wk"]), f32a(params["bk"]),
        bf(params["wv"]), f32a(params["bv"]),
        bf(params["wo"]), f32a(params["bo"]),
        f32a(params["ln1_g"]), f32a(params["ln1_b"]),
        bf(params["w_ffn1"]), f32a(params["b_ffn1"]),
        bf(params["w_ffn2"]), f32a(params["b_ffn2"]),
        f32a(params["ln2_g"]), f32a(params["ln2_b"]),
    )

    kernel = functools.partial(_block_kernel, num_heads)
    out_shape = (
        jax.ShapeDtypeStruct((B, S, H), jnp.float32),
        jax.ShapeDtypeStruct((B, num_heads, S, S), score_dtype),
    )

    def build(single_buffer_weights):
        w_kwargs = (dict(pipeline_mode=pl.Buffered(1))
                    if single_buffer_weights else {})
        w_spec = lambda shp: pl.BlockSpec(shp, lambda b, qi: (0, 0), **w_kwargs)
        in_specs = [
            pl.BlockSpec((None, q_tile, H), lambda b, qi: (b, qi, 0)),  # query tile
            pl.BlockSpec((None, S, H), lambda b, qi: (b, 0, 0)),        # full seq (K/V)
            pl.BlockSpec((None, 1, S), lambda b, qi: (b, 0, 0)),        # additive mask
            w_spec((H, H)), w_spec((1, H)),                             # Wq, bq
            w_spec((H, H)), w_spec((1, H)),                             # Wk, bk
            w_spec((H, H)), w_spec((1, H)),                             # Wv, bv
            w_spec((H, H)), w_spec((1, H)),                             # Wo, bo
            w_spec((1, H)), w_spec((1, H)),                             # LN1 gamma, beta
            w_spec((H, I)), w_spec((1, I)),                             # FFN W1, b1
            w_spec((I, H)), w_spec((1, H)),                             # FFN W2, b2
            w_spec((1, H)), w_spec((1, H)),                             # LN2 gamma, beta
        ]
        out_specs = (
            pl.BlockSpec((None, q_tile, H), lambda b, qi: (b, qi, 0)),
            pl.BlockSpec((None, num_heads, q_tile, S), lambda b, qi: (b, 0, qi, 0)),
        )
        return pl.pallas_call(
            kernel,
            out_shape=out_shape,
            grid_spec=pltpu.PrefetchScalarGridSpec(
                num_scalar_prefetch=0,
                grid=(B, n_q),
                in_specs=in_specs,
                out_specs=out_specs,
            ),
            compiler_params=pltpu.CompilerParams(
                dimension_semantics=("parallel", "parallel"),
                vmem_limit_bytes=_vmem_limit_bytes(S, H, I, num_heads, q_tile),
            ),
        )

    args = (hidden_states, hidden_states, attn_mask) + weight_args
    try:
        # Single-buffer the constant weight blocks (block index never changes);
        # critical for v7x's 64 MiB VMEM at BERT-base sizes.
        return build(True)(*args)
    except Exception:
        # Fallback for Pallas versions that reject pl.Buffered(1).
        return build(False)(*args)


def _reference(hidden_states, attn_mask, params, *, num_heads):
    """Pure-JAX reference (f32 math, weights rounded to bf16 like the kernel)."""
    f32 = jnp.float32
    w = lambda name: params[name].astype(jnp.bfloat16).astype(f32)
    x = hidden_states.astype(f32)
    B, S, H = x.shape
    dh = H // num_heads

    def proj(wn, bn):
        return jnp.einsum("bsh,hk->bsk", x, w(wn)) + params[bn]

    q, k, v = proj("wq", "bq"), proj("wk", "bk"), proj("wv", "bv")
    split = lambda t: t.reshape(B, S, num_heads, dh).transpose(0, 2, 1, 3)
    qh, kh, vh = split(q), split(k), split(v)
    s = jnp.einsum("bhqd,bhkd->bhqk", qh, kh) / math.sqrt(dh)
    s = s + attn_mask[:, None, :, :]
    p = jax.nn.softmax(s, axis=-1)
    ctx = jnp.einsum("bhqk,bhkd->bhqd", p, vh).transpose(0, 2, 1, 3).reshape(B, S, H)
    attn = ctx @ w("wo") + params["bo"]

    def ln(y, g, b):
        mu = jnp.mean(y, -1, keepdims=True)
        var = jnp.mean((y - mu) ** 2, -1, keepdims=True)
        return (y - mu) / jnp.sqrt(var + LN_EPS) * g + b

    ln1 = ln(attn + x, params["ln1_g"], params["ln1_b"])
    h1 = ln1 @ w("w_ffn1") + params["b_ffn1"]
    h1 = 0.5 * h1 * (1.0 + lax.erf(h1 / jnp.sqrt(jnp.float32(2.0))))
    h2 = h1 @ w("w_ffn2") + params["b_ffn2"]
    out = ln(h2 + ln1, params["ln2_g"], params["ln2_b"])
    return out, s


def init_params(key, hidden, intermediate):
    ks = jax.random.split(key, 6)
    n = lambda k, shp: (0.02 * jax.random.normal(k, shp)).astype(jnp.float32)
    return {
        "wq": n(ks[0], (hidden, hidden)), "bq": jnp.zeros((1, hidden), jnp.float32),
        "wk": n(ks[1], (hidden, hidden)), "bk": jnp.zeros((1, hidden), jnp.float32),
        "wv": n(ks[2], (hidden, hidden)), "bv": jnp.zeros((1, hidden), jnp.float32),
        "wo": n(ks[3], (hidden, hidden)), "bo": jnp.zeros((1, hidden), jnp.float32),
        "ln1_g": jnp.ones((1, hidden), jnp.float32),
        "ln1_b": jnp.zeros((1, hidden), jnp.float32),
        "w_ffn1": n(ks[4], (hidden, intermediate)),
        "b_ffn1": jnp.zeros((1, intermediate), jnp.float32),
        "w_ffn2": n(ks[5], (intermediate, hidden)),
        "b_ffn2": jnp.zeros((1, hidden), jnp.float32),
        "ln2_g": jnp.ones((1, hidden), jnp.float32),
        "ln2_b": jnp.zeros((1, hidden), jnp.float32),
    }


if __name__ == "__main__":
    B, S, H, NH, I = 2, 8, 32, 4, 64

    key = jax.random.PRNGKey(0)
    k_x, k_p = jax.random.split(key)
    hidden_states = jax.random.normal(k_x, (B, S, H), dtype=jnp.float32)
    # additive mask: last 2 key positions of batch 1 masked out
    mask = jnp.zeros((B, 1, S), jnp.float32)
    mask = mask.at[1, 0, -2:].set(-10000.0)

    params = init_params(k_p, H, I)

    output, attn_score = tiny_bert_block(hidden_states, mask, params, num_heads=NH)
    jax.block_until_ready((output, attn_score))
    assert output.shape == (B, S, H) and attn_score.shape == (B, NH, S, S)

    ref_out, ref_score = _reference(hidden_states, mask, params, num_heads=NH)
    assert jnp.allclose(output, ref_out, atol=5e-2, rtol=5e-2), "output mismatch"
    assert jnp.allclose(attn_score.astype(jnp.float32), ref_score,
                        atol=5e-2, rtol=5e-2), "attn_score mismatch"
    print("KERNEL_OK")
</pallas_src>

<mosaic_0001>
module attributes {stable_mosaic.version = 11 : i64} {
  func.func @_block_kernel(%arg0: i32, %arg1: i32, %arg2: memref<1x8x32xf32, #tpu.memory_space<vmem>>, %arg3: memref<1x8x32xf32, #tpu.memory_space<vmem>>, %arg4: memref<1x1x8xf32, #tpu.memory_space<vmem>>, %arg5: memref<32x32xbf16, #tpu.memory_space<vmem>>, %arg6: memref<1x32xf32, #tpu.memory_space<vmem>>, %arg7: memref<32x32xbf16, #tpu.memory_space<vmem>>, %arg8: memref<1x32xf32, #tpu.memory_space<vmem>>, %arg9: memref<32x32xbf16, #tpu.memory_space<vmem>>, %arg10: memref<1x32xf32, #tpu.memory_space<vmem>>, %arg11: memref<32x32xbf16, #tpu.memory_space<vmem>>, %arg12: memref<1x32xf32, #tpu.memory_space<vmem>>, %arg13: memref<1x32xf32, #tpu.memory_space<vmem>>, %arg14: memref<1x32xf32, #tpu.memory_space<vmem>>, %arg15: memref<32x64xbf16, #tpu.memory_space<vmem>>, %arg16: memref<1x64xf32, #tpu.memory_space<vmem>>, %arg17: memref<64x32xbf16, #tpu.memory_space<vmem>>, %arg18: memref<1x32xf32, #tpu.memory_space<vmem>>, %arg19: memref<1x32xf32, #tpu.memory_space<vmem>>, %arg20: memref<1x32xf32, #tpu.memory_space<vmem>>, %arg21: memref<1x8x32xf32, #tpu.memory_space<vmem>>, %arg22: memref<1x4x8x8xf32, #tpu.memory_space<vmem>>) attributes {dimension_semantics = [#tpu.dimension_semantics<parallel>, #tpu.dimension_semantics<parallel>], iteration_bounds = array<i64: 2, 1>, scalar_prefetch = 0 : i64, scratch_operands = 0 : i64, tpu.core_type = #tpu.core_type<tc>, window_params = [{transform_indices = @transform_0, window_bounds = array<i64: 1, 8, 32>}, {transform_indices = @transform_1, window_bounds = array<i64: 1, 8, 32>}, {transform_indices = @transform_2, window_bounds = array<i64: 1, 1, 8>}, {pipeline_mode = #tpu.pipeline_mode<synchronous>, transform_indices = @transform_3, window_bounds = array<i64: 32, 32>}, {pipeline_mode = #tpu.pipeline_mode<synchronous>, transform_indices = @transform_4, window_bounds = array<i64: 1, 32>}, {pipeline_mode = #tpu.pipeline_mode<synchronous>, transform_indices = @transform_5, window_bounds = array<i64: 32, 32>}, {pipeline_mode = #tpu.pipeline_mode<synchronous>, transform_indices = @transform_6, window_bounds = array<i64: 1, 32>}, {pipeline_mode = #tpu.pipeline_mode<synchronous>, transform_indices = @transform_7, window_bounds = array<i64: 32, 32>}, {pipeline_mode = #tpu.pipeline_mode<synchronous>, transform_indices = @transform_8, window_bounds = array<i64: 1, 32>}, {pipeline_mode = #tpu.pipeline_mode<synchronous>, transform_indices = @transform_9, window_bounds = array<i64: 32, 32>}, {pipeline_mode = #tpu.pipeline_mode<synchronous>, transform_indices = @transform_10, window_bounds = array<i64: 1, 32>}, {pipeline_mode = #tpu.pipeline_mode<synchronous>, transform_indices = @transform_11, window_bounds = array<i64: 1, 32>}, {pipeline_mode = #tpu.pipeline_mode<synchronous>, transform_indices = @transform_12, window_bounds = array<i64: 1, 32>}, {pipeline_mode = #tpu.pipeline_mode<synchronous>, transform_indices = @transform_13, window_bounds = array<i64: 32, 64>}, {pipeline_mode = #tpu.pipeline_mode<synchronous>, transform_indices = @transform_14, window_bounds = array<i64: 1, 64>}, {pipeline_mode = #tpu.pipeline_mode<synchronous>, transform_indices = @transform_15, window_bounds = array<i64: 64, 32>}, {pipeline_mode = #tpu.pipeline_mode<synchronous>, transform_indices = @transform_16, window_bounds = array<i64: 1, 32>}, {pipeline_mode = #tpu.pipeline_mode<synchronous>, transform_indices = @transform_17, window_bounds = array<i64: 1, 32>}, {pipeline_mode = #tpu.pipeline_mode<synchronous>, transform_indices = @transform_18, window_bounds = array<i64: 1, 32>}, {transform_indices = @transform_19, window_bounds = array<i64: 1, 8, 32>}, {transform_indices = @transform_20, window_bounds = array<i64: 1, 4, 8, 8>}]} {
    %c0 = arith.constant 0 : index
    %c0_0 = arith.constant 0 : index
    %c0_1 = arith.constant 0 : index
    %0 = vector.load %arg2[%c0, %c0_0, %c0_1] : memref<1x8x32xf32, #tpu.memory_space<vmem>>, vector<1x8x32xf32>
    %1 = vector.shape_cast %0 : vector<1x8x32xf32> to vector<8x32xf32>
    %2 = arith.truncf %1 : vector<8x32xf32> to vector<8x32xbf16>
    %c0_2 = arith.constant 0 : index
    %c0_3 = arith.constant 0 : index
    %c0_4 = arith.constant 0 : index
    %3 = vector.load %arg3[%c0_2, %c0_3, %c0_4] : memref<1x8x32xf32, #tpu.memory_space<vmem>>, vector<1x8x32xf32>
    %4 = vector.shape_cast %3 : vector<1x8x32xf32> to vector<8x32xf32>
    %5 = arith.truncf %4 : vector<8x32xf32> to vector<8x32xbf16>
    %c0_5 = arith.constant 0 : index
    %c0_6 = arith.constant 0 : index
    %c0_7 = arith.constant 0 : index
    %6 = vector.load %arg4[%c0_5, %c0_6, %c0_7] : memref<1x1x8xf32, #tpu.memory_space<vmem>>, vector<1x1x8xf32>
    %7 = vector.shape_cast %6 : vector<1x1x8xf32> to vector<1x8xf32>
    %c0_8 = arith.constant 0 : index
    %c0_9 = arith.constant 0 : index
    %8 = vector.load %arg5[%c0_8, %c0_9] : memref<32x32xbf16, #tpu.memory_space<vmem>>, vector<32x32xbf16>
    %cst = arith.constant dense<0.000000e+00> : vector<8x32xf32>
    %9 = tpu.matmul %2, %8, %cst {dimension_numbers = #tpu.dot_dimension_numbers<[1], [0], [0], [1], [0, 0, 1, 1], [], []>} : vector<8x32xbf16>, vector<32x32xbf16>, vector<8x32xf32> -> vector<8x32xf32>
    %c0_10 = arith.constant 0 : index
    %c0_11 = arith.constant 0 : index
    %10 = vector.load %arg6[%c0_10, %c0_11] : memref<1x32xf32, #tpu.memory_space<vmem>>, vector<1x32xf32>
    %11 = vector.broadcast %10 : vector<1x32xf32> to vector<8x32xf32>
    %12 = arith.addf %9, %11 : vector<8x32xf32>
    %c0_12 = arith.constant 0 : index
    %c0_13 = arith.constant 0 : index
    %13 = vector.load %arg7[%c0_12, %c0_13] : memref<32x32xbf16, #tpu.memory_space<vmem>>, vector<32x32xbf16>
    %cst_14 = arith.constant dense<0.000000e+00> : vector<8x32xf32>
    %14 = tpu.matmul %5, %13, %cst_14 {dimension_numbers = #tpu.dot_dimension_numbers<[1], [0], [0], [1], [0, 0, 1, 1], [], []>} : vector<8x32xbf16>, vector<32x32xbf16>, vector<8x32xf32> -> vector<8x32xf32>
    %c0_15 = arith.constant 0 : index
    %c0_16 = arith.constant 0 : index
    %15 = vector.load %arg8[%c0_15, %c0_16] : memref<1x32xf32, #tpu.memory_space<vmem>>, vector<1x32xf32>
    %16 = vector.broadcast %15 : vector<1x32xf32> to vector<8x32xf32>
    %17 = arith.addf %14, %16 : vector<8x32xf32>
    %c0_17 = arith.constant 0 : index
    %c0_18 = arith.constant 0 : index
    %18 = vector.load %arg9[%c0_17, %c0_18] : memref<32x32xbf16, #tpu.memory_space<vmem>>, vector<32x32xbf16>
    %cst_19 = arith.constant dense<0.000000e+00> : vector<8x32xf32>
    %19 = tpu.matmul %5, %18, %cst_19 {dimension_numbers = #tpu.dot_dimension_numbers<[1], [0], [0], [1], [0, 0, 1, 1], [], []>} : vector<8x32xbf16>, vector<32x32xbf16>, vector<8x32xf32> -> vector<8x32xf32>
    %c0_20 = arith.constant 0 : index
    %c0_21 = arith.constant 0 : index
    %20 = vector.load %arg10[%c0_20, %c0_21] : memref<1x32xf32, #tpu.memory_space<vmem>>, vector<1x32xf32>
    %21 = vector.broadcast %20 : vector<1x32xf32> to vector<8x32xf32>
    %22 = arith.addf %19, %21 : vector<8x32xf32>
    %23 = vector.extract_strided_slice %12 {offsets = [0, 0], sizes = [8, 8], strides = [1, 1]} : vector<8x32xf32> to vector<8x8xf32>
    %24 = vector.extract_strided_slice %12 {offsets = [0, 8], sizes = [8, 8], strides = [1, 1]} : vector<8x32xf32> to vector<8x8xf32>
    %25 = vector.extract_strided_slice %12 {offsets = [0, 16], sizes = [8, 8], strides = [1, 1]} : vector<8x32xf32> to vector<8x8xf32>
    %26 = vector.extract_strided_slice %12 {offsets = [0, 24], sizes = [8, 8], strides = [1, 1]} : vector<8x32xf32> to vector<8x8xf32>
    %27 = vector.shape_cast %23 : vector<8x8xf32> to vector<1x8x8xf32>
    %28 = vector.shape_cast %24 : vector<8x8xf32> to vector<1x8x8xf32>
    %29 = vector.shape_cast %25 : vector<8x8xf32> to vector<1x8x8xf32>
    %30 = vector.shape_cast %26 : vector<8x8xf32> to vector<1x8x8xf32>
    %31 = tpu.concatenate %27, %28, %29, %30 in 0 : vector<1x8x8xf32>, vector<1x8x8xf32>, vector<1x8x8xf32>, vector<1x8x8xf32> -> vector<4x8x8xf32>
    %32 = arith.truncf %31 : vector<4x8x8xf32> to vector<4x8x8xbf16>
    %33 = vector.extract_strided_slice %17 {offsets = [0, 0], sizes = [8, 8], strides = [1, 1]} : vector<8x32xf32> to vector<8x8xf32>
    %34 = vector.extract_strided_slice %17 {offsets = [0, 8], sizes = [8, 8], strides = [1, 1]} : vector<8x32xf32> to vector<8x8xf32>
    %35 = vector.extract_strided_slice %17 {offsets = [0, 16], sizes = [8, 8], strides = [1, 1]} : vector<8x32xf32> to vector<8x8xf32>
    %36 = vector.extract_strided_slice %17 {offsets = [0, 24], sizes = [8, 8], strides = [1, 1]} : vector<8x32xf32> to vector<8x8xf32>
    %37 = vector.shape_cast %33 : vector<8x8xf32> to vector<1x8x8xf32>
    %38 = vector.shape_cast %34 : vector<8x8xf32> to vector<1x8x8xf32>
    %39 = vector.shape_cast %35 : vector<8x8xf32> to vector<1x8x8xf32>
    %40 = vector.shape_cast %36 : vector<8x8xf32> to vector<1x8x8xf32>
    %41 = tpu.concatenate %37, %38, %39, %40 in 0 : vector<1x8x8xf32>, vector<1x8x8xf32>, vector<1x8x8xf32>, vector<1x8x8xf32> -> vector<4x8x8xf32>
    %42 = arith.truncf %41 : vector<4x8x8xf32> to vector<4x8x8xbf16>
    %43 = vector.extract_strided_slice %22 {offsets = [0, 0], sizes = [8, 8], strides = [1, 1]} : vector<8x32xf32> to vector<8x8xf32>
    %44 = vector.extract_strided_slice %22 {offsets = [0, 8], sizes = [8, 8], strides = [1, 1]} : vector<8x32xf32> to vector<8x8xf32>
    %45 = vector.extract_strided_slice %22 {offsets = [0, 16], sizes = [8, 8], strides = [1, 1]} : vector<8x32xf32> to vector<8x8xf32>
    %46 = vector.extract_strided_slice %22 {offsets = [0, 24], sizes = [8, 8], strides = [1, 1]} : vector<8x32xf32> to vector<8x8xf32>
    %47 = vector.shape_cast %43 : vector<8x8xf32> to vector<1x8x8xf32>
    %48 = vector.shape_cast %44 : vector<8x8xf32> to vector<1x8x8xf32>
    %49 = vector.shape_cast %45 : vector<8x8xf32> to vector<1x8x8xf32>
    %50 = vector.shape_cast %46 : vector<8x8xf32> to vector<1x8x8xf32>
    %51 = tpu.concatenate %47, %48, %49, %50 in 0 : vector<1x8x8xf32>, vector<1x8x8xf32>, vector<1x8x8xf32>, vector<1x8x8xf32> -> vector<4x8x8xf32>
    %52 = arith.truncf %51 : vector<4x8x8xf32> to vector<4x8x8xbf16>
    "tpu.trace_start"() <{level = 10 : i32, message = "hqd,hkd->hqk"}> : () -> ()
    %cst_22 = arith.constant dense<0.000000e+00> : vector<4x8x8xf32>
    %53 = tpu.matmul %32, %42, %cst_22 {dimension_numbers = #tpu.dot_dimension_numbers<[2], [2], [1], [1], [0, 0, 0, 1, 1, 1], [0], [0]>} : vector<4x8x8xbf16>, vector<4x8x8xbf16>, vector<4x8x8xf32> -> vector<4x8x8xf32>
    "tpu.trace_stop"() : () -> ()
    %cst_23 = arith.constant 0.353553385 : f32
    %54 = vector.broadcast %cst_23 : f32 to vector<4x8x8xf32>
    %55 = arith.mulf %53, %54 : vector<4x8x8xf32>
    %56 = vector.shape_cast %7 : vector<1x8xf32> to vector<1x1x8xf32>
    %57 = vector.broadcast %56 : vector<1x1x8xf32> to vector<4x8x8xf32>
    %58 = arith.addf %55, %57 : vector<4x8x8xf32>
    %c0_24 = arith.constant 0 : index
    %c0_25 = arith.constant 0 : index
    %c0_26 = arith.constant 0 : index
    %c0_27 = arith.constant 0 : index
    %59 = vector.load %arg22[%c0_24, %c0_25, %c0_26, %c0_27] : memref<1x4x8x8xf32, #tpu.memory_space<vmem>>, vector<1x4x8x8xf32>
    %60 = vector.shape_cast %59 : vector<1x4x8x8xf32> to vector<4x8x8xf32>
    %61 = vector.shape_cast %58 : vector<4x8x8xf32> to vector<1x4x8x8xf32>
    tpu.vector_store %arg22[%c0_24, %c0_25, %c0_26, %c0_27], %61 {strides = array<i32>} : memref<1x4x8x8xf32, #tpu.memory_space<vmem>>, vector<1x4x8x8xf32>,
    %cst_28 = arith.constant dense<0xFF800000> : vector<4x8xf32>
    %62 = vector.multi_reduction <maximumf>, %58, %cst_28 [2] : vector<4x8x8xf32> to vector<4x8xf32>
    %63 = vector.shape_cast %62 : vector<4x8xf32> to vector<4x8x1xf32>
    %64 = vector.broadcast %63 : vector<4x8x1xf32> to vector<4x8x8xf32>
    %65 = arith.subf %58, %64 : vector<4x8x8xf32>
    %66 = math.exp %65 : vector<4x8x8xf32>
    %cst_29 = arith.constant dense<0.000000e+00> : vector<4x8xf32>
    %67 = vector.multi_reduction <add>, %66, %cst_29 [2] : vector<4x8x8xf32> to vector<4x8xf32>
    %68 = vector.shape_cast %67 : vector<4x8xf32> to vector<4x8x1xf32>
    %69 = tpu.reciprocal %68 {approx = true} : vector<4x8x1xf32> -> vector<4x8x1xf32>
    %70 = vector.broadcast %69 : vector<4x8x1xf32> to vector<4x8x8xf32>
    %71 = arith.mulf %66, %70 : vector<4x8x8xf32>
    %72 = arith.truncf %71 : vector<4x8x8xf32> to vector<4x8x8xbf16>
    "tpu.trace_start"() <{level = 10 : i32, message = "hqk,hkd->hqd"}> : () -> ()
    %cst_30 = arith.constant dense<0.000000e+00> : vector<4x8x8xf32>
    %73 = tpu.matmul %72, %52, %cst_30 {dimension_numbers = #tpu.dot_dimension_numbers<[2], [1], [1], [2], [0, 0, 0, 1, 1, 2], [0], [0]>} : vector<4x8x8xbf16>, vector<4x8x8xbf16>, vector<4x8x8xf32> -> vector<4x8x8xf32>
    "tpu.trace_stop"() : () -> ()
    %74 = vector.extract_strided_slice %73 {offsets = [0, 0, 0], sizes = [1, 8, 8], strides = [1, 1, 1]} : vector<4x8x8xf32> to vector<1x8x8xf32>
    %75 = vector.shape_cast %74 : vector<1x8x8xf32> to vector<8x8xf32>
    %76 = vector.extract_strided_slice %73 {offsets = [1, 0, 0], sizes = [1, 8, 8], strides = [1, 1, 1]} : vector<4x8x8xf32> to vector<1x8x8xf32>
    %77 = vector.shape_cast %76 : vector<1x8x8xf32> to vector<8x8xf32>
    %78 = vector.extract_strided_slice %73 {offsets = [2, 0, 0], sizes = [1, 8, 8], strides = [1, 1, 1]} : vector<4x8x8xf32> to vector<1x8x8xf32>
    %79 = vector.shape_cast %78 : vector<1x8x8xf32> to vector<8x8xf32>
    %80 = vector.extract_strided_slice %73 {offsets = [3, 0, 0], sizes = [1, 8, 8], strides = [1, 1, 1]} : vector<4x8x8xf32> to vector<1x8x8xf32>
    %81 = vector.shape_cast %80 : vector<1x8x8xf32> to vector<8x8xf32>
    %82 = tpu.concatenate %75, %77, %79, %81 in 1 : vector<8x8xf32>, vector<8x8xf32>, vector<8x8xf32>, vector<8x8xf32> -> vector<8x32xf32>
    %83 = arith.truncf %82 : vector<8x32xf32> to vector<8x32xbf16>
    %c0_31 = arith.constant 0 : index
    %c0_32 = arith.constant 0 : index
    %84 = vector.load %arg11[%c0_31, %c0_32] : memref<32x32xbf16, #tpu.memory_space<vmem>>, vector<32x32xbf16>
    %cst_33 = arith.constant dense<0.000000e+00> : vector<8x32xf32>
    %85 = tpu.matmul %83, %84, %cst_33 {dimension_numbers = #tpu.dot_dimension_numbers<[1], [0], [0], [1], [0, 0, 1, 1], [], []>} : vector<8x32xbf16>, vector<32x32xbf16>, vector<8x32xf32> -> vector<8x32xf32>
    %c0_34 = arith.constant 0 : index
    %c0_35 = arith.constant 0 : index
    %86 = vector.load %arg12[%c0_34, %c0_35] : memref<1x32xf32, #tpu.memory_space<vmem>>, vector<1x32xf32>
    %87 = vector.broadcast %86 : vector<1x32xf32> to vector<8x32xf32>
    %88 = arith.addf %85, %87 : vector<8x32xf32>
    %89 = arith.addf %88, %1 : vector<8x32xf32>
    %c0_36 = arith.constant 0 : index
    %c0_37 = arith.constant 0 : index
    %90 = vector.load %arg13[%c0_36, %c0_37] : memref<1x32xf32, #tpu.memory_space<vmem>>, vector<1x32xf32>
    %c0_38 = arith.constant 0 : index
    %c0_39 = arith.constant 0 : index
    %91 = vector.load %arg14[%c0_38, %c0_39] : memref<1x32xf32, #tpu.memory_space<vmem>>, vector<1x32xf32>
    %cst_40 = arith.constant dense<0.000000e+00> : vector<8xf32>
    %92 = vector.multi_reduction <add>, %89, %cst_40 [1] : vector<8x32xf32> to vector<8xf32>
    %93 = vector.shape_cast %92 : vector<8xf32> to vector<8x1xf32>
    %cst_41 = arith.constant 3.200000e+01 : f32
    %94 = vector.broadcast %cst_41 : f32 to vector<8x1xf32>
    %95 = arith.divf %93, %94 : vector<8x1xf32>
    %96 = vector.broadcast %95 : vector<8x1xf32> to vector<8x32xf32>
    %97 = arith.subf %89, %96 : vector<8x32xf32>
    %98 = arith.mulf %97, %97 : vector<8x32xf32>
    %cst_42 = arith.constant dense<0.000000e+00> : vector<8xf32>
    %99 = vector.multi_reduction <add>, %98, %cst_42 [1] : vector<8x32xf32> to vector<8xf32>
    %100 = vector.shape_cast %99 : vector<8xf32> to vector<8x1xf32>
    %cst_43 = arith.constant 3.200000e+01 : f32
    %101 = vector.broadcast %cst_43 : f32 to vector<8x1xf32>
    %102 = arith.divf %100, %101 : vector<8x1xf32>
    %103 = vector.broadcast %95 : vector<8x1xf32> to vector<8x32xf32>
    %104 = arith.subf %89, %103 : vector<8x32xf32>
    %cst_44 = arith.constant 9.99999996E-13 : f32
    %105 = vector.broadcast %cst_44 : f32 to vector<8x1xf32>
    %106 = arith.addf %102, %105 : vector<8x1xf32>
    %107 = math.rsqrt %106 : vector<8x1xf32>
    %108 = vector.broadcast %107 : vector<8x1xf32> to vector<8x32xf32>
    %109 = arith.mulf %104, %108 : vector<8x32xf32>
    %110 = vector.broadcast %90 : vector<1x32xf32> to vector<8x32xf32>
    %111 = arith.mulf %109, %110 : vector<8x32xf32>
    %112 = vector.broadcast %91 : vector<1x32xf32> to vector<8x32xf32>
    %113 = arith.addf %111, %112 : vector<8x32xf32>
    %114 = arith.truncf %113 : vector<8x32xf32> to vector<8x32xbf16>
    %c0_45 = arith.constant 0 : index
    %c0_46 = arith.constant 0 : index
    %115 = vector.load %arg15[%c0_45, %c0_46] : memref<32x64xbf16, #tpu.memory_space<vmem>>, vector<32x64xbf16>
    %cst_47 = arith.constant dense<0.000000e+00> : vector<8x64xf32>
    %116 = tpu.matmul %114, %115, %cst_47 {dimension_numbers = #tpu.dot_dimension_numbers<[1], [0], [0], [1], [0, 0, 1, 1], [], []>} : vector<8x32xbf16>, vector<32x64xbf16>, vector<8x64xf32> -> vector<8x64xf32>
    %c0_48 = arith.constant 0 : index
    %c0_49 = arith.constant 0 : index
    %117 = vector.load %arg16[%c0_48, %c0_49] : memref<1x64xf32, #tpu.memory_space<vmem>>, vector<1x64xf32>
    %118 = vector.broadcast %117 : vector<1x64xf32> to vector<8x64xf32>
    %119 = arith.addf %116, %118 : vector<8x64xf32>
    %cst_50 = arith.constant 5.000000e-01 : f32
    %120 = vector.broadcast %cst_50 : f32 to vector<8x64xf32>
    %121 = arith.mulf %120, %119 : vector<8x64xf32>
    %cst_51 = arith.constant 2.000000e+00 : f32
    %122 = math.sqrt %cst_51 : f32
    %123 = vector.broadcast %122 : f32 to vector<8x64xf32>
    %124 = arith.divf %119, %123 : vector<8x64xf32>
    %125 = math.erf %124 : vector<8x64xf32>
    %cst_52 = arith.constant 1.000000e+00 : f32
    %126 = vector.broadcast %cst_52 : f32 to vector<8x64xf32>
    %127 = arith.addf %126, %125 : vector<8x64xf32>
    %128 = arith.mulf %121, %127 : vector<8x64xf32>
    %129 = arith.truncf %128 : vector<8x64xf32> to vector<8x64xbf16>
    %c0_53 = arith.constant 0 : index
    %c0_54 = arith.constant 0 : index
    %130 = vector.load %arg17[%c0_53, %c0_54] : memref<64x32xbf16, #tpu.memory_space<vmem>>, vector<64x32xbf16>
    %cst_55 = arith.constant dense<0.000000e+00> : vector<8x32xf32>
    %131 = tpu.matmul %129, %130, %cst_55 {dimension_numbers = #tpu.dot_dimension_numbers<[1], [0], [0], [1], [0, 0, 1, 1], [], []>} : vector<8x64xbf16>, vector<64x32xbf16>, vector<8x32xf32> -> vector<8x32xf32>
    %c0_56 = arith.constant 0 : index
    %c0_57 = arith.constant 0 : index
    %132 = vector.load %arg18[%c0_56, %c0_57] : memref<1x32xf32, #tpu.memory_space<vmem>>, vector<1x32xf32>
    %133 = vector.broadcast %132 : vector<1x32xf32> to vector<8x32xf32>
    %134 = arith.addf %131, %133 : vector<8x32xf32>
    %135 = arith.addf %134, %113 : vector<8x32xf32>
    %c0_58 = arith.constant 0 : index
    %c0_59 = arith.constant 0 : index
    %136 = vector.load %arg19[%c0_58, %c0_59] : memref<1x32xf32, #tpu.memory_space<vmem>>, vector<1x32xf32>
    %c0_60 = arith.constant 0 : index
    %c0_61 = arith.constant 0 : index
    %137 = vector.load %arg20[%c0_60, %c0_61] : memref<1x32xf32, #tpu.memory_space<vmem>>, vector<1x32xf32>
    %cst_62 = arith.constant dense<0.000000e+00> : vector<8xf32>
    %138 = vector.multi_reduction <add>, %135, %cst_62 [1] : vector<8x32xf32> to vector<8xf32>
    %139 = vector.shape_cast %138 : vector<8xf32> to vector<8x1xf32>
    %cst_63 = arith.constant 3.200000e+01 : f32
    %140 = vector.broadcast %cst_63 : f32 to vector<8x1xf32>
    %141 = arith.divf %139, %140 : vector<8x1xf32>
    %142 = vector.broadcast %141 : vector<8x1xf32> to vector<8x32xf32>
    %143 = arith.subf %135, %142 : vector<8x32xf32>
    %144 = arith.mulf %143, %143 : vector<8x32xf32>
    %cst_64 = arith.constant dense<0.000000e+00> : vector<8xf32>
    %145 = vector.multi_reduction <add>, %144, %cst_64 [1] : vector<8x32xf32> to vector<8xf32>
    %146 = vector.shape_cast %145 : vector<8xf32> to vector<8x1xf32>
    %cst_65 = arith.constant 3.200000e+01 : f32
    %147 = vector.broadcast %cst_65 : f32 to vector<8x1xf32>
    %148 = arith.divf %146, %147 : vector<8x1xf32>
    %149 = vector.broadcast %141 : vector<8x1xf32> to vector<8x32xf32>
    %150 = arith.subf %135, %149 : vector<8x32xf32>
    %cst_66 = arith.constant 9.99999996E-13 : f32
    %151 = vector.broadcast %cst_66 : f32 to vector<8x1xf32>
    %152 = arith.addf %148, %151 : vector<8x1xf32>
    %153 = math.rsqrt %152 : vector<8x1xf32>
    %154 = vector.broadcast %153 : vector<8x1xf32> to vector<8x32xf32>
    %155 = arith.mulf %150, %154 : vector<8x32xf32>
    %156 = vector.broadcast %136 : vector<1x32xf32> to vector<8x32xf32>
    %157 = arith.mulf %155, %156 : vector<8x32xf32>
    %158 = vector.broadcast %137 : vector<1x32xf32> to vector<8x32xf32>
    %159 = arith.addf %157, %158 : vector<8x32xf32>
    %c0_67 = arith.constant 0 : index
    %c0_68 = arith.constant 0 : index
    %c0_69 = arith.constant 0 : index
    %160 = vector.load %arg21[%c0_67, %c0_68, %c0_69] : memref<1x8x32xf32, #tpu.memory_space<vmem>>, vector<1x8x32xf32>
    %161 = vector.shape_cast %160 : vector<1x8x32xf32> to vector<8x32xf32>
    %162 = vector.shape_cast %159 : vector<8x32xf32> to vector<1x8x32xf32>
    tpu.vector_store %arg21[%c0_67, %c0_68, %c0_69], %162 {strides = array<i32>} : memref<1x8x32xf32, #tpu.memory_space<vmem>>, vector<1x8x32xf32>,
    return
  }
  func.func @transform_0(%arg0: i32, %arg1: i32) -> (i32, i32, i32) {
    %c0_i32 = arith.constant 0 : i32
    %c0_i32_0 = arith.constant 0 : i32
    return %arg0, %arg1, %c0_i32 : i32, i32, i32
  }
  func.func @transform_1(%arg0: i32, %arg1: i32) -> (i32, i32, i32) {
    %c0_i32 = arith.constant 0 : i32
    %c0_i32_0 = arith.constant 0 : i32
    %c0_i32_1 = arith.constant 0 : i32
    return %arg0, %c0_i32, %c0_i32_0 : i32, i32, i32
  }
  func.func @transform_2(%arg0: i32, %arg1: i32) -> (i32, i32, i32) {
    %c0_i32 = arith.constant 0 : i32
    %c0_i32_0 = arith.constant 0 : i32
    %c0_i32_1 = arith.constant 0 : i32
    return %arg0, %c0_i32, %c0_i32_0 : i32, i32, i32
  }
  func.func @transform_3(%arg0: i32, %arg1: i32) -> (i32, i32) {
    %c0_i32 = arith.constant 0 : i32
    %c0_i32_0 = arith.constant 0 : i32
    %c0_i32_1 = arith.constant 0 : i32
    return %c0_i32, %c0_i32_0 : i32, i32
  }
  func.func @transform_4(%arg0: i32, %arg1: i32) -> (i32, i32) {
    %c0_i32 = arith.constant 0 : i32
    %c0_i32_0 = arith.constant 0 : i32
    %c0_i32_1 = arith.constant 0 : i32
    return %c0_i32, %c0_i32_0 : i32, i32
  }
  func.func @transform_5(%arg0: i32, %arg1: i32) -> (i32, i32) {
    %c0_i32 = arith.constant 0 : i32
    %c0_i32_0 = arith.constant 0 : i32
    %c0_i32_1 = arith.constant 0 : i32
    return %c0_i32, %c0_i32_0 : i32, i32
  }
  func.func @transform_6(%arg0: i32, %arg1: i32) -> (i32, i32) {
    %c0_i32 = arith.constant 0 : i32
    %c0_i32_0 = arith.constant 0 : i32
    %c0_i32_1 = arith.constant 0 : i32
    return %c0_i32, %c0_i32_0 : i32, i32
  }
  func.func @transform_7(%arg0: i32, %arg1: i32) -> (i32, i32) {
    %c0_i32 = arith.constant 0 : i32
    %c0_i32_0 = arith.constant 0 : i32
    %c0_i32_1 = arith.constant 0 : i32
    return %c0_i32, %c0_i32_0 : i32, i32
  }
  func.func @transform_8(%arg0: i32, %arg1: i32) -> (i32, i32) {
    %c0_i32 = arith.constant 0 : i32
    %c0_i32_0 = arith.constant 0 : i32
    %c0_i32_1 = arith.constant 0 : i32
    return %c0_i32, %c0_i32_0 : i32, i32
  }
  func.func @transform_9(%arg0: i32, %arg1: i32) -> (i32, i32) {
    %c0_i32 = arith.constant 0 : i32
    %c0_i32_0 = arith.constant 0 : i32
    %c0_i32_1 = arith.constant 0 : i32
    return %c0_i32, %c0_i32_0 : i32, i32
  }
  func.func @transform_10(%arg0: i32, %arg1: i32) -> (i32, i32) {
    %c0_i32 = arith.constant 0 : i32
    %c0_i32_0 = arith.constant 0 : i32
    %c0_i32_1 = arith.constant 0 : i32
    return %c0_i32, %c0_i32_0 : i32, i32
  }
  func.func @transform_11(%arg0: i32, %arg1: i32) -> (i32, i32) {
    %c0_i32 = arith.constant 0 : i32
    %c0_i32_0 = arith.constant 0 : i32
    %c0_i32_1 = arith.constant 0 : i32
    return %c0_i32, %c0_i32_0 : i32, i32
  }
  func.func @transform_12(%arg0: i32, %arg1: i32) -> (i32, i32) {
    %c0_i32 = arith.constant 0 : i32
    %c0_i32_0 = arith.constant 0 : i32
    %c0_i32_1 = arith.constant 0 : i32
    return %c0_i32, %c0_i32_0 : i32, i32
  }
  func.func @transform_13(%arg0: i32, %arg1: i32) -> (i32, i32) {
    %c0_i32 = arith.constant 0 : i32
    %c0_i32_0 = arith.constant 0 : i32
    %c0_i32_1 = arith.constant 0 : i32
    return %c0_i32, %c0_i32_0 : i32, i32
  }
  func.func @transform_14(%arg0: i32, %arg1: i32) -> (i32, i32) {
    %c0_i32 = arith.constant 0 : i32
    %c0_i32_0 = arith.constant 0 : i32
    %c0_i32_1 = arith.constant 0 : i32
    return %c0_i32, %c0_i32_0 : i32, i32
  }
  func.func @transform_15(%arg0: i32, %arg1: i32) -> (i32, i32) {
    %c0_i32 = arith.constant 0 : i32
    %c0_i32_0 = arith.constant 0 : i32
    %c0_i32_1 = arith.constant 0 : i32
    return %c0_i32, %c0_i32_0 : i32, i32
  }
  func.func @transform_16(%arg0: i32, %arg1: i32) -> (i32, i32) {
    %c0_i32 = arith.constant 0 : i32
    %c0_i32_0 = arith.constant 0 : i32
    %c0_i32_1 = arith.constant 0 : i32
    return %c0_i32, %c0_i32_0 : i32, i32
  }
  func.func @transform_17(%arg0: i32, %arg1: i32) -> (i32, i32) {
    %c0_i32 = arith.constant 0 : i32
    %c0_i32_0 = arith.constant 0 : i32
    %c0_i32_1 = arith.constant 0 : i32
    return %c0_i32, %c0_i32_0 : i32, i32
  }
  func.func @transform_18(%arg0: i32, %arg1: i32) -> (i32, i32) {
    %c0_i32 = arith.constant 0 : i32
    %c0_i32_0 = arith.constant 0 : i32
    %c0_i32_1 = arith.constant 0 : i32
    return %c0_i32, %c0_i32_0 : i32, i32
  }
  func.func @transform_19(%arg0: i32, %arg1: i32) -> (i32, i32, i32) {
    %c0_i32 = arith.constant 0 : i32
    %c0_i32_0 = arith.constant 0 : i32
    return %arg0, %arg1, %c0_i32 : i32, i32, i32
  }
  func.func @transform_20(%arg0: i32, %arg1: i32) -> (i32, i32, i32, i32) {
    %c0_i32 = arith.constant 0 : i32
    %c0_i32_0 = arith.constant 0 : i32
    %c0_i32_1 = arith.constant 0 : i32
    return %arg0, %c0_i32, %arg1, %c0_i32_0 : i32, i32, i32, i32
  }
}

module attributes {stable_mosaic.version = 11 : i64} {
  func.func @_block_kernel(%arg0: i32, %arg1: i32, %arg2: memref<1x8x32xf32, #tpu.memory_space<vmem>>, %arg3: memref<1x8x32xf32, #tpu.memory_space<vmem>>, %arg4: memref<1x1x8xf32, #tpu.memory_space<vmem>>, %arg5: memref<32x32xbf16, #tpu.memory_space<vmem>>, %arg6: memref<1x32xf32, #tpu.memory_space<vmem>>, %arg7: memref<32x32xbf16, #tpu.memory_space<vmem>>, %arg8: memref<1x32xf32, #tpu.memory_space<vmem>>, %arg9: memref<32x32xbf16, #tpu.memory_space<vmem>>, %arg10: memref<1x32xf32, #tpu.memory_space<vmem>>, %arg11: memref<32x32xbf16, #tpu.memory_space<vmem>>, %arg12: memref<1x32xf32, #tpu.memory_space<vmem>>, %arg13: memref<1x32xf32, #tpu.memory_space<vmem>>, %arg14: memref<1x32xf32, #tpu.memory_space<vmem>>, %arg15: memref<32x64xbf16, #tpu.memory_space<vmem>>, %arg16: memref<1x64xf32, #tpu.memory_space<vmem>>, %arg17: memref<64x32xbf16, #tpu.memory_space<vmem>>, %arg18: memref<1x32xf32, #tpu.memory_space<vmem>>, %arg19: memref<1x32xf32, #tpu.memory_space<vmem>>, %arg20: memref<1x32xf32, #tpu.memory_space<vmem>>, %arg21: memref<1x8x32xf32, #tpu.memory_space<vmem>>, %arg22: memref<1x4x8x8xf32, #tpu.memory_space<vmem>>) attributes {dimension_semantics = [#tpu.dimension_semantics<parallel>, #tpu.dimension_semantics<parallel>], iteration_bounds = array<i64: 2, 1>, scalar_prefetch = 0 : i64, scratch_operands = 0 : i64, tpu.core_type = #tpu.core_type<tc>, window_params = [{transform_indices = @transform_0, window_bounds = array<i64: 1, 8, 32>}, {transform_indices = @transform_1, window_bounds = array<i64: 1, 8, 32>}, {transform_indices = @transform_2, window_bounds = array<i64: 1, 1, 8>}, {pipeline_mode = #tpu.pipeline_mode<synchronous>, transform_indices = @transform_3, window_bounds = array<i64: 32, 32>}, {pipeline_mode = #tpu.pipeline_mode<synchronous>, transform_indices = @transform_4, window_bounds = array<i64: 1, 32>}, {pipeline_mode = #tpu.pipeline_mode<synchronous>, transform_indices = @transform_5, window_bounds = array<i64: 32, 32>}, {pipeline_mode = #tpu.pipeline_mode<synchronous>, transform_indices = @transform_6, window_bounds = array<i64: 1, 32>}, {pipeline_mode = #tpu.pipeline_mode<synchronous>, transform_indices = @transform_7, window_bounds = array<i64: 32, 32>}, {pipeline_mode = #tpu.pipeline_mode<synchronous>, transform_indices = @transform_8, window_bounds = array<i64: 1, 32>}, {pipeline_mode = #tpu.pipeline_mode<synchronous>, transform_indices = @transform_9, window_bounds = array<i64: 32, 32>}, {pipeline_mode = #tpu.pipeline_mode<synchronous>, transform_indices = @transform_10, window_bounds = array<i64: 1, 32>}, {pipeline_mode = #tpu.pipeline_mode<synchronous>, transform_indices = @transform_11, window_bounds = array<i64: 1, 32>}, {pipeline_mode = #tpu.pipeline_mode<synchronous>, transform_indices = @transform_12, window_bounds = array<i64: 1, 32>}, {pipeline_mode = #tpu.pipeline_mode<synchronous>, transform_indices = @transform_13, window_bounds = array<i64: 32, 64>}, {pipeline_mode = #tpu.pipeline_mode<synchronous>, transform_indices = @transform_14, window_bounds = array<i64: 1, 64>}, {pipeline_mode = #tpu.pipeline_mode<synchronous>, transform_indices = @transform_15, window_bounds = array<i64: 64, 32>}, {pipeline_mode = #tpu.pipeline_mode<synchronous>, transform_indices = @transform_16, window_bounds = array<i64: 1, 32>}, {pipeline_mode = #tpu.pipeline_mode<synchronous>, transform_indices = @transform_17, window_bounds = array<i64: 1, 32>}, {pipeline_mode = #tpu.pipeline_mode<synchronous>, transform_indices = @transform_18, window_bounds = array<i64: 1, 32>}, {transform_indices = @transform_19, window_bounds = array<i64: 1, 8, 32>}, {transform_indices = @transform_20, window_bounds = array<i64: 1, 4, 8, 8>}]} {
    %c0 = arith.constant 0 : index
    %c0_0 = arith.constant 0 : index
    %c0_1 = arith.constant 0 : index
    %0 = vector.load %arg2[%c0, %c0_0, %c0_1] : memref<1x8x32xf32, #tpu.memory_space<vmem>>, vector<1x8x32xf32>
    %1 = vector.shape_cast %0 : vector<1x8x32xf32> to vector<8x32xf32>
    %2 = arith.truncf %1 : vector<8x32xf32> to vector<8x32xbf16>
    %c0_2 = arith.constant 0 : index
    %c0_3 = arith.constant 0 : index
    %c0_4 = arith.constant 0 : index
    %3 = vector.load %arg3[%c0_2, %c0_3, %c0_4] : memref<1x8x32xf32, #tpu.memory_space<vmem>>, vector<1x8x32xf32>
    %4 = vector.shape_cast %3 : vector<1x8x32xf32> to vector<8x32xf32>
    %5 = arith.truncf %4 : vector<8x32xf32> to vector<8x32xbf16>
    %c0_5 = arith.constant 0 : index
    %c0_6 = arith.constant 0 : index
    %c0_7 = arith.constant 0 : index
    %6 = vector.load %arg4[%c0_5, %c0_6, %c0_7] : memref<1x1x8xf32, #tpu.memory_space<vmem>>, vector<1x1x8xf32>
    %7 = vector.shape_cast %6 : vector<1x1x8xf32> to vector<1x8xf32>
    %c0_8 = arith.constant 0 : index
    %c0_9 = arith.constant 0 : index
    %8 = vector.load %arg5[%c0_8, %c0_9] : memref<32x32xbf16, #tpu.memory_space<vmem>>, vector<32x32xbf16>
    %cst = arith.constant dense<0.000000e+00> : vector<8x32xf32>
    %9 = tpu.matmul %2, %8, %cst {dimension_numbers = #tpu.dot_dimension_numbers<[1], [0], [0], [1], [0, 0, 1, 1], [], []>} : vector<8x32xbf16>, vector<32x32xbf16>, vector<8x32xf32> -> vector<8x32xf32>
    %c0_10 = arith.constant 0 : index
    %c0_11 = arith.constant 0 : index
    %10 = vector.load %arg6[%c0_10, %c0_11] : memref<1x32xf32, #tpu.memory_space<vmem>>, vector<1x32xf32>
    %11 = vector.broadcast %10 : vector<1x32xf32> to vector<8x32xf32>
    %12 = arith.addf %9, %11 : vector<8x32xf32>
    %c0_12 = arith.constant 0 : index
    %c0_13 = arith.constant 0 : index
    %13 = vector.load %arg7[%c0_12, %c0_13] : memref<32x32xbf16, #tpu.memory_space<vmem>>, vector<32x32xbf16>
    %cst_14 = arith.constant dense<0.000000e+00> : vector<8x32xf32>
    %14 = tpu.matmul %5, %13, %cst_14 {dimension_numbers = #tpu.dot_dimension_numbers<[1], [0], [0], [1], [0, 0, 1, 1], [], []>} : vector<8x32xbf16>, vector<32x32xbf16>, vector<8x32xf32> -> vector<8x32xf32>
    %c0_15 = arith.constant 0 : index
    %c0_16 = arith.constant 0 : index
    %15 = vector.load %arg8[%c0_15, %c0_16] : memref<1x32xf32, #tpu.memory_space<vmem>>, vector<1x32xf32>
    %16 = vector.broadcast %15 : vector<1x32xf32> to vector<8x32xf32>
    %17 = arith.addf %14, %16 : vector<8x32xf32>
    %c0_17 = arith.constant 0 : index
    %c0_18 = arith.constant 0 : index
    %18 = vector.load %arg9[%c0_17, %c0_18] : memref<32x32xbf16, #tpu.memory_space<vmem>>, vector<32x32xbf16>
    %cst_19 = arith.constant dense<0.000000e+00> : vector<8x32xf32>
    %19 = tpu.matmul %5, %18, %cst_19 {dimension_numbers = #tpu.dot_dimension_numbers<[1], [0], [0], [1], [0, 0, 1, 1], [], []>} : vector<8x32xbf16>, vector<32x32xbf16>, vector<8x32xf32> -> vector<8x32xf32>
    %c0_20 = arith.constant 0 : index
    %c0_21 = arith.constant 0 : index
    %20 = vector.load %arg10[%c0_20, %c0_21] : memref<1x32xf32, #tpu.memory_space<vmem>>, vector<1x32xf32>
    %21 = vector.broadcast %20 : vector<1x32xf32> to vector<8x32xf32>
    %22 = arith.addf %19, %21 : vector<8x32xf32>
    %23 = vector.extract_strided_slice %12 {offsets = [0, 0], sizes = [8, 8], strides = [1, 1]} : vector<8x32xf32> to vector<8x8xf32>
    %24 = vector.extract_strided_slice %12 {offsets = [0, 8], sizes = [8, 8], strides = [1, 1]} : vector<8x32xf32> to vector<8x8xf32>
    %25 = vector.extract_strided_slice %12 {offsets = [0, 16], sizes = [8, 8], strides = [1, 1]} : vector<8x32xf32> to vector<8x8xf32>
    %26 = vector.extract_strided_slice %12 {offsets = [0, 24], sizes = [8, 8], strides = [1, 1]} : vector<8x32xf32> to vector<8x8xf32>
    %27 = vector.shape_cast %23 : vector<8x8xf32> to vector<1x8x8xf32>
    %28 = vector.shape_cast %24 : vector<8x8xf32> to vector<1x8x8xf32>
    %29 = vector.shape_cast %25 : vector<8x8xf32> to vector<1x8x8xf32>
    %30 = vector.shape_cast %26 : vector<8x8xf32> to vector<1x8x8xf32>
    %31 = tpu.concatenate %27, %28, %29, %30 in 0 : vector<1x8x8xf32>, vector<1x8x8xf32>, vector<1x8x8xf32>, vector<1x8x8xf32> -> vector<4x8x8xf32>
    %32 = arith.truncf %31 : vector<4x8x8xf32> to vector<4x8x8xbf16>
    %33 = vector.extract_strided_slice %17 {offsets = [0, 0], sizes = [8, 8], strides = [1, 1]} : vector<8x32xf32> to vector<8x8xf32>
    %34 = vector.extract_strided_slice %17 {offsets = [0, 8], sizes = [8, 8], strides = [1, 1]} : vector<8x32xf32> to vector<8x8xf32>
    %35 = vector.extract_strided_slice %17 {offsets = [0, 16], sizes = [8, 8], strides = [1, 1]} : vector<8x32xf32> to vector<8x8xf32>
    %36 = vector.extract_strided_slice %17 {offsets = [0, 24], sizes = [8, 8], strides = [1, 1]} : vector<8x32xf32> to vector<8x8xf32>
    %37 = vector.shape_cast %33 : vector<8x8xf32> to vector<1x8x8xf32>
    %38 = vector.shape_cast %34 : vector<8x8xf32> to vector<1x8x8xf32>
    %39 = vector.shape_cast %35 : vector<8x8xf32> to vector<1x8x8xf32>
    %40 = vector.shape_cast %36 : vector<8x8xf32> to vector<1x8x8xf32>
    %41 = tpu.concatenate %37, %38, %39, %40 in 0 : vector<1x8x8xf32>, vector<1x8x8xf32>, vector<1x8x8xf32>, vector<1x8x8xf32> -> vector<4x8x8xf32>
    %42 = arith.truncf %41 : vector<4x8x8xf32> to vector<4x8x8xbf16>
    %43 = vector.extract_strided_slice %22 {offsets = [0, 0], sizes = [8, 8], strides = [1, 1]} : vector<8x32xf32> to vector<8x8xf32>
    %44 = vector.extract_strided_slice %22 {offsets = [0, 8], sizes = [8, 8], strides = [1, 1]} : vector<8x32xf32> to vector<8x8xf32>
    %45 = vector.extract_strided_slice %22 {offsets = [0, 16], sizes = [8, 8], strides = [1, 1]} : vector<8x32xf32> to vector<8x8xf32>
    %46 = vector.extract_strided_slice %22 {offsets = [0, 24], sizes = [8, 8], strides = [1, 1]} : vector<8x32xf32> to vector<8x8xf32>
    %47 = vector.shape_cast %43 : vector<8x8xf32> to vector<1x8x8xf32>
    %48 = vector.shape_cast %44 : vector<8x8xf32> to vector<1x8x8xf32>
    %49 = vector.shape_cast %45 : vector<8x8xf32> to vector<1x8x8xf32>
    %50 = vector.shape_cast %46 : vector<8x8xf32> to vector<1x8x8xf32>
    %51 = tpu.concatenate %47, %48, %49, %50 in 0 : vector<1x8x8xf32>, vector<1x8x8xf32>, vector<1x8x8xf32>, vector<1x8x8xf32> -> vector<4x8x8xf32>
    %52 = arith.truncf %51 : vector<4x8x8xf32> to vector<4x8x8xbf16>
    "tpu.trace_start"() <{level = 10 : i32, message = "hqd,hkd->hqk"}> : () -> ()
    %cst_22 = arith.constant dense<0.000000e+00> : vector<4x8x8xf32>
    %53 = tpu.matmul %32, %42, %cst_22 {dimension_numbers = #tpu.dot_dimension_numbers<[2], [2], [1], [1], [0, 0, 0, 1, 1, 1], [0], [0]>} : vector<4x8x8xbf16>, vector<4x8x8xbf16>, vector<4x8x8xf32> -> vector<4x8x8xf32>
    "tpu.trace_stop"() : () -> ()
    %cst_23 = arith.constant 0.353553385 : f32
    %54 = vector.broadcast %cst_23 : f32 to vector<4x8x8xf32>
    %55 = arith.mulf %53, %54 : vector<4x8x8xf32>
    %56 = vector.shape_cast %7 : vector<1x8xf32> to vector<1x1x8xf32>
    %57 = vector.broadcast %56 : vector<1x1x8xf32> to vector<4x8x8xf32>
    %58 = arith.addf %55, %57 : vector<4x8x8xf32>
    %c0_24 = arith.constant 0 : index
    %c0_25 = arith.constant 0 : index
    %c0_26 = arith.constant 0 : index
    %c0_27 = arith.constant 0 : index
    %59 = vector.load %arg22[%c0_24, %c0_25, %c0_26, %c0_27] : memref<1x4x8x8xf32, #tpu.memory_space<vmem>>, vector<1x4x8x8xf32>
    %60 = vector.shape_cast %59 : vector<1x4x8x8xf32> to vector<4x8x8xf32>
    %61 = vector.shape_cast %58 : vector<4x8x8xf32> to vector<1x4x8x8xf32>
    tpu.vector_store %arg22[%c0_24, %c0_25, %c0_26, %c0_27], %61 {strides = array<i32>} : memref<1x4x8x8xf32, #tpu.memory_space<vmem>>, vector<1x4x8x8xf32>,
    %cst_28 = arith.constant dense<0xFF800000> : vector<4x8xf32>
    %62 = vector.multi_reduction <maximumf>, %58, %cst_28 [2] : vector<4x8x8xf32> to vector<4x8xf32>
    %63 = vector.shape_cast %62 : vector<4x8xf32> to vector<4x8x1xf32>
    %64 = vector.broadcast %63 : vector<4x8x1xf32> to vector<4x8x8xf32>
    %65 = arith.subf %58, %64 : vector<4x8x8xf32>
    %66 = math.exp %65 : vector<4x8x8xf32>
    %cst_29 = arith.constant dense<0.000000e+00> : vector<4x8xf32>
    %67 = vector.multi_reduction <add>, %66, %cst_29 [2] : vector<4x8x8xf32> to vector<4x8xf32>
    %68 = vector.shape_cast %67 : vector<4x8xf32> to vector<4x8x1xf32>
    %69 = tpu.reciprocal %68 {approx = true} : vector<4x8x1xf32> -> vector<4x8x1xf32>
    %70 = vector.broadcast %69 : vector<4x8x1xf32> to vector<4x8x8xf32>
    %71 = arith.mulf %66, %70 : vector<4x8x8xf32>
    %72 = arith.truncf %71 : vector<4x8x8xf32> to vector<4x8x8xbf16>
    "tpu.trace_start"() <{level = 10 : i32, message = "hqk,hkd->hqd"}> : () -> ()
    %cst_30 = arith.constant dense<0.000000e+00> : vector<4x8x8xf32>
    %73 = tpu.matmul %72, %52, %cst_30 {dimension_numbers = #tpu.dot_dimension_numbers<[2], [1], [1], [2], [0, 0, 0, 1, 1, 2], [0], [0]>} : vector<4x8x8xbf16>, vector<4x8x8xbf16>, vector<4x8x8xf32> -> vector<4x8x8xf32>
    "tpu.trace_stop"() : () -> ()
    %74 = vector.extract_strided_slice %73 {offsets = [0, 0, 0], sizes = [1, 8, 8], strides = [1, 1, 1]} : vector<4x8x8xf32> to vector<1x8x8xf32>
    %75 = vector.shape_cast %74 : vector<1x8x8xf32> to vector<8x8xf32>
    %76 = vector.extract_strided_slice %73 {offsets = [1, 0, 0], sizes = [1, 8, 8], strides = [1, 1, 1]} : vector<4x8x8xf32> to vector<1x8x8xf32>
    %77 = vector.shape_cast %76 : vector<1x8x8xf32> to vector<8x8xf32>
    %78 = vector.extract_strided_slice %73 {offsets = [2, 0, 0], sizes = [1, 8, 8], strides = [1, 1, 1]} : vector<4x8x8xf32> to vector<1x8x8xf32>
    %79 = vector.shape_cast %78 : vector<1x8x8xf32> to vector<8x8xf32>
    %80 = vector.extract_strided_slice %73 {offsets = [3, 0, 0], sizes = [1, 8, 8], strides = [1, 1, 1]} : vector<4x8x8xf32> to vector<1x8x8xf32>
    %81 = vector.shape_cast %80 : vector<1x8x8xf32> to vector<8x8xf32>
    %82 = tpu.concatenate %75, %77, %79, %81 in 1 : vector<8x8xf32>, vector<8x8xf32>, vector<8x8xf32>, vector<8x8xf32> -> vector<8x32xf32>
    %83 = arith.truncf %82 : vector<8x32xf32> to vector<8x32xbf16>
    %c0_31 = arith.constant 0 : index
    %c0_32 = arith.constant 0 : index
    %84 = vector.load %arg11[%c0_31, %c0_32] : memref<32x32xbf16, #tpu.memory_space<vmem>>, vector<32x32xbf16>
    %cst_33 = arith.constant dense<0.000000e+00> : vector<8x32xf32>
    %85 = tpu.matmul %83, %84, %cst_33 {dimension_numbers = #tpu.dot_dimension_numbers<[1], [0], [0], [1], [0, 0, 1, 1], [], []>} : vector<8x32xbf16>, vector<32x32xbf16>, vector<8x32xf32> -> vector<8x32xf32>
    %c0_34 = arith.constant 0 : index
    %c0_35 = arith.constant 0 : index
    %86 = vector.load %arg12[%c0_34, %c0_35] : memref<1x32xf32, #tpu.memory_space<vmem>>, vector<1x32xf32>
    %87 = vector.broadcast %86 : vector<1x32xf32> to vector<8x32xf32>
    %88 = arith.addf %85, %87 : vector<8x32xf32>
    %89 = arith.addf %88, %1 : vector<8x32xf32>
    %c0_36 = arith.constant 0 : index
    %c0_37 = arith.constant 0 : index
    %90 = vector.load %arg13[%c0_36, %c0_37] : memref<1x32xf32, #tpu.memory_space<vmem>>, vector<1x32xf32>
    %c0_38 = arith.constant 0 : index
    %c0_39 = arith.constant 0 : index
    %91 = vector.load %arg14[%c0_38, %c0_39] : memref<1x32xf32, #tpu.memory_space<vmem>>, vector<1x32xf32>
    %cst_40 = arith.constant dense<0.000000e+00> : vector<8xf32>
    %92 = vector.multi_reduction <add>, %89, %cst_40 [1] : vector<8x32xf32> to vector<8xf32>
    %93 = vector.shape_cast %92 : vector<8xf32> to vector<8x1xf32>
    %cst_41 = arith.constant 3.200000e+01 : f32
    %94 = vector.broadcast %cst_41 : f32 to vector<8x1xf32>
    %95 = arith.divf %93, %94 : vector<8x1xf32>
    %96 = vector.broadcast %95 : vector<8x1xf32> to vector<8x32xf32>
    %97 = arith.subf %89, %96 : vector<8x32xf32>
    %98 = arith.mulf %97, %97 : vector<8x32xf32>
    %cst_42 = arith.constant dense<0.000000e+00> : vector<8xf32>
    %99 = vector.multi_reduction <add>, %98, %cst_42 [1] : vector<8x32xf32> to vector<8xf32>
    %100 = vector.shape_cast %99 : vector<8xf32> to vector<8x1xf32>
    %cst_43 = arith.constant 3.200000e+01 : f32
    %101 = vector.broadcast %cst_43 : f32 to vector<8x1xf32>
    %102 = arith.divf %100, %101 : vector<8x1xf32>
    %103 = vector.broadcast %95 : vector<8x1xf32> to vector<8x32xf32>
    %104 = arith.subf %89, %103 : vector<8x32xf32>
    %cst_44 = arith.constant 9.99999996E-13 : f32
    %105 = vector.broadcast %cst_44 : f32 to vector<8x1xf32>
    %106 = arith.addf %102, %105 : vector<8x1xf32>
    %107 = math.rsqrt %106 : vector<8x1xf32>
    %108 = vector.broadcast %107 : vector<8x1xf32> to vector<8x32xf32>
    %109 = arith.mulf %104, %108 : vector<8x32xf32>
    %110 = vector.broadcast %90 : vector<1x32xf32> to vector<8x32xf32>
    %111 = arith.mulf %109, %110 : vector<8x32xf32>
    %112 = vector.broadcast %91 : vector<1x32xf32> to vector<8x32xf32>
    %113 = arith.addf %111, %112 : vector<8x32xf32>
    %114 = arith.truncf %113 : vector<8x32xf32> to vector<8x32xbf16>
    %c0_45 = arith.constant 0 : index
    %c0_46 = arith.constant 0 : index
    %115 = vector.load %arg15[%c0_45, %c0_46] : memref<32x64xbf16, #tpu.memory_space<vmem>>, vector<32x64xbf16>
    %cst_47 = arith.constant dense<0.000000e+00> : vector<8x64xf32>
    %116 = tpu.matmul %114, %115, %cst_47 {dimension_numbers = #tpu.dot_dimension_numbers<[1], [0], [0], [1], [0, 0, 1, 1], [], []>} : vector<8x32xbf16>, vector<32x64xbf16>, vector<8x64xf32> -> vector<8x64xf32>
    %c0_48 = arith.constant 0 : index
    %c0_49 = arith.constant 0 : index
    %117 = vector.load %arg16[%c0_48, %c0_49] : memref<1x64xf32, #tpu.memory_space<vmem>>, vector<1x64xf32>
    %118 = vector.broadcast %117 : vector<1x64xf32> to vector<8x64xf32>
    %119 = arith.addf %116, %118 : vector<8x64xf32>
    %cst_50 = arith.constant 5.000000e-01 : f32
    %120 = vector.broadcast %cst_50 : f32 to vector<8x64xf32>
    %121 = arith.mulf %120, %119 : vector<8x64xf32>
    %cst_51 = arith.constant 2.000000e+00 : f32
    %122 = math.sqrt %cst_51 : f32
    %123 = vector.broadcast %122 : f32 to vector<8x64xf32>
    %124 = arith.divf %119, %123 : vector<8x64xf32>
    %125 = math.erf %124 : vector<8x64xf32>
    %cst_52 = arith.constant 1.000000e+00 : f32
    %126 = vector.broadcast %cst_52 : f32 to vector<8x64xf32>
    %127 = arith.addf %126, %125 : vector<8x64xf32>
    %128 = arith.mulf %121, %127 : vector<8x64xf32>
    %129 = arith.truncf %128 : vector<8x64xf32> to vector<8x64xbf16>
    %c0_53 = arith.constant 0 : index
    %c0_54 = arith.constant 0 : index
    %130 = vector.load %arg17[%c0_53, %c0_54] : memref<64x32xbf16, #tpu.memory_space<vmem>>, vector<64x32xbf16>
    %cst_55 = arith.constant dense<0.000000e+00> : vector<8x32xf32>
    %131 = tpu.matmul %129, %130, %cst_55 {dimension_numbers = #tpu.dot_dimension_numbers<[1], [0], [0], [1], [0, 0, 1, 1], [], []>} : vector<8x64xbf16>, vector<64x32xbf16>, vector<8x32xf32> -> vector<8x32xf32>
    %c0_56 = arith.constant 0 : index
    %c0_57 = arith.constant 0 : index
    %132 = vector.load %arg18[%c0_56, %c0_57] : memref<1x32xf32, #tpu.memory_space<vmem>>, vector<1x32xf32>
    %133 = vector.broadcast %132 : vector<1x32xf32> to vector<8x32xf32>
    %134 = arith.addf %131, %133 : vector<8x32xf32>
    %135 = arith.addf %134, %113 : vector<8x32xf32>
    %c0_58 = arith.constant 0 : index
    %c0_59 = arith.constant 0 : index
    %136 = vector.load %arg19[%c0_58, %c0_59] : memref<1x32xf32, #tpu.memory_space<vmem>>, vector<1x32xf32>
    %c0_60 = arith.constant 0 : index
    %c0_61 = arith.constant 0 : index
    %137 = vector.load %arg20[%c0_60, %c0_61] : memref<1x32xf32, #tpu.memory_space<vmem>>, vector<1x32xf32>
    %cst_62 = arith.constant dense<0.000000e+00> : vector<8xf32>
    %138 = vector.multi_reduction <add>, %135, %cst_62 [1] : vector<8x32xf32> to vector<8xf32>
    %139 = vector.shape_cast %138 : vector<8xf32> to vector<8x1xf32>
    %cst_63 = arith.constant 3.200000e+01 : f32
    %140 = vector.broadcast %cst_63 : f32 to vector<8x1xf32>
    %141 = arith.divf %139, %140 : vector<8x1xf32>
    %142 = vector.broadcast %141 : vector<8x1xf32> to vector<8x32xf32>
    %143 = arith.subf %135, %142 : vector<8x32xf32>
    %144 = arith.mulf %143, %143 : vector<8x32xf32>
    %cst_64 = arith.constant dense<0.000000e+00> : vector<8xf32>
    %145 = vector.multi_reduction <add>, %144, %cst_64 [1] : vector<8x32xf32> to vector<8xf32>
    %146 = vector.shape_cast %145 : vector<8xf32> to vector<8x1xf32>
    %cst_65 = arith.constant 3.200000e+01 : f32
    %147 = vector.broadcast %cst_65 : f32 to vector<8x1xf32>
    %148 = arith.divf %146, %147 : vector<8x1xf32>
    %149 = vector.broadcast %141 : vector<8x1xf32> to vector<8x32xf32>
    %150 = arith.subf %135, %149 : vector<8x32xf32>
    %cst_66 = arith.constant 9.99999996E-13 : f32
    %151 = vector.broadcast %cst_66 : f32 to vector<8x1xf32>
    %152 = arith.addf %148, %151 : vector<8x1xf32>
    %153 = math.rsqrt %152 : vector<8x1xf32>
    %154 = vector.broadcast %153 : vector<8x1xf32> to vector<8x32xf32>
    %155 = arith.mulf %150, %154 : vector<8x32xf32>
    %156 = vector.broadcast %136 : vector<1x32xf32> to vector<8x32xf32>
    %157 = arith.mulf %155, %156 : vector<8x32xf32>
    %158 = vector.broadcast %137 : vector<1x32xf32> to vector<8x32xf32>
    %159 = arith.addf %157, %158 : vector<8x32xf32>
    %c0_67 = arith.constant 0 : index
    %c0_68 = arith.constant 0 : index
    %c0_69 = arith.constant 0 : index
    %160 = vector.load %arg21[%c0_67, %c0_68, %c0_69] : memref<1x8x32xf32, #tpu.memory_space<vmem>>, vector<1x8x32xf32>
    %161 = vector.shape_cast %160 : vector<1x8x32xf32> to vector<8x32xf32>
    %162 = vector.shape_cast %159 : vector<8x32xf32> to vector<1x8x32xf32>
    tpu.vector_store %arg21[%c0_67, %c0_68, %c0_69], %162 {strides = array<i32>} : memref<1x8x32xf32, #tpu.memory_space<vmem>>, vector<1x8x32xf32>,
    return
  }
  func.func @transform_0(%arg0: i32, %arg1: i32) -> (i32, i32, i32) {
    %c0_i32 = arith.constant 0 : i32
    %c0_i32_0 = arith.constant 0 : i32
    return %arg0, %arg1, %c0_i32 : i32, i32, i32
  }
  func.func @transform_1(%arg0: i32, %arg1: i32) -> (i32, i32, i32) {
    %c0_i32 = arith.constant 0 : i32
    %c0_i32_0 = arith.constant 0 : i32
    %c0_i32_1 = arith.constant 0 : i32
    return %arg0, %c0_i32, %c0_i32_0 : i32, i32, i32
  }
  func.func @transform_2(%arg0: i32, %arg1: i32) -> (i32, i32, i32) {
    %c0_i32 = arith.constant 0 : i32
    %c0_i32_0 = arith.constant 0 : i32
    %c0_i32_1 = arith.constant 0 : i32
    return %arg0, %c0_i32, %c0_i32_0 : i32, i32, i32
  }
  func.func @transform_3(%arg0: i32, %arg1: i32) -> (i32, i32) {
    %c0_i32 = arith.constant 0 : i32
    %c0_i32_0 = arith.constant 0 : i32
    %c0_i32_1 = arith.constant 0 : i32
    return %c0_i32, %c0_i32_0 : i32, i32
  }
  func.func @transform_4(%arg0: i32, %arg1: i32) -> (i32, i32) {
    %c0_i32 = arith.constant 0 : i32
    %c0_i32_0 = arith.constant 0 : i32
    %c0_i32_1 = arith.constant 0 : i32
    return %c0_i32, %c0_i32_0 : i32, i32
  }
  func.func @transform_5(%arg0: i32, %arg1: i32) -> (i32, i32) {
    %c0_i32 = arith.constant 0 : i32
    %c0_i32_0 = arith.constant 0 : i32
    %c0_i32_1 = arith.constant 0 : i32
    return %c0_i32, %c0_i32_0 : i32, i32
  }
  func.func @transform_6(%arg0: i32, %arg1: i32) -> (i32, i32) {
    %c0_i32 = arith.constant 0 : i32
    %c0_i32_0 = arith.constant 0 : i32
    %c0_i32_1 = arith.constant 0 : i32
    return %c0_i32, %c0_i32_0 : i32, i32
  }
  func.func @transform_7(%arg0: i32, %arg1: i32) -> (i32, i32) {
    %c0_i32 = arith.constant 0 : i32
    %c0_i32_0 = arith.constant 0 : i32
    %c0_i32_1 = arith.constant 0 : i32
    return %c0_i32, %c0_i32_0 : i32, i32
  }
  func.func @transform_8(%arg0: i32, %arg1: i32) -> (i32, i32) {
    %c0_i32 = arith.constant 0 : i32
    %c0_i32_0 = arith.constant 0 : i32
    %c0_i32_1 = arith.constant 0 : i32
    return %c0_i32, %c0_i32_0 : i32, i32
  }
  func.func @transform_9(%arg0: i32, %arg1: i32) -> (i32, i32) {
    %c0_i32 = arith.constant 0 : i32
    %c0_i32_0 = arith.constant 0 : i32
    %c0_i32_1 = arith.constant 0 : i32
    return %c0_i32, %c0_i32_0 : i32, i32
  }
  func.func @transform_10(%arg0: i32, %arg1: i32) -> (i32, i32) {
    %c0_i32 = arith.constant 0 : i32
    %c0_i32_0 = arith.constant 0 : i32
    %c0_i32_1 = arith.constant 0 : i32
    return %c0_i32, %c0_i32_0 : i32, i32
  }
  func.func @transform_11(%arg0: i32, %arg1: i32) -> (i32, i32) {
    %c0_i32 = arith.constant 0 : i32
    %c0_i32_0 = arith.constant 0 : i32
    %c0_i32_1 = arith.constant 0 : i32
    return %c0_i32, %c0_i32_0 : i32, i32
  }
  func.func @transform_12(%arg0: i32, %arg1: i32) -> (i32, i32) {
    %c0_i32 = arith.constant 0 : i32
    %c0_i32_0 = arith.constant 0 : i32
    %c0_i32_1 = arith.constant 0 : i32
    return %c0_i32, %c0_i32_0 : i32, i32
  }
  func.func @transform_13(%arg0: i32, %arg1: i32) -> (i32, i32) {
    %c0_i32 = arith.constant 0 : i32
    %c0_i32_0 = arith.constant 0 : i32
    %c0_i32_1 = arith.constant 0 : i32
    return %c0_i32, %c0_i32_0 : i32, i32
  }
  func.func @transform_14(%arg0: i32, %arg1: i32) -> (i32, i32) {
    %c0_i32 = arith.constant 0 : i32
    %c0_i32_0 = arith.constant 0 : i32
    %c0_i32_1 = arith.constant 0 : i32
    return %c0_i32, %c0_i32_0 : i32, i32
  }
  func.func @transform_15(%arg0: i32, %arg1: i32) -> (i32, i32) {
    %c0_i32 = arith.constant 0 : i32
    %c0_i32_0 = arith.constant 0 : i32
    %c0_i32_1 = arith.constant 0 : i32
    return %c0_i32, %c0_i32_0 : i32, i32
  }
  func.func @transform_16(%arg0: i32, %arg1: i32) -> (i32, i32) {
    %c0_i32 = arith.constant 0 : i32
    %c0_i32_0 = arith.constant 0 : i32
    %c0_i32_1 = arith.constant 0 : i32
    return %c0_i32, %c0_i32_0 : i32, i32
  }
  func.func @transform_17(%arg0: i32, %arg1: i32) -> (i32, i32) {
    %c0_i32 = arith.constant 0 : i32
    %c0_i32_0 = arith.constant 0 : i32
    %c0_i32_1 = arith.constant 0 : i32
    return %c0_i32, %c0_i32_0 : i32, i32
  }
  func.func @transform_18(%arg0: i32, %arg1: i32) -> (i32, i32) {
    %c0_i32 = arith.constant 0 : i32
    %c0_i32_0 = arith.constant 0 : i32
    %c0_i32_1 = arith.constant 0 : i32
    return %c0_i32, %c0_i32_0 : i32, i32
  }
  func.func @transform_19(%arg0: i32, %arg1: i32) -> (i32, i32, i32) {
    %c0_i32 = arith.constant 0 : i32
    %c0_i32_0 = arith.constant 0 : i32
    return %arg0, %arg1, %c0_i32 : i32, i32, i32
  }
  func.func @transform_20(%arg0: i32, %arg1: i32) -> (i32, i32, i32, i32) {
    %c0_i32 = arith.constant 0 : i32
    %c0_i32_0 = arith.constant 0 : i32
    %c0_i32_1 = arith.constant 0 : i32
    return %arg0, %c0_i32, %arg1, %c0_i32_0 : i32, i32, i32, i32
  }
}

</mosaic_0001>

<llo_original>
// kernel: tpu_custom_call.1
$region0: #{tpu_custom_call.1}
  #allocation0 [shape = 'u32[]', space=smem, size = 0x4, offset = 0x4, fixed_abs, tag = 'smem constant byte address 0x4 - core index']
  #allocation1 [shape = 'u32[144,128]{1,0:T(1,128)}', space=vmem, size = 0x12000, scoped, tag = 'internal scratch']
  %s0 = inlined_call_operand.vmem [shape: f32[2,8,32], index: 0, kind: input, shape index: {}]
  %s1 = inlined_call_operand.vmem [shape: f32[2,8,32], index: 1, kind: input, shape index: {}]
  %s2 = inlined_call_operand.hbm [shape: f32[2,1,8], index: 2, kind: input, shape index: {}]
  %s3 = inlined_call_operand.vmem [shape: bf16[32,32], index: 3, kind: input, shape index: {}]
  %s4 = inlined_call_operand.vmem [shape: f32[1,32], index: 4, kind: input, shape index: {}]
  %s5 = inlined_call_operand.hbm [shape: bf16[32,32], index: 5, kind: input, shape index: {}]
  %s6 = inlined_call_operand.hbm [shape: f32[1,32], index: 6, kind: input, shape index: {}]
  %s7 = inlined_call_operand.hbm [shape: bf16[32,32], index: 7, kind: input, shape index: {}]
  %s8 = inlined_call_operand.hbm [shape: f32[1,32], index: 8, kind: input, shape index: {}]
  %s9 = inlined_call_operand.vmem [shape: bf16[32,32], index: 9, kind: input, shape index: {}]
  %s10 = inlined_call_operand.hbm [shape: f32[1,32], index: 10, kind: input, shape index: {}]
  %s11 = inlined_call_operand.hbm [shape: f32[1,32], index: 11, kind: input, shape index: {}]
  %s12 = inlined_call_operand.hbm [shape: f32[1,32], index: 12, kind: input, shape index: {}]
  %s13 = inlined_call_operand.vmem [shape: bf16[32,64], index: 13, kind: input, shape index: {}]
  %s14 = inlined_call_operand.vmem [shape: f32[1,64], index: 14, kind: input, shape index: {}]
  %s15 = inlined_call_operand.vmem [shape: bf16[64,32], index: 15, kind: input, shape index: {}]
  %s16 = inlined_call_operand.vmem [shape: f32[1,32], index: 16, kind: input, shape index: {}]
  %s17 = inlined_call_operand.vmem [shape: f32[1,32], index: 17, kind: input, shape index: {}]
  %s18 = inlined_call_operand.vmem [shape: f32[1,32], index: 18, kind: input, shape index: {}]
  %s19 = inlined_call_operand.hbm [shape: f32[2,8,32], index: 19, kind: output, shape index: {0}]
  %s20 = inlined_call_operand.hbm [shape: f32[2,4,8,8], index: 20, kind: output, shape index: {1}]
  %21 = xla_tuple %s19, %s20
  %s22 = sld [smem:[#allocation0]]
  $region149: #{tpu_custom_call.1} parent=0
    _
  %s24 = ssub.s32 1, %s22
  %s25 = scalar_select 0, %s24, %s22
  $region1: #{tpu_custom_call.1} parent=0
    #allocation2 [shape = 'u8[1024]{0}', space=vmem, size = 0x400, scoped, tag = 'input window, operand 2']
    #allocation3 [shape = 's32[2]{0}', space=sflag, size = 0x8, scoped, tag = 'scoped memory for tpu_custom_call.1']
    #allocation4 [shape = 's32[2]{0}', space=sflag, size = 0x8, scoped, tag = 'scoped memory for tpu_custom_call.1']
    #allocation5 [shape = 'u8[8192]{0}', space=vmem, size = 0x2000, scoped, tag = 'input window, operand 5, single buffered']
    #allocation6 [shape = 's32[1]{0}', space=sflag, size = 0x4, scoped, tag = 'scoped memory for tpu_custom_call.1']
    #allocation7 [shape = 'u8[512]{0}', space=vmem, size = 0x400, scoped, tag = 'input window, operand 6, single buffered']
    #allocation8 [shape = 'u8[8192]{0}', space=vmem, size = 0x2000, scoped, tag = 'input window, operand 7, single buffered']
    #allocation9 [shape = 's32[1]{0}', space=sflag, size = 0x4, scoped, tag = 'scoped memory for tpu_custom_call.1']
    #allocation10 [shape = 'u8[512]{0}', space=vmem, size = 0x400, scoped, tag = 'input window, operand 8, single buffered']
    #allocation11 [shape = 'u8[512]{0}', space=vmem, size = 0x400, scoped, tag = 'input window, operand 10, single buffered']
    #allocation12 [shape = 's32[1]{0}', space=sflag, size = 0x4, scoped, tag = 'scoped memory for tpu_custom_call.1']
    #allocation13 [shape = 'u8[512]{0}', space=vmem, size = 0x400, scoped, tag = 'input window, operand 11, single buffered']
    #allocation14 [shape = 'u8[512]{0}', space=vmem, size = 0x400, scoped, tag = 'input window, operand 12, single buffered']
    #allocation15 [shape = 's32[1]{0}', space=sflag, size = 0x4, scoped, tag = 'scoped memory for tpu_custom_call.1']
    #allocation16 [shape = 'u8[8192]{0}', space=vmem, size = 0x2000, scoped, tag = 'output window, operand 0']
    #allocation17 [shape = 'u8[32768]{0}', space=vmem, size = 0x8000, scoped, tag = 'output window, operand 1']
    #allocation18 [shape = 's32[2]{0}', space=sflag, size = 0x8, scoped, tag = 'scoped memory for tpu_custom_call.1']
    %26 = vsyncpa [#allocation3], 0
    %s27 = scalar_lea.sflag [#allocation3], 1
    %28 = vsyncpa %s27, 0
    %29 = vsyncpa [#allocation6], 0
    %30 = vsyncpa [#allocation9], 0
    %31 = vsyncpa [#allocation12], 0
    %32 = vsyncpa [#allocation15], 0
    %33 = vsyncpa [#allocation4], 0
    %s34 = scalar_lea.sflag [#allocation4], 1
    %35 = vsyncpa %s34, 0
    %36 = vsyncpa [#allocation18], 0
    %s37 = scalar_lea.sflag [#allocation18], 1
    %38 = vsyncpa %s37, 0
    loop: start=0, step=1, limit=4
    $region2: #{tpu_custom_call.1} parent=1 // loop_pre_header
      _
    $region3: #{tpu_custom_call.1} parent=1 // loop_header
      %s40 = sphi 0, %s44
      %p41 = scmp.ge.s32.totalorder %s40, 4
      %s47 = sphi 0, %s59
      %s48 = sphi 0, %s55
      %s49 = sphi 0, %s47
      %s50 = sphi 0, %s48
      %s51 = sphi 0, %s49
      %s52 = sphi 0, %s50
      %s64 = sphi 0, %s66
      %s67 = sphi 0, %s64
      %s68 = sphi 0, %s67
      %s84 = sphi 0, %s68
      %s90 = sphi 0, %s92
      %s93 = sphi 0, %s90
      %s94 = sphi 0, %s93
      %s110 = sphi 0, %s94
      %s116 = sphi 0, %s118
      %s119 = sphi 0, %s116
      %s120 = sphi 0, %s119
      %s136 = sphi 0, %s120
      %s140 = sphi 0, %s140
      %s142 = sphi 0, %s140
      %s143 = sphi 0, %s142
      %s157 = sphi 0, %s143
      %s161 = sphi 0, %s161
      %s163 = sphi 0, %s161
      %s164 = sphi 0, %s163
      %s178 = sphi 0, %s164
      %s182 = sphi 0, %s182
      %s184 = sphi 0, %s182
      %s185 = sphi 0, %s184
      %s199 = sphi 0, %s185
      %s203 = sphi 0, %s203
      %s205 = sphi 0, %s203
      %s206 = sphi 0, %s205
      %s220 = sphi 0, %s206
      %s224 = sphi 0, %s224
      %s226 = sphi 0, %s224
      %s227 = sphi 0, %s226
      %s241 = sphi 0, %s227
      %s245 = sphi 0, %s245
      %s247 = sphi 0, %s245
      %s248 = sphi 0, %s247
      %s262 = sphi 0, %s248
      %s266 = sphi 0, %s266
      %s268 = sphi 0, %s266
      %s269 = sphi 0, %s268
      %s283 = sphi 0, %s269
      %s287 = sphi 0, %s287
      %s289 = sphi 0, %s287
      %s290 = sphi 0, %s289
      %s304 = sphi 0, %s290
      %s308 = sphi 0, %s308
      %s310 = sphi 0, %s308
      %s311 = sphi 0, %s310
      %s325 = sphi 0, %s311
      %s329 = sphi 0, %s329
      %s331 = sphi 0, %s329
      %s332 = sphi 0, %s331
      %s346 = sphi 0, %s332
      %s350 = sphi 0, %s350
      %s352 = sphi 0, %s350
      %s353 = sphi 0, %s352
      %s367 = sphi 0, %s353
      %s371 = sphi 0, %s371
      %s373 = sphi 0, %s371
      %s374 = sphi 0, %s373
      %s388 = sphi 0, %s374
      %s392 = sphi 0, %s392
      %s394 = sphi 0, %s392
      %s395 = sphi 0, %s394
      %s409 = sphi 0, %s395
      %s413 = sphi 0, %s413
      %s415 = sphi 0, %s413
      %s416 = sphi 0, %s415
      %s430 = sphi 0, %s416
      %s434 = sphi 0, %s434
      %s436 = sphi 0, %s434
      %s437 = sphi 0, %s436
      %s451 = sphi 0, %s437
      %s455 = sphi 0, %s455
      %s457 = sphi 0, %s455
      %s458 = sphi 0, %s457
      %s472 = sphi 0, %s458
      %s480 = sphi 0, %s482
      %s483 = sphi 0, %s480
      %s484 = sphi 0, %s483
      %s500 = sphi 0, %s484
      %s508 = sphi 0, %s510
      %s511 = sphi 0, %s508
      %s512 = sphi 0, %s511
      %s528 = sphi 0, %s512
    $region4: #{tpu_custom_call.1} parent=1 // loop_header_branch
      %43 = sbr.rel (%p41) target = $region8
    $region5: #{tpu_custom_call.1} parent=1 // loop_body
      %s45 = ssub.s32 %s40, 1
      %s46 = ssub.s32 %s40, 2
      %s53 = sadd.s32 1, %s48
      %p54 = scmp.ge.s32.totalorder %s53, 1
      %s55 = scalar_select %p54, 0, %s53
      %s56 = sadd.s32 1, %s47
      %s57 = scalar_select %p54, %s56, %s47
      %p58 = scmp.ge.s32.totalorder %s57, 2
      %s59 = scalar_select %p58, 0, %s57
      %s60 = ssub.s32 %s47, %s59
      %s61 = ssub.s32 %s48, %s55
      %s62 = sor.u32 %s60, %s61
      %p63 = scmp.eq.s32.totalorder %s62, 0
      %s65 = sadd.s32 %s64, 1
      %s66 = scalar_select %p63, %s64, %s65
      %p69 = pneg %p63
      %p70 = scmp.eq.s32.totalorder %s40, 1
      %p71 = por %p69, %p70
      %p72 = scmp.ne.s32.totalorder %s64, %s67
      %p73 = scmp.eq.s32.totalorder %s40, 0
      %p74 = por %p72, %p73
      %p75 = scmp.ne.s32.totalorder %s64, %s67
      %p76 = scmp.eq.s32.totalorder %s45, 1
      %p77 = por %p75, %p76
      %p78 = scmp.ne.s32.totalorder %s67, %s68
      %p79 = scmp.eq.s32.totalorder %s45, 0
      %p80 = por %p78, %p79
      %p81 = scmp.ne.s32.totalorder %s67, %s68
      %p82 = scmp.eq.s32.totalorder %s46, 1
      %p83 = por %p81, %p82
      %p85 = scmp.ne.s32.totalorder %s68, %s84
      %p86 = scmp.eq.s32.totalorder %s46, 0
      %p87 = por %p85, %p86
      %s88 = ssub.s32 %s47, %s59
      %p89 = scmp.eq.s32.totalorder %s88, 0
      %s91 = sadd.s32 %s90, 1
      %s92 = scalar_select %p89, %s90, %s91
      %p95 = pneg %p89
      %p96 = scmp.eq.s32.totalorder %s40, 1
      %p97 = por %p95, %p96
      %p98 = scmp.ne.s32.totalorder %s90, %s93
      %p99 = scmp.eq.s32.totalorder %s40, 0
      %p100 = por %p98, %p99
      %p101 = scmp.ne.s32.totalorder %s90, %s93
      %p102 = scmp.eq.s32.totalorder %s45, 1
      %p103 = por %p101, %p102
      %p104 = scmp.ne.s32.totalorder %s93, %s94
      %p105 = scmp.eq.s32.totalorder %s45, 0
      %p106 = por %p104, %p105
      %p107 = scmp.ne.s32.totalorder %s93, %s94
      %p108 = scmp.eq.s32.totalorder %s46, 1
      %p109 = por %p107, %p108
      %p111 = scmp.ne.s32.totalorder %s94, %s110
      %p112 = scmp.eq.s32.totalorder %s46, 0
      %p113 = por %p111, %p112
      %s114 = ssub.s32 %s47, %s59
      %p115 = scmp.eq.s32.totalorder %s114, 0
      %s117 = sadd.s32 %s116, 1
      %s118 = scalar_select %p115, %s116, %s117
      %p121 = pneg %p115
      %p122 = scmp.eq.s32.totalorder %s40, 1
      %p123 = por %p121, %p122
      %p124 = scmp.ne.s32.totalorder %s116, %s119
      %p125 = scmp.eq.s32.totalorder %s40, 0
      %p126 = por %p124, %p125
      %p127 = scmp.ne.s32.totalorder %s116, %s119
      %p128 = scmp.eq.s32.totalorder %s45, 1
      %p129 = por %p127, %p128
      %p130 = scmp.ne.s32.totalorder %s119, %s120
      %p131 = scmp.eq.s32.totalorder %s45, 0
      %p132 = por %p130, %p131
      %p133 = scmp.ne.s32.totalorder %s119, %s120
      %p134 = scmp.eq.s32.totalorder %s46, 1
      %p135 = por %p133, %p134
      %p137 = scmp.ne.s32.totalorder %s120, %s136
      %p138 = scmp.eq.s32.totalorder %s46, 0
      %p139 = por %p137, %p138
      %s141 = sadd.s32 %s140, 1
      %p144 = scmp.eq.s32.totalorder %s40, 1
      %p145 = scmp.ne.s32.totalorder %s140, %s142
      %p146 = scmp.eq.s32.totalorder %s40, 0
      %p147 = por %p145, %p146
      %p148 = scmp.ne.s32.totalorder %s140, %s142
      %p149 = scmp.eq.s32.totalorder %s45, 1
      %p150 = por %p148, %p149
      %p151 = scmp.ne.s32.totalorder %s142, %s143
      %p152 = scmp.eq.s32.totalorder %s45, 0
      %p153 = por %p151, %p152
      %p154 = scmp.ne.s32.totalorder %s142, %s143
      %p155 = scmp.eq.s32.totalorder %s46, 1
      %p156 = por %p154, %p155
      %p158 = scmp.ne.s32.totalorder %s143, %s157
      %p159 = scmp.eq.s32.totalorder %s46, 0
      %p160 = por %p158, %p159
      %s162 = sadd.s32 %s161, 1
      %p165 = scmp.eq.s32.totalorder %s40, 1
      %p166 = scmp.ne.s32.totalorder %s161, %s163
      %p167 = scmp.eq.s32.totalorder %s40, 0
      %p168 = por %p166, %p167
      %p169 = scmp.ne.s32.totalorder %s161, %s163
      %p170 = scmp.eq.s32.totalorder %s45, 1
      %p171 = por %p169, %p170
      %p172 = scmp.ne.s32.totalorder %s163, %s164
      %p173 = scmp.eq.s32.totalorder %s45, 0
      %p174 = por %p172, %p173
      %p175 = scmp.ne.s32.totalorder %s163, %s164
      %p176 = scmp.eq.s32.totalorder %s46, 1
      %p177 = por %p175, %p176
      %p179 = scmp.ne.s32.totalorder %s164, %s178
      %p180 = scmp.eq.s32.totalorder %s46, 0
      %p181 = por %p179, %p180
      %s183 = sadd.s32 %s182, 1
      %p186 = scmp.eq.s32.totalorder %s40, 1
      %p187 = scmp.ne.s32.totalorder %s182, %s184
      %p188 = scmp.eq.s32.totalorder %s40, 0
      %p189 = por %p187, %p188
      %p190 = scmp.ne.s32.totalorder %s182, %s184
      %p191 = scmp.eq.s32.totalorder %s45, 1
      %p192 = por %p190, %p191
      %p193 = scmp.ne.s32.totalorder %s184, %s185
      %p194 = scmp.eq.s32.totalorder %s45, 0
      %p195 = por %p193, %p194
      %p196 = scmp.ne.s32.totalorder %s184, %s185
      %p197 = scmp.eq.s32.totalorder %s46, 1
      %p198 = por %p196, %p197
      %p200 = scmp.ne.s32.totalorder %s185, %s199
      %p201 = scmp.eq.s32.totalorder %s46, 0
      %p202 = por %p200, %p201
      %s204 = sadd.s32 %s203, 1
      %p207 = scmp.eq.s32.totalorder %s40, 1
      %p208 = scmp.ne.s32.totalorder %s203, %s205
      %p209 = scmp.eq.s32.totalorder %s40, 0
      %p210 = por %p208, %p209
      %p211 = scmp.ne.s32.totalorder %s203, %s205
      %p212 = scmp.eq.s32.totalorder %s45, 1
      %p213 = por %p211, %p212
      %p214 = scmp.ne.s32.totalorder %s205, %s206
      %p215 = scmp.eq.s32.totalorder %s45, 0
      %p216 = por %p214, %p215
      %p217 = scmp.ne.s32.totalorder %s205, %s206
      %p218 = scmp.eq.s32.totalorder %s46, 1
      %p219 = por %p217, %p218
      %p221 = scmp.ne.s32.totalorder %s206, %s220
      %p222 = scmp.eq.s32.totalorder %s46, 0
      %p223 = por %p221, %p222
      %s225 = sadd.s32 %s224, 1
      %p228 = scmp.eq.s32.totalorder %s40, 1
      %p229 = scmp.ne.s32.totalorder %s224, %s226
      %p230 = scmp.eq.s32.totalorder %s40, 0
      %p231 = por %p229, %p230
      %p232 = scmp.ne.s32.totalorder %s224, %s226
      %p233 = scmp.eq.s32.totalorder %s45, 1
      %p234 = por %p232, %p233
      %p235 = scmp.ne.s32.totalorder %s226, %s227
      %p236 = scmp.eq.s32.totalorder %s45, 0
      %p237 = por %p235, %p236
      %p238 = scmp.ne.s32.totalorder %s226, %s227
      %p239 = scmp.eq.s32.totalorder %s46, 1
      %p240 = por %p238, %p239
      %p242 = scmp.ne.s32.totalorder %s227, %s241
      %p243 = scmp.eq.s32.totalorder %s46, 0
      %p244 = por %p242, %p243
      %s246 = sadd.s32 %s245, 1
      %p249 = scmp.eq.s32.totalorder %s40, 1
      %p250 = scmp.ne.s32.totalorder %s245, %s247
      %p251 = scmp.eq.s32.totalorder %s40, 0
      %p252 = por %p250, %p251
      %p253 = scmp.ne.s32.totalorder %s245, %s247
      %p254 = scmp.eq.s32.totalorder %s45, 1
      %p255 = por %p253, %p254
      %p256 = scmp.ne.s32.totalorder %s247, %s248
      %p257 = scmp.eq.s32.totalorder %s45, 0
      %p258 = por %p256, %p257
      %p259 = scmp.ne.s32.totalorder %s247, %s248
      %p260 = scmp.eq.s32.totalorder %s46, 1
      %p261 = por %p259, %p260
      %p263 = scmp.ne.s32.totalorder %s248, %s262
      %p264 = scmp.eq.s32.totalorder %s46, 0
      %p265 = por %p263, %p264
      %s267 = sadd.s32 %s266, 1
      %p270 = scmp.eq.s32.totalorder %s40, 1
      %p271 = scmp.ne.s32.totalorder %s266, %s268
      %p272 = scmp.eq.s32.totalorder %s40, 0
      %p273 = por %p271, %p272
      %p274 = scmp.ne.s32.totalorder %s266, %s268
      %p275 = scmp.eq.s32.totalorder %s45, 1
      %p276 = por %p274, %p275
      %p277 = scmp.ne.s32.totalorder %s268, %s269
      %p278 = scmp.eq.s32.totalorder %s45, 0
      %p279 = por %p277, %p278
      %p280 = scmp.ne.s32.totalorder %s268, %s269
      %p281 = scmp.eq.s32.totalorder %s46, 1
      %p282 = por %p280, %p281
      %p284 = scmp.ne.s32.totalorder %s269, %s283
      %p285 = scmp.eq.s32.totalorder %s46, 0
      %p286 = por %p284, %p285
      %s288 = sadd.s32 %s287, 1
      %p291 = scmp.eq.s32.totalorder %s40, 1
      %p292 = scmp.ne.s32.totalorder %s287, %s289
      %p293 = scmp.eq.s32.totalorder %s40, 0
      %p294 = por %p292, %p293
      %p295 = scmp.ne.s32.totalorder %s287, %s289
      %p296 = scmp.eq.s32.totalorder %s45, 1
      %p297 = por %p295, %p296
      %p298 = scmp.ne.s32.totalorder %s289, %s290
      %p299 = scmp.eq.s32.totalorder %s45, 0
      %p300 = por %p298, %p299
      %p301 = scmp.ne.s32.totalorder %s289, %s290
      %p302 = scmp.eq.s32.totalorder %s46, 1
      %p303 = por %p301, %p302
      %p305 = scmp.ne.s32.totalorder %s290, %s304
      %p306 = scmp.eq.s32.totalorder %s46, 0
      %p307 = por %p305, %p306
      %s309 = sadd.s32 %s308, 1
      %p312 = scmp.eq.s32.totalorder %s40, 1
      %p313 = scmp.ne.s32.totalorder %s308, %s310
      %p314 = scmp.eq.s32.totalorder %s40, 0
      %p315 = por %p313, %p314
      %p316 = scmp.ne.s32.totalorder %s308, %s310
      %p317 = scmp.eq.s32.totalorder %s45, 1
      %p318 = por %p316, %p317
      %p319 = scmp.ne.s32.totalorder %s310, %s311
      %p320 = scmp.eq.s32.totalorder %s45, 0
      %p321 = por %p319, %p320
      %p322 = scmp.ne.s32.totalorder %s310, %s311
      %p323 = scmp.eq.s32.totalorder %s46, 1
      %p324 = por %p322, %p323
      %p326 = scmp.ne.s32.totalorder %s311, %s325
      %p327 = scmp.eq.s32.totalorder %s46, 0
      %p328 = por %p326, %p327
      %s330 = sadd.s32 %s329, 1
      %p333 = scmp.eq.s32.totalorder %s40, 1
      %p334 = scmp.ne.s32.totalorder %s329, %s331
      %p335 = scmp.eq.s32.totalorder %s40, 0
      %p336 = por %p334, %p335
      %p337 = scmp.ne.s32.totalorder %s329, %s331
      %p338 = scmp.eq.s32.totalorder %s45, 1
      %p339 = por %p337, %p338
      %p340 = scmp.ne.s32.totalorder %s331, %s332
      %p341 = scmp.eq.s32.totalorder %s45, 0
      %p342 = por %p340, %p341
      %p343 = scmp.ne.s32.totalorder %s331, %s332
      %p344 = scmp.eq.s32.totalorder %s46, 1
      %p345 = por %p343, %p344
      %p347 = scmp.ne.s32.totalorder %s332, %s346
      %p348 = scmp.eq.s32.totalorder %s46, 0
      %p349 = por %p347, %p348
      %s351 = sadd.s32 %s350, 1
      %p354 = scmp.eq.s32.totalorder %s40, 1
      %p355 = scmp.ne.s32.totalorder %s350, %s352
      %p356 = scmp.eq.s32.totalorder %s40, 0
      %p357 = por %p355, %p356
      %p358 = scmp.ne.s32.totalorder %s350, %s352
      %p359 = scmp.eq.s32.totalorder %s45, 1
      %p360 = por %p358, %p359
      %p361 = scmp.ne.s32.totalorder %s352, %s353
      %p362 = scmp.eq.s32.totalorder %s45, 0
      %p363 = por %p361, %p362
      %p364 = scmp.ne.s32.totalorder %s352, %s353
      %p365 = scmp.eq.s32.totalorder %s46, 1
      %p366 = por %p364, %p365
      %p368 = scmp.ne.s32.totalorder %s353, %s367
      %p369 = scmp.eq.s32.totalorder %s46, 0
      %p370 = por %p368, %p369
      %s372 = sadd.s32 %s371, 1
      %p375 = scmp.eq.s32.totalorder %s40, 1
      %p376 = scmp.ne.s32.totalorder %s371, %s373
      %p377 = scmp.eq.s32.totalorder %s40, 0
      %p378 = por %p376, %p377
      %p379 = scmp.ne.s32.totalorder %s371, %s373
      %p380 = scmp.eq.s32.totalorder %s45, 1
      %p381 = por %p379, %p380
      %p382 = scmp.ne.s32.totalorder %s373, %s374
      %p383 = scmp.eq.s32.totalorder %s45, 0
      %p384 = por %p382, %p383
      %p385 = scmp.ne.s32.totalorder %s373, %s374
      %p386 = scmp.eq.s32.totalorder %s46, 1
      %p387 = por %p385, %p386
      %p389 = scmp.ne.s32.totalorder %s374, %s388
      %p390 = scmp.eq.s32.totalorder %s46, 0
      %p391 = por %p389, %p390
      %s393 = sadd.s32 %s392, 1
      %p396 = scmp.eq.s32.totalorder %s40, 1
      %p397 = scmp.ne.s32.totalorder %s392, %s394
      %p398 = scmp.eq.s32.totalorder %s40, 0
      %p399 = por %p397, %p398
      %p400 = scmp.ne.s32.totalorder %s392, %s394
      %p401 = scmp.eq.s32.totalorder %s45, 1
      %p402 = por %p400, %p401
      %p403 = scmp.ne.s32.totalorder %s394, %s395
      %p404 = scmp.eq.s32.totalorder %s45, 0
      %p405 = por %p403, %p404
      %p406 = scmp.ne.s32.totalorder %s394, %s395
      %p407 = scmp.eq.s32.totalorder %s46, 1
      %p408 = por %p406, %p407
      %p410 = scmp.ne.s32.totalorder %s395, %s409
      %p411 = scmp.eq.s32.totalorder %s46, 0
      %p412 = por %p410, %p411
      %s414 = sadd.s32 %s413, 1
      %p417 = scmp.eq.s32.totalorder %s40, 1
      %p418 = scmp.ne.s32.totalorder %s413, %s415
      %p419 = scmp.eq.s32.totalorder %s40, 0
      %p420 = por %p418, %p419
      %p421 = scmp.ne.s32.totalorder %s413, %s415
      %p422 = scmp.eq.s32.totalorder %s45, 1
      %p423 = por %p421, %p422
      %p424 = scmp.ne.s32.totalorder %s415, %s416
      %p425 = scmp.eq.s32.totalorder %s45, 0
      %p426 = por %p424, %p425
      %p427 = scmp.ne.s32.totalorder %s415, %s416
      %p428 = scmp.eq.s32.totalorder %s46, 1
      %p429 = por %p427, %p428
      %p431 = scmp.ne.s32.totalorder %s416, %s430
      %p432 = scmp.eq.s32.totalorder %s46, 0
      %p433 = por %p431, %p432
      %s435 = sadd.s32 %s434, 1
      %p438 = scmp.eq.s32.totalorder %s40, 1
      %p439 = scmp.ne.s32.totalorder %s434, %s436
      %p440 = scmp.eq.s32.totalorder %s40, 0
      %p441 = por %p439, %p440
      %p442 = scmp.ne.s32.totalorder %s434, %s436
      %p443 = scmp.eq.s32.totalorder %s45, 1
      %p444 = por %p442, %p443
      %p445 = scmp.ne.s32.totalorder %s436, %s437
      %p446 = scmp.eq.s32.totalorder %s45, 0
      %p447 = por %p445, %p446
      %p448 = scmp.ne.s32.totalorder %s436, %s437
      %p449 = scmp.eq.s32.totalorder %s46, 1
      %p450 = por %p448, %p449
      %p452 = scmp.ne.s32.totalorder %s437, %s451
      %p453 = scmp.eq.s32.totalorder %s46, 0
      %p454 = por %p452, %p453
      %s456 = sadd.s32 %s455, 1
      %p459 = scmp.eq.s32.totalorder %s40, 1
      %p460 = scmp.ne.s32.totalorder %s455, %s457
      %p461 = scmp.eq.s32.totalorder %s40, 0
      %p462 = por %p460, %p461
      %p463 = scmp.ne.s32.totalorder %s455, %s457
      %p464 = scmp.eq.s32.totalorder %s45, 1
      %p465 = por %p463, %p464
      %p466 = scmp.ne.s32.totalorder %s457, %s458
      %p467 = scmp.eq.s32.totalorder %s45, 0
      %p468 = por %p466, %p467
      %p469 = scmp.ne.s32.totalorder %s457, %s458
      %p470 = scmp.eq.s32.totalorder %s46, 1
      %p471 = por %p469, %p470
      %p473 = scmp.ne.s32.totalorder %s458, %s472
      %p474 = scmp.eq.s32.totalorder %s46, 0
      %p475 = por %p473, %p474
      %s476 = ssub.s32 %s47, %s59
      %s477 = ssub.s32 %s48, %s55
      %s478 = sor.u32 %s476, %s477
      %p479 = scmp.eq.s32.totalorder %s478, 0
      %s481 = sadd.s32 %s480, 1
      %s482 = scalar_select %p479, %s480, %s481
      %p485 = pneg %p479
      %p486 = scmp.eq.s32.totalorder %s40, 1
      %p487 = por %p485, %p486
      %p488 = scmp.ne.s32.totalorder %s480, %s483
      %p489 = scmp.eq.s32.totalorder %s40, 0
      %p490 = por %p488, %p489
      %p491 = scmp.ne.s32.totalorder %s480, %s483
      %p492 = scmp.eq.s32.totalorder %s45, 1
      %p493 = por %p491, %p492
      %p494 = scmp.ne.s32.totalorder %s483, %s484
      %p495 = scmp.eq.s32.totalorder %s45, 0
      %p496 = por %p494, %p495
      %p497 = scmp.ne.s32.totalorder %s483, %s484
      %p498 = scmp.eq.s32.totalorder %s46, 1
      %p499 = por %p497, %p498
      %p501 = scmp.ne.s32.totalorder %s484, %s500
      %p502 = scmp.eq.s32.totalorder %s46, 0
      %p503 = por %p501, %p502
      %s504 = ssub.s32 %s47, %s59
      %s505 = ssub.s32 %s48, %s55
      %s506 = sor.u32 %s504, %s505
      %p507 = scmp.eq.s32.totalorder %s506, 0
      %s509 = sadd.s32 %s508, 1
      %s510 = scalar_select %p507, %s508, %s509
      %p513 = pneg %p507
      %p514 = scmp.eq.s32.totalorder %s40, 1
      %p515 = por %p513, %p514
      %p516 = scmp.ne.s32.totalorder %s508, %s511
      %p517 = scmp.eq.s32.totalorder %s40, 0
      %p518 = por %p516, %p517
      %p519 = scmp.ne.s32.totalorder %s508, %s511
      %p520 = scmp.eq.s32.totalorder %s45, 1
      %p521 = por %p519, %p520
      %p522 = scmp.ne.s32.totalorder %s511, %s512
      %p523 = scmp.eq.s32.totalorder %s45, 0
      %p524 = por %p522, %p523
      %p525 = scmp.ne.s32.totalorder %s511, %s512
      %p526 = scmp.eq.s32.totalorder %s46, 1
      %p527 = por %p525, %p526
      %p529 = scmp.ne.s32.totalorder %s512, %s528
      %p530 = scmp.eq.s32.totalorder %s46, 0
      %p531 = por %p529, %p530
      %p532 = scmp.le.s32.totalorder 1, %s40
      %p533 = scmp.lt.s32.totalorder %s40, 3
      %p534 = pnand %p532, %p533
      %p535 = pneg %p534
      // Predicated region
      $region9: #{tpu_custom_call.1} parent=5 // pred_check
        _
      $region10: #{tpu_custom_call.1} parent=5 // pred_check_branch
        %537 = sbr.rel (%p534) target = $region12
      $region11: #{tpu_custom_call.1} parent=5 // pred_region
        %s538 = ssub.s32 %s40, 1
        // Predicated region
        $region13: #{tpu_custom_call.1} parent=11 // pred_check
          %p539 = pneg %p153
        $region14: #{tpu_custom_call.1} parent=11 // pred_check_branch
          %541 = sbr.rel (%p539) target = $region16
        $region15: #{tpu_custom_call.1} parent=11 // pred_region
          _
        $region16: #{tpu_custom_call.1} parent=11 // pred_fallthru
          _
        // Predicated region
        $region17: #{tpu_custom_call.1} parent=11 // pred_check
          %p542 = pneg %p174
        $region18: #{tpu_custom_call.1} parent=11 // pred_check_branch
          %544 = sbr.rel (%p542) target = $region20
        $region19: #{tpu_custom_call.1} parent=11 // pred_region
          _
        $region20: #{tpu_custom_call.1} parent=11 // pred_fallthru
          _
        // Predicated region
        $region21: #{tpu_custom_call.1} parent=11 // pred_check
          %p545 = pneg %p195
        $region22: #{tpu_custom_call.1} parent=11 // pred_check_branch
          %547 = sbr.rel (%p545) target = $region24
        $region23: #{tpu_custom_call.1} parent=11 // pred_region
          %s549 = ssub.s32 256, 256
          %550 = vsyncadd [#allocation6], %s549
          %s551 = sshll.u32 [#allocation5], 4
          %s552 = int_to_ptr.vmem [resolvable:$true] %s551
          %557 = dma.hbm_to_vmem [thread:$0]  %s5, 256, %s552, [#allocation6], 64, 64, 4
        $region24: #{tpu_custom_call.1} parent=11 // pred_fallthru
          _
        // Predicated region
        $region25: #{tpu_custom_call.1} parent=11 // pred_check
          %p558 = pneg %p216
        $region26: #{tpu_custom_call.1} parent=11 // pred_check_branch
          %560 = sbr.rel (%p558) target = $region28
        $region27: #{tpu_custom_call.1} parent=11 // pred_region
          %s562 = ssub.s32 16, 16
          %563 = vsyncadd [#allocation6], %s562
          %s565 = sshll.u32 [#allocation7], 4
          %s566 = int_to_ptr.vmem [resolvable:$true] %s565
          %568 = dma.hbm_to_vmem [thread:$0]  %s6, 16, %s566, [#allocation6]
        $region28: #{tpu_custom_call.1} parent=11 // pred_fallthru
          _
        // Predicated region
        $region29: #{tpu_custom_call.1} parent=11 // pred_check
          %p569 = pneg %p237
        $region30: #{tpu_custom_call.1} parent=11 // pred_check_branch
          %571 = sbr.rel (%p569) target = $region32
        $region31: #{tpu_custom_call.1} parent=11 // pred_region
          %s573 = ssub.s32 256, 256
          %574 = vsyncadd [#allocation9], %s573
          %s575 = sshll.u32 [#allocation8], 4
          %s576 = int_to_ptr.vmem [resolvable:$true] %s575
          %581 = dma.hbm_to_vmem [thread:$0]  %s7, 256, %s576, [#allocation9], 64, 64, 4
        $region32: #{tpu_custom_call.1} parent=11 // pred_fallthru
          _
        // Predicated region
        $region33: #{tpu_custom_call.1} parent=11 // pred_check
          %p582 = pneg %p258
        $region34: #{tpu_custom_call.1} parent=11 // pred_check_branch
          %584 = sbr.rel (%p582) target = $region36
        $region35: #{tpu_custom_call.1} parent=11 // pred_region
          %s586 = ssub.s32 16, 16
          %587 = vsyncadd [#allocation9], %s586
          %s589 = sshll.u32 [#allocation10], 4
          %s590 = int_to_ptr.vmem [resolvable:$true] %s589
          %592 = dma.hbm_to_vmem [thread:$0]  %s8, 16, %s590, [#allocation9]
        $region36: #{tpu_custom_call.1} parent=11 // pred_fallthru
          _
        // Predicated region
        $region37: #{tpu_custom_call.1} parent=11 // pred_check
          %p593 = pneg %p279
        $region38: #{tpu_custom_call.1} parent=11 // pred_check_branch
          %595 = sbr.rel (%p593) target = $region40
        $region39: #{tpu_custom_call.1} parent=11 // pred_region
          _
        $region40: #{tpu_custom_call.1} parent=11 // pred_fallthru
          _
        // Predicated region
        $region41: #{tpu_custom_call.1} parent=11 // pred_check
          %p596 = pneg %p300
        $region42: #{tpu_custom_call.1} parent=11 // pred_check_branch
          %598 = sbr.rel (%p596) target = $region44
        $region43: #{tpu_custom_call.1} parent=11 // pred_region
          %s600 = ssub.s32 16, 16
          %601 = vsyncadd [#allocation12], %s600
          %s603 = sshll.u32 [#allocation11], 4
          %s604 = int_to_ptr.vmem [resolvable:$true] %s603
          %606 = dma.hbm_to_vmem [thread:$0]  %s10, 16, %s604, [#allocation12]
        $region44: #{tpu_custom_call.1} parent=11 // pred_fallthru
          _
        // Predicated region
        $region45: #{tpu_custom_call.1} parent=11 // pred_check
          %p607 = pneg %p321
        $region46: #{tpu_custom_call.1} parent=11 // pred_check_branch
          %609 = sbr.rel (%p607) target = $region48
        $region47: #{tpu_custom_call.1} parent=11 // pred_region
          %s611 = ssub.s32 16, 16
          %612 = vsyncadd [#allocation12], %s611
          %s614 = sshll.u32 [#allocation13], 4
          %s615 = int_to_ptr.vmem [resolvable:$true] %s614
          %617 = dma.hbm_to_vmem [thread:$0]  %s11, 16, %s615, [#allocation12]
        $region48: #{tpu_custom_call.1} parent=11 // pred_fallthru
          _
        // Predicated region
        $region49: #{tpu_custom_call.1} parent=11 // pred_check
          %p618 = pneg %p342
        $region50: #{tpu_custom_call.1} parent=11 // pred_check_branch
          %620 = sbr.rel (%p618) target = $region52
        $region51: #{tpu_custom_call.1} parent=11 // pred_region
          %s622 = ssub.s32 16, 16
          %623 = vsyncadd [#allocation15], %s622
          %s625 = sshll.u32 [#allocation14], 4
          %s626 = int_to_ptr.vmem [resolvable:$true] %s625
          %628 = dma.hbm_to_vmem [thread:$0]  %s12, 16, %s626, [#allocation15]
        $region52: #{tpu_custom_call.1} parent=11 // pred_fallthru
          _
        // Predicated region
        $region53: #{tpu_custom_call.1} parent=11 // pred_check
          %p629 = pneg %p363
        $region54: #{tpu_custom_call.1} parent=11 // pred_check_branch
          %631 = sbr.rel (%p629) target = $region56
        $region55: #{tpu_custom_call.1} parent=11 // pred_region
          _
        $region56: #{tpu_custom_call.1} parent=11 // pred_fallthru
          _
        // Predicated region
        $region57: #{tpu_custom_call.1} parent=11 // pred_check
          %p632 = pneg %p384
        $region58: #{tpu_custom_call.1} parent=11 // pred_check_branch
          %634 = sbr.rel (%p632) target = $region60
        $region59: #{tpu_custom_call.1} parent=11 // pred_region
          _
        $region60: #{tpu_custom_call.1} parent=11 // pred_fallthru
          _
        // Predicated region
        $region61: #{tpu_custom_call.1} parent=11 // pred_check
          %p635 = pneg %p405
        $region62: #{tpu_custom_call.1} parent=11 // pred_check_branch
          %637 = sbr.rel (%p635) target = $region64
        $region63: #{tpu_custom_call.1} parent=11 // pred_region
          _
        $region64: #{tpu_custom_call.1} parent=11 // pred_fallthru
          _
        // Predicated region
        $region65: #{tpu_custom_call.1} parent=11 // pred_check
          %p638 = pneg %p426
        $region66: #{tpu_custom_call.1} parent=11 // pred_check_branch
          %640 = sbr.rel (%p638) target = $region68
        $region67: #{tpu_custom_call.1} parent=11 // pred_region
          _
        $region68: #{tpu_custom_call.1} parent=11 // pred_fallthru
          _
        // Predicated region
        $region69: #{tpu_custom_call.1} parent=11 // pred_check
          %p641 = pneg %p447
        $region70: #{tpu_custom_call.1} parent=11 // pred_check_branch
          %643 = sbr.rel (%p641) target = $region72
        $region71: #{tpu_custom_call.1} parent=11 // pred_region
          _
        $region72: #{tpu_custom_call.1} parent=11 // pred_fallthru
          _
        // Predicated region
        $region73: #{tpu_custom_call.1} parent=11 // pred_check
          %p644 = pneg %p468
        $region74: #{tpu_custom_call.1} parent=11 // pred_check_branch
          %646 = sbr.rel (%p644) target = $region76
        $region75: #{tpu_custom_call.1} parent=11 // pred_region
          _
        $region76: #{tpu_custom_call.1} parent=11 // pred_fallthru
          _
      $region12: #{tpu_custom_call.1} parent=5 // pred_fallthru
        _
      %p647 = scmp.lt.s32.totalorder %s40, 2
      // Predicated region
      $region77: #{tpu_custom_call.1} parent=5 // pred_check
        %p648 = pneg %p647
      $region78: #{tpu_custom_call.1} parent=5 // pred_check_branch
        %650 = sbr.rel (%p648) target = $region80
      $region79: #{tpu_custom_call.1} parent=5 // pred_region
        // Predicated region
        $region81: #{tpu_custom_call.1} parent=79 // pred_check
          %p651 = pneg %p74
        $region82: #{tpu_custom_call.1} parent=79 // pred_check_branch
          %653 = sbr.rel (%p651) target = $region84
        $region83: #{tpu_custom_call.1} parent=79 // pred_region
          %p654 = scmp.lt.s32.totalorder %s47, 1
          %s655 = scalar_select %p654, %s47, 1
          %p656 = scmp.lt.s32.totalorder %s48, 0
          %s657 = scalar_select %p656, %s48, 0
          %s658 = sadd.s32 %s657, %s655
          %s659 = smul.addr %s658, 8
          %s660 = scalar_lea.vmem %s0, %s659
        $region84: #{tpu_custom_call.1} parent=79 // pred_fallthru
          _
        // Predicated region
        $region85: #{tpu_custom_call.1} parent=79 // pred_check
          %p661 = pneg %p100
        $region86: #{tpu_custom_call.1} parent=79 // pred_check_branch
          %663 = sbr.rel (%p661) target = $region88
        $region87: #{tpu_custom_call.1} parent=79 // pred_region
          %p664 = scmp.lt.s32.totalorder %s47, 1
          %s665 = scalar_select %p664, %s47, 1
          %s666 = smul.addr %s665, 8
          %s667 = scalar_lea.vmem %s1, %s666
        $region88: #{tpu_custom_call.1} parent=79 // pred_fallthru
          _
        // Predicated region
        $region89: #{tpu_custom_call.1} parent=79 // pred_check
          %p668 = pneg %p126
        $region90: #{tpu_custom_call.1} parent=79 // pred_check_branch
          %670 = sbr.rel (%p668) target = $region92
        $region91: #{tpu_custom_call.1} parent=79 // pred_region
          %s671 = sand.u32 %s116, 1
          %s672 = scalar_lea.sflag [#allocation3], %s671
          %s673 = sand.u32 %s116, 1
          %s674 = scalar_lea.vmem [#allocation2], %s673
          %s676 = ssub.s32 16, 16
          %677 = vsyncadd %s672, %s676
          %s678 = smul.addr %s47, 16
          %s679 = scalar_lea.hbm %s2, %s678
          %s681 = sshll.u32 %s674, 4
          %s682 = int_to_ptr.vmem [resolvable:$true] %s681
          %684 = dma.hbm_to_vmem [thread:$0]  %s679, 16, %s682, %s672
        $region92: #{tpu_custom_call.1} parent=79 // pred_fallthru
          _
      $region80: #{tpu_custom_call.1} parent=5 // pred_fallthru
        _
      %p685 = scmp.le.s32.totalorder 1, %s40
      %p686 = scmp.lt.s32.totalorder %s40, 3
      %p687 = pnand %p685, %p686
      %p688 = pneg %p687
      // Predicated region
      $region93: #{tpu_custom_call.1} parent=5 // pred_check
        _
      $region94: #{tpu_custom_call.1} parent=5 // pred_check_branch
        %690 = sbr.rel (%p687) target = $region96
      $region95: #{tpu_custom_call.1} parent=5 // pred_region
        %s691 = ssub.s32 %s40, 1
        %s692 = sand.u32 %s119, 1
        %s693 = scalar_lea.sflag [#allocation3], %s692
        %s694 = sand.u32 %s119, 1
        %s695 = scalar_lea.vmem [#allocation2], %s694
        // Predicated region
        $region97: #{tpu_custom_call.1} parent=95 // pred_check
          %p696 = pneg %p132
        $region98: #{tpu_custom_call.1} parent=95 // pred_check_branch
          %698 = sbr.rel (%p696) target = $region100
        $region99: #{tpu_custom_call.1} parent=95 // pred_region
          %699 = dma.done %s693, 16
        $region100: #{tpu_custom_call.1} parent=95 // pred_fallthru
          _
        // Predicated region
        $region101: #{tpu_custom_call.1} parent=95 // pred_check
          %p700 = pneg %p195
        $region102: #{tpu_custom_call.1} parent=95 // pred_check_branch
          %702 = sbr.rel (%p700) target = $region104
        $region103: #{tpu_custom_call.1} parent=95 // pred_region
          %703 = dma.done [#allocation6], 256
        $region104: #{tpu_custom_call.1} parent=95 // pred_fallthru
          _
        // Predicated region
        $region105: #{tpu_custom_call.1} parent=95 // pred_check
          %p704 = pneg %p216
        $region106: #{tpu_custom_call.1} parent=95 // pred_check_branch
          %706 = sbr.rel (%p704) target = $region108
        $region107: #{tpu_custom_call.1} parent=95 // pred_region
          %707 = dma.done [#allocation6], 16
        $region108: #{tpu_custom_call.1} parent=95 // pred_fallthru
          _
        // Predicated region
        $region109: #{tpu_custom_call.1} parent=95 // pred_check
          %p708 = pneg %p237
        $region110: #{tpu_custom_call.1} parent=95 // pred_check_branch
          %710 = sbr.rel (%p708) target = $region112
        $region111: #{tpu_custom_call.1} parent=95 // pred_region
          %711 = dma.done [#allocation9], 256
        $region112: #{tpu_custom_call.1} parent=95 // pred_fallthru
          _
        // Predicated region
        $region113: #{tpu_custom_call.1} parent=95 // pred_check
          %p712 = pneg %p258
        $region114: #{tpu_custom_call.1} parent=95 // pred_check_branch
          %714 = sbr.rel (%p712) target = $region116
        $region115: #{tpu_custom_call.1} parent=95 // pred_region
          %715 = dma.done [#allocation9], 16
        $region116: #{tpu_custom_call.1} parent=95 // pred_fallthru
          _
        // Predicated region
        $region117: #{tpu_custom_call.1} parent=95 // pred_check
          %p716 = pneg %p300
        $region118: #{tpu_custom_call.1} parent=95 // pred_check_branch
          %718 = sbr.rel (%p716) target = $region120
        $region119: #{tpu_custom_call.1} parent=95 // pred_region
          %719 = dma.done [#allocation12], 16
        $region120: #{tpu_custom_call.1} parent=95 // pred_fallthru
          _
        // Predicated region
        $region121: #{tpu_custom_call.1} parent=95 // pred_check
          %p720 = pneg %p321
        $region122: #{tpu_custom_call.1} parent=95 // pred_check_branch
          %722 = sbr.rel (%p720) target = $region124
        $region123: #{tpu_custom_call.1} parent=95 // pred_region
          %723 = dma.done [#allocation12], 16
        $region124: #{tpu_custom_call.1} parent=95 // pred_fallthru
          _
        // Predicated region
        $region125: #{tpu_custom_call.1} parent=95 // pred_check
          %p724 = pneg %p342
        $region126: #{tpu_custom_call.1} parent=95 // pred_check_branch
          %726 = sbr.rel (%p724) target = $region128
        $region127: #{tpu_custom_call.1} parent=95 // pred_region
          %727 = dma.done [#allocation15], 16
        $region128: #{tpu_custom_call.1} parent=95 // pred_fallthru
          _
        %p728 = scmp.lt.s32.totalorder %s49, 1
        %s729 = scalar_select %p728, %s49, 1
        %p730 = scmp.lt.s32.totalorder %s50, 0
        %s731 = scalar_select %p730, %s50, 0
        %s732 = sadd.s32 %s731, %s729
        %s733 = smul.addr %s732, 8
        %s734 = scalar_lea.vmem %s0, %s733
        %p735 = pneg %p80
        %p736 = pneg %p77
        %p737 = scmp.lt.s32.totalorder %s49, 1
        %s738 = scalar_select %p737, %s49, 1
        %s739 = smul.addr %s738, 8
        %s740 = scalar_lea.vmem %s1, %s739
        %p741 = pneg %p106
        %p742 = pneg %p103
        %s743 = sand.u32 %s119, 1
        %s744 = scalar_lea.sflag [#allocation3], %s743
        %s745 = sand.u32 %s119, 1
        %s746 = scalar_lea.vmem [#allocation2], %s745
        %p747 = pneg %p132
        %p748 = pneg %p129
        %p749 = pneg %p153
        %p750 = pneg %p150
        %p751 = pneg %p174
        %p752 = pneg %p171
        %p753 = pneg %p195
        %p754 = pneg %p192
        %p755 = pneg %p216
        %p756 = pneg %p213
        %p757 = pneg %p237
        %p758 = pneg %p234
        %p759 = pneg %p258
        %p760 = pneg %p255
        %p761 = pneg %p279
        %p762 = pneg %p276
        %p763 = pneg %p300
        %p764 = pneg %p297
        %p765 = pneg %p321
        %p766 = pneg %p318
        %p767 = pneg %p342
        %p768 = pneg %p339
        %p769 = pneg %p363
        %p770 = pneg %p360
        %p771 = pneg %p384
        %p772 = pneg %p381
        %p773 = pneg %p405
        %p774 = pneg %p402
        %p775 = pneg %p426
        %p776 = pneg %p423
        %p777 = pneg %p447
        %p778 = pneg %p444
        %p779 = pneg %p468
        %p780 = pneg %p465
        %p781 = pneg %p496
        %p782 = pneg %p493
        %s783 = sand.u32 %s483, 1
        %s784 = scalar_lea.sflag [#allocation4], %s783
        %s785 = sand.u32 %s483, 1
        %s786 = smul.addr %s785, 8
        %s787 = scalar_lea.vmem [#allocation16], %s786
        %p788 = pneg %p524
        %p789 = pneg %p521
        %s790 = sand.u32 %s511, 1
        %s791 = scalar_lea.sflag [#allocation18], %s790
        %s792 = sand.u32 %s511, 1
        %s793 = smul.addr %s792, 32
        %s794 = scalar_lea.vmem [#allocation17], %s793
        %p795 = scmp.lt.s32.totalorder %s49, 1
        %s796 = scalar_select %p795, %s49, 1
        %p797 = scmp.lt.s32.totalorder %s50, 0
        %s798 = scalar_select %p797, %s50, 0
        %s799 = sadd.s32 %s798, %s796
        %s800 = smul.addr %s799, 8
        %s801 = scalar_lea.vmem %s0, %s800
        %p802 = scmp.lt.s32.totalorder %s49, 1
        %s803 = scalar_select %p802, %s49, 1
        %s804 = smul.addr %s803, 8
        %s805 = scalar_lea.vmem %s1, %s804
        %v807 = vld [vmem:[%s801] sm:$0xff]
        %v808 = vpack.c.bf16 %v807, %v807
        %v809 = vld [vmem:[%s805] sm:$0xff]
        %v810 = vpack.c.bf16 %v809, %v809
        %v811 = vld [vmem:[%s695] sm:$0x1]
        %v812 = vld [vmem:[%s3] sm:$0xf]
        %v813 = vld [vmem:[%s3 + $0x4] sm:$0xf]
        %v814 = vld [vmem:[%s3 + $0x8] sm:$0xf]
        %v815 = vld [vmem:[%s3 + $0xc] sm:$0xf]
        %v816 = vld [vmem:[%s4] sm:$0x1]
        %v818 = vlaneseq
        %v819 = vshrl.u32 %v818, 7
        %v820 = vsub.s32 0, %v819
        %v821 = vrot.slane %v816, %v820
        %v827 = vunpack.c.l.b16 %v812
        %v828 = vunpack.c.l.b16 %v813
        %v829 = vunpack.c.l.b16 %v814
        %v830 = vunpack.c.l.b16 %v815
        %v831 = vpack.c.b16 %v828, %v827
        %v832 = vpack.c.b16 %v830, %v829
        %vm835 = vcmask 261120
        %v837 = vsel %vm835, %v808, 0
        %839 = vmatprep.subr.bf16.mxu0 0
        %840 = vmatpush1.bf16.msra.mxu0 %v831
        %841 = vmatprep.subr.bf16.mxu0 0
        %842 = vmatpush1.bf16.msra.mxu0 %v832
        %843 = vmatprep.subr.bf16.mxu0 0
        %844 = vmatpush1.bf16.msra.mxu0 0
        %845 = vmatprep.subr.bf16.mxu0 0
        %846 = vmatpush1.bf16.msra.mxu0 0
        %847 = vmatprep.subr.bf16.mxu0 0
        %848 = vmatpush1.bf16.msra.mxu0 0
        %849 = vmatprep.subr.bf16.mxu0 0
        %850 = vmatpush1.bf16.msra.mxu0 0
        %851 = vmatprep.subr.bf16.mxu0 0
        %852 = vmatpush1.bf16.msra.mxu0 0
        %853 = vmatprep.subr.bf16.mxu0 0
        %854 = vmatpush1.bf16.msra.mxu0 0
        %855 = vmatprep.subr.bf16.mxu0 0
        %856 = vmatpush1.bf16.msra.mxu0 0
        %857 = vmatprep.subr.bf16.mxu0 0
        %858 = vmatpush1.bf16.msra.mxu0 0
        %859 = vmatprep.subr.bf16.mxu0 0
        %860 = vmatpush1.bf16.msra.mxu0 0
        %861 = vmatprep.subr.bf16.mxu0 0
        %862 = vmatpush1.bf16.msra.mxu0 0
        %863 = vmatprep.subr.bf16.mxu0 0
        %864 = vmatpush1.bf16.msra.mxu0 0
        %865 = vmatprep.subr.bf16.mxu0 0
        %866 = vmatpush1.bf16.msra.mxu0 0
        %867 = vmatprep.subr.bf16.mxu0 0
        %868 = vmatpush1.bf16.msra.mxu0 0
        %869 = vmatprep.subr.bf16.mxu0 0
        %870 = vmatpush1.bf16.msra.mxu0 0
        %871 = vmatprep.mubr.bf16.mxu0 0
        %872 = vmatmul.mubr.bf16.gmra.mrb[0].mxu0 %v837
        %v873 = vpop.f32.mrb[0].mxu0
        %v874 = vadd.f32 %v821, %v873
        %v875 = vpop.f32.mrb[0].mxu0
        %v876 = vpop.f32.mrb[0].mxu0
        %v877 = vpop.f32.mrb[0].mxu0
        %878 = vdwg.mxu0
        %v879 = vld [vmem:[#allocation5] sm:$0xf]
        %v880 = vld [vmem:[#allocation5 + $0x4] sm:$0xf]
        %v881 = vld [vmem:[#allocation5 + $0x8] sm:$0xf]
        %v882 = vld [vmem:[#allocation5 + $0xc] sm:$0xf]
        %v883 = vld [vmem:[#allocation7] sm:$0x1]
        %v885 = vlaneseq
        %v886 = vshrl.u32 %v885, 7
        %v887 = vsub.s32 0, %v886
        %v888 = vrot.slane %v883, %v887
        %v894 = vunpack.c.l.b16 %v879
        %v895 = vunpack.c.l.b16 %v880
        %v896 = vunpack.c.l.b16 %v881
        %v897 = vunpack.c.l.b16 %v882
        %v898 = vpack.c.b16 %v895, %v894
        %v899 = vpack.c.b16 %v897, %v896
        %v903 = vsel %vm835, %v810, 0
        %905 = vmatprep.subr.bf16.mxu0 0
        %906 = vmatpush1.bf16.msra.mxu0 %v898
        %907 = vmatprep.subr.bf16.mxu0 0
        %908 = vmatpush1.bf16.msra.mxu0 %v899
        %909 = vmatprep.subr.bf16.mxu0 0
        %910 = vmatpush1.bf16.msra.mxu0 0
        %911 = vmatprep.subr.bf16.mxu0 0
        %912 = vmatpush1.bf16.msra.mxu0 0
        %913 = vmatprep.subr.bf16.mxu0 0
        %914 = vmatpush1.bf16.msra.mxu0 0
        %915 = vmatprep.subr.bf16.mxu0 0
        %916 = vmatpush1.bf16.msra.mxu0 0
        %917 = vmatprep.subr.bf16.mxu0 0
        %918 = vmatpush1.bf16.msra.mxu0 0
        %919 = vmatprep.subr.bf16.mxu0 0
        %920 = vmatpush1.bf16.msra.mxu0 0
        %921 = vmatprep.subr.bf16.mxu0 0
        %922 = vmatpush1.bf16.msra.mxu0 0
        %923 = vmatprep.subr.bf16.mxu0 0
        %924 = vmatpush1.bf16.msra.mxu0 0
        %925 = vmatprep.subr.bf16.mxu0 0
        %926 = vmatpush1.bf16.msra.mxu0 0
        %927 = vmatprep.subr.bf16.mxu0 0
        %928 = vmatpush1.bf16.msra.mxu0 0
        %929 = vmatprep.subr.bf16.mxu0 0
        %930 = vmatpush1.bf16.msra.mxu0 0
        %931 = vmatprep.subr.bf16.mxu0 0
        %932 = vmatpush1.bf16.msra.mxu0 0
        %933 = vmatprep.subr.bf16.mxu0 0
        %934 = vmatpush1.bf16.msra.mxu0 0
        %935 = vmatprep.subr.bf16.mxu0 0
        %936 = vmatpush1.bf16.msra.mxu0 0
        %937 = vmatprep.mubr.bf16.mxu0 0
        %938 = vmatmul.mubr.bf16.gmra.mrb[0].mxu0 %v903
        %v939 = vpop.f32.mrb[0].mxu0
        %v940 = vadd.f32 %v888, %v939
        %v941 = vpop.f32.mrb[0].mxu0
        %v942 = vpop.f32.mrb[0].mxu0
        %v943 = vpop.f32.mrb[0].mxu0
        %944 = vdwg.mxu0
        %v945 = vld [vmem:[#allocation8] sm:$0xf]
        %v946 = vld [vmem:[#allocation8 + $0x4] sm:$0xf]
        %v947 = vld [vmem:[#allocation8 + $0x8] sm:$0xf]
        %v948 = vld [vmem:[#allocation8 + $0xc] sm:$0xf]
        %v949 = vld [vmem:[#allocation10] sm:$0x1]
        %v951 = vlaneseq
        %v952 = vshrl.u32 %v951, 7
        %v953 = vsub.s32 0, %v952
        %v954 = vrot.slane %v949, %v953
        %v960 = vunpack.c.l.b16 %v945
        %v961 = vunpack.c.l.b16 %v946
        %v962 = vunpack.c.l.b16 %v947
        %v963 = vunpack.c.l.b16 %v948
        %v964 = vpack.c.b16 %v961, %v960
        %v965 = vpack.c.b16 %v963, %v962
        %968 = vmatprep.subr.bf16.mxu0 0
        %969 = vmatpush1.bf16.msra.mxu0 %v964
        %970 = vmatprep.subr.bf16.mxu0 0
        %971 = vmatpush1.bf16.msra.mxu0 %v965
        %972 = vmatprep.subr.bf16.mxu0 0
        %973 = vmatpush1.bf16.msra.mxu0 0
        %974 = vmatprep.subr.bf16.mxu0 0
        %975 = vmatpush1.bf16.msra.mxu0 0
        %976 = vmatprep.subr.bf16.mxu0 0
        %977 = vmatpush1.bf16.msra.mxu0 0
        %978 = vmatprep.subr.bf16.mxu0 0
        %979 = vmatpush1.bf16.msra.mxu0 0
        %980 = vmatprep.subr.bf16.mxu0 0
        %981 = vmatpush1.bf16.msra.mxu0 0
        %982 = vmatprep.subr.bf16.mxu0 0
        %983 = vmatpush1.bf16.msra.mxu0 0
        %984 = vmatprep.subr.bf16.mxu0 0
        %985 = vmatpush1.bf16.msra.mxu0 0
        %986 = vmatprep.subr.bf16.mxu0 0
        %987 = vmatpush1.bf16.msra.mxu0 0
        %988 = vmatprep.subr.bf16.mxu0 0
        %989 = vmatpush1.bf16.msra.mxu0 0
        %990 = vmatprep.subr.bf16.mxu0 0
        %991 = vmatpush1.bf16.msra.mxu0 0
        %992 = vmatprep.subr.bf16.mxu0 0
        %993 = vmatpush1.bf16.msra.mxu0 0
        %994 = vmatprep.subr.bf16.mxu0 0
        %995 = vmatpush1.bf16.msra.mxu0 0
        %996 = vmatprep.subr.bf16.mxu0 0
        %997 = vmatpush1.bf16.msra.mxu0 0
        %998 = vmatprep.subr.bf16.mxu0 0
        %999 = vmatpush1.bf16.msra.mxu0 0
        %1000 = vmatprep.mubr.bf16.mxu0 0
        %1001 = vmatmul.mubr.bf16.gmra.mrb[0].mxu0 %v903
        %v1002 = vpop.f32.mrb[0].mxu0
        %v1003 = vadd.f32 %v954, %v1002
        %v1004 = vpop.f32.mrb[0].mxu0
        %v1005 = vpop.f32.mrb[0].mxu0
        %v1006 = vpop.f32.mrb[0].mxu0
        %1007 = vdwg.mxu0
        %1009 = vrot.lane.b32.xlu0 %v874, 120
        %v1010 = vpop.permute.xlu0 %1009
        %1012 = vrot.lane.b32.xlu0 %v874, 112
        %v1013 = vpop.permute.xlu0 %1012
        %1015 = vrot.lane.b32.xlu0 %v874, 104
        %v1016 = vpop.permute.xlu0 %1015
        %v1018 = vpack.c.bf16 %v874, %v874
        %v1019 = vpack.c.bf16 %v1010, %v1010
        %v1020 = vpack.c.bf16 %v1013, %v1013
        %v1021 = vpack.c.bf16 %v1016, %v1016
        %1023 = vrot.lane.b32.xlu0 %v940, 120
        %v1024 = vpop.permute.xlu0 %1023
        %1026 = vrot.lane.b32.xlu0 %v940, 112
        %v1027 = vpop.permute.xlu0 %1026
        %1029 = vrot.lane.b32.xlu0 %v940, 104
        %v1030 = vpop.permute.xlu0 %1029
        %v1032 = vpack.c.bf16 %v940, %v940
        %v1033 = vpack.c.bf16 %v1024, %v1024
        %v1034 = vpack.c.bf16 %v1027, %v1027
        %v1035 = vpack.c.bf16 %v1030, %v1030
        %1037 = vrot.lane.b32.xlu0 %v1003, 120
        %v1038 = vpop.permute.xlu0 %1037
        %1040 = vrot.lane.b32.xlu0 %v1003, 112
        %v1041 = vpop.permute.xlu0 %1040
        %1043 = vrot.lane.b32.xlu0 %v1003, 104
        %v1044 = vpop.permute.xlu0 %1043
        %v1046 = vpack.c.bf16 %v1003, %v1003
        %v1047 = vpack.c.bf16 %v1038, %v1038
        %v1048 = vpack.c.bf16 %v1041, %v1041
        %v1049 = vpack.c.bf16 %v1044, %v1044
        %vm1050 = vcmask 64512
        %v1052 = vsel %vm1050, %v1018, 0
        %v1055 = vsel %vm1050, %v1032, 0
        %1057 = vmatprep.subr.bf16.mxu0 0
        %1058 = vmatpush1.bf16.xpose.msra.mxu0 %v1055
        %1059 = vmatprep.subr.bf16.mxu0 0
        %1060 = vmatpush1.bf16.xpose.msra.mxu0 0
        %1061 = vmatprep.subr.bf16.mxu0 0
        %1062 = vmatpush1.bf16.xpose.msra.mxu0 0
        %1063 = vmatprep.subr.bf16.mxu0 0
        %1064 = vmatpush1.bf16.xpose.msra.mxu0 0
        %1065 = vmatprep.subr.bf16.mxu0 0
        %1066 = vmatpush1.bf16.xpose.msra.mxu0 0
        %1067 = vmatprep.subr.bf16.mxu0 0
        %1068 = vmatpush1.bf16.xpose.msra.mxu0 0
        %1069 = vmatprep.subr.bf16.mxu0 0
        %1070 = vmatpush1.bf16.xpose.msra.mxu0 0
        %1071 = vmatprep.subr.bf16.mxu0 0
        %1072 = vmatpush1.bf16.xpose.msra.mxu0 0
        %1073 = vmatprep.subr.bf16.mxu0 0
        %1074 = vmatpush1.bf16.xpose.msra.mxu0 0
        %1075 = vmatprep.subr.bf16.mxu0 0
        %1076 = vmatpush1.bf16.xpose.msra.mxu0 0
        %1077 = vmatprep.subr.bf16.mxu0 0
        %1078 = vmatpush1.bf16.xpose.msra.mxu0 0
        %1079 = vmatprep.subr.bf16.mxu0 0
        %1080 = vmatpush1.bf16.xpose.msra.mxu0 0
        %1081 = vmatprep.subr.bf16.mxu0 0
        %1082 = vmatpush1.bf16.xpose.msra.mxu0 0
        %1083 = vmatprep.subr.bf16.mxu0 0
        %1084 = vmatpush1.bf16.xpose.msra.mxu0 0
        %1085 = vmatprep.subr.bf16.mxu0 0
        %1086 = vmatpush1.bf16.xpose.msra.mxu0 0
        %1087 = vmatprep.subr.bf16.mxu0 0
        %1088 = vmatpush1.bf16.xpose.msra.mxu0 0
        %1089 = vmatprep.mubr.bf16.mxu0 0
        %1090 = vmatmul.mubr.bf16.gmra.mrb[0].mxu0 %v1052
        %v1091 = vpop.f32.mrb[0].mxu0
        %v1092 = vadd.f32 0.0, %v1091
        %v1093 = vpop.f32.mrb[0].mxu0
        %v1094 = vpop.f32.mrb[0].mxu0
        %v1095 = vpop.f32.mrb[0].mxu0
        %1096 = vdwg.mxu0
        %v1098 = vsel %vm1050, %v1019, 0
        %v1101 = vsel %vm1050, %v1033, 0
        %1103 = vmatprep.subr.bf16.mxu0 0
        %1104 = vmatpush1.bf16.xpose.msra.mxu0 %v1101
        %1105 = vmatprep.subr.bf16.mxu0 0
        %1106 = vmatpush1.bf16.xpose.msra.mxu0 0
        %1107 = vmatprep.subr.bf16.mxu0 0
        %1108 = vmatpush1.bf16.xpose.msra.mxu0 0
        %1109 = vmatprep.subr.bf16.mxu0 0
        %1110 = vmatpush1.bf16.xpose.msra.mxu0 0
        %1111 = vmatprep.subr.bf16.mxu0 0
        %1112 = vmatpush1.bf16.xpose.msra.mxu0 0
        %1113 = vmatprep.subr.bf16.mxu0 0
        %1114 = vmatpush1.bf16.xpose.msra.mxu0 0
        %1115 = vmatprep.subr.bf16.mxu0 0
        %1116 = vmatpush1.bf16.xpose.msra.mxu0 0
        %1117 = vmatprep.subr.bf16.mxu0 0
        %1118 = vmatpush1.bf16.xpose.msra.mxu0 0
        %1119 = vmatprep.subr.bf16.mxu0 0
        %1120 = vmatpush1.bf16.xpose.msra.mxu0 0
        %1121 = vmatprep.subr.bf16.mxu0 0
        %1122 = vmatpush1.bf16.xpose.msra.mxu0 0
        %1123 = vmatprep.subr.bf16.mxu0 0
        %1124 = vmatpush1.bf16.xpose.msra.mxu0 0
        %1125 = vmatprep.subr.bf16.mxu0 0
        %1126 = vmatpush1.bf16.xpose.msra.mxu0 0
        %1127 = vmatprep.subr.bf16.mxu0 0
        %1128 = vmatpush1.bf16.xpose.msra.mxu0 0
        %1129 = vmatprep.subr.bf16.mxu0 0
        %1130 = vmatpush1.bf16.xpose.msra.mxu0 0
        %1131 = vmatprep.subr.bf16.mxu0 0
        %1132 = vmatpush1.bf16.xpose.msra.mxu0 0
        %1133 = vmatprep.subr.bf16.mxu0 0
        %1134 = vmatpush1.bf16.xpose.msra.mxu0 0
        %1135 = vmatprep.mubr.bf16.mxu0 0
        %1136 = vmatmul.mubr.bf16.gmra.mrb[0].mxu0 %v1098
        %v1137 = vpop.f32.mrb[0].mxu0
        %v1138 = vadd.f32 0.0, %v1137
        %v1139 = vpop.f32.mrb[0].mxu0
        %v1140 = vpop.f32.mrb[0].mxu0
        %v1141 = vpop.f32.mrb[0].mxu0
        %1142 = vdwg.mxu0
        %v1144 = vsel %vm1050, %v1020, 0
        %v1147 = vsel %vm1050, %v1034, 0
        %1149 = vmatprep.subr.bf16.mxu0 0
        %1150 = vmatpush1.bf16.xpose.msra.mxu0 %v1147
        %1151 = vmatprep.subr.bf16.mxu0 0
        %1152 = vmatpush1.bf16.xpose.msra.mxu0 0
        %1153 = vmatprep.subr.bf16.mxu0 0
        %1154 = vmatpush1.bf16.xpose.msra.mxu0 0
        %1155 = vmatprep.subr.bf16.mxu0 0
        %1156 = vmatpush1.bf16.xpose.msra.mxu0 0
        %1157 = vmatprep.subr.bf16.mxu0 0
        %1158 = vmatpush1.bf16.xpose.msra.mxu0 0
        %1159 = vmatprep.subr.bf16.mxu0 0
        %1160 = vmatpush1.bf16.xpose.msra.mxu0 0
        %1161 = vmatprep.subr.bf16.mxu0 0
        %1162 = vmatpush1.bf16.xpose.msra.mxu0 0
        %1163 = vmatprep.subr.bf16.mxu0 0
        %1164 = vmatpush1.bf16.xpose.msra.mxu0 0
        %1165 = vmatprep.subr.bf16.mxu0 0
        %1166 = vmatpush1.bf16.xpose.msra.mxu0 0
        %1167 = vmatprep.subr.bf16.mxu0 0
        %1168 = vmatpush1.bf16.xpose.msra.mxu0 0
        %1169 = vmatprep.subr.bf16.mxu0 0
        %1170 = vmatpush1.bf16.xpose.msra.mxu0 0
        %1171 = vmatprep.subr.bf16.mxu0 0
        %1172 = vmatpush1.bf16.xpose.msra.mxu0 0
        %1173 = vmatprep.subr.bf16.mxu0 0
        %1174 = vmatpush1.bf16.xpose.msra.mxu0 0
        %1175 = vmatprep.subr.bf16.mxu0 0
        %1176 = vmatpush1.bf16.xpose.msra.mxu0 0
        %1177 = vmatprep.subr.bf16.mxu0 0
        %1178 = vmatpush1.bf16.xpose.msra.mxu0 0
        %1179 = vmatprep.subr.bf16.mxu0 0
        %1180 = vmatpush1.bf16.xpose.msra.mxu0 0
        %1181 = vmatprep.mubr.bf16.mxu0 0
        %1182 = vmatmul.mubr.bf16.gmra.mrb[0].mxu0 %v1144
        %v1183 = vpop.f32.mrb[0].mxu0
        %v1184 = vadd.f32 0.0, %v1183
        %v1185 = vpop.f32.mrb[0].mxu0
        %v1186 = vpop.f32.mrb[0].mxu0
        %v1187 = vpop.f32.mrb[0].mxu0
        %1188 = vdwg.mxu0
        %v1190 = vsel %vm1050, %v1021, 0
        %v1193 = vsel %vm1050, %v1035, 0
        %1195 = vmatprep.subr.bf16.mxu0 0
        %1196 = vmatpush1.bf16.xpose.msra.mxu0 %v1193
        %1197 = vmatprep.subr.bf16.mxu0 0
        %1198 = vmatpush1.bf16.xpose.msra.mxu0 0
        %1199 = vmatprep.subr.bf16.mxu0 0
        %1200 = vmatpush1.bf16.xpose.msra.mxu0 0
        %1201 = vmatprep.subr.bf16.mxu0 0
        %1202 = vmatpush1.bf16.xpose.msra.mxu0 0
        %1203 = vmatprep.subr.bf16.mxu0 0
        %1204 = vmatpush1.bf16.xpose.msra.mxu0 0
        %1205 = vmatprep.subr.bf16.mxu0 0
        %1206 = vmatpush1.bf16.xpose.msra.mxu0 0
        %1207 = vmatprep.subr.bf16.mxu0 0
        %1208 = vmatpush1.bf16.xpose.msra.mxu0 0
        %1209 = vmatprep.subr.bf16.mxu0 0
        %1210 = vmatpush1.bf16.xpose.msra.mxu0 0
        %1211 = vmatprep.subr.bf16.mxu0 0
        %1212 = vmatpush1.bf16.xpose.msra.mxu0 0
        %1213 = vmatprep.subr.bf16.mxu0 0
        %1214 = vmatpush1.bf16.xpose.msra.mxu0 0
        %1215 = vmatprep.subr.bf16.mxu0 0
        %1216 = vmatpush1.bf16.xpose.msra.mxu0 0
        %1217 = vmatprep.subr.bf16.mxu0 0
        %1218 = vmatpush1.bf16.xpose.msra.mxu0 0
        %1219 = vmatprep.subr.bf16.mxu0 0
        %1220 = vmatpush1.bf16.xpose.msra.mxu0 0
        %1221 = vmatprep.subr.bf16.mxu0 0
        %1222 = vmatpush1.bf16.xpose.msra.mxu0 0
        %1223 = vmatprep.subr.bf16.mxu0 0
        %1224 = vmatpush1.bf16.xpose.msra.mxu0 0
        %1225 = vmatprep.subr.bf16.mxu0 0
        %1226 = vmatpush1.bf16.xpose.msra.mxu0 0
        %1227 = vmatprep.mubr.bf16.mxu0 0
        %1228 = vmatmul.mubr.bf16.gmra.mrb[0].mxu0 %v1190
        %v1229 = vpop.f32.mrb[0].mxu0
        %v1230 = vadd.f32 0.0, %v1229
        %v1231 = vpop.f32.mrb[0].mxu0
        %v1232 = vpop.f32.mrb[0].mxu0
        %v1233 = vpop.f32.mrb[0].mxu0
        %1234 = vdwg.mxu0
        %v1235 = vmul.f32 %v1092, 0.35355338
        %v1236 = vmul.f32 %v1138, 0.35355338
        %v1237 = vmul.f32 %v1184, 0.35355338
        %v1238 = vmul.f32 %v1230, 0.35355338
        %v1240 = vlaneseq
        %v1241 = vshrl.u32 %v1240, 7
        %v1242 = vsub.s32 0, %v1241
        %v1243 = vrot.slane %v811, %v1242
        %v1245 = vadd.f32 %v1235, %v1243
        %v1246 = vadd.f32 %v1236, %v1243
        %v1247 = vadd.f32 %v1237, %v1243
        %v1248 = vadd.f32 %v1238, %v1243
        %1249 = vst.msk [vmem:[%s794] sm:$0xff] %vm1050, %v1245
        %1250 = vst.msk [vmem:[%s794 + $0x8] sm:$0xff] %vm1050, %v1246
        %1251 = vst.msk [vmem:[%s794 + $0x10] sm:$0xff] %vm1050, %v1247
        %1252 = vst.msk [vmem:[%s794 + $0x18] sm:$0xff] %vm1050, %v1248
        %v1253 = vsel %vm1050, %v1245, -inf
        %1254 = vmax.xlane.f32.xlu0 %v1253
        %v1255 = vpop.xlane.xlu0 %1254
        %v1256 = vsel %vm1050, %v1246, -inf
        %1257 = vmax.xlane.f32.xlu0 %v1256
        %v1258 = vpop.xlane.xlu0 %1257
        %v1259 = vsel %vm1050, %v1247, -inf
        %1260 = vmax.xlane.f32.xlu0 %v1259
        %v1261 = vpop.xlane.xlu0 %1260
        %v1262 = vsel %vm1050, %v1248, -inf
        %1263 = vmax.xlane.f32.xlu0 %v1262
        %v1264 = vpop.xlane.xlu0 %1263
        %v1265 = vsub.f32 %v1245, %v1255
        %v1266 = vsub.f32 %v1246, %v1258
        %v1267 = vsub.f32 %v1247, %v1261
        %v1268 = vsub.f32 %v1248, %v1264
        %v1269 = vmul.f32 %v1265, 1.442695
        %v1270 = vpow.pop %v1269
        %v1271 = vmul.f32 %v1266, 1.442695
        %v1272 = vpow.pop %v1271
        %v1273 = vmul.f32 %v1267, 1.442695
        %v1274 = vpow.pop %v1273
        %v1275 = vmul.f32 %v1268, 1.442695
        %v1276 = vpow.pop %v1275
        %v1277 = vsel %vm1050, %v1270, 0.0
        %1278 = vadd.xlane.f32.xlu0 %v1277
        %v1279 = vpop.xlane.xlu0 %1278
        %v1280 = vsel %vm1050, %v1272, 0.0
        %1281 = vadd.xlane.f32.xlu0 %v1280
        %v1282 = vpop.xlane.xlu0 %1281
        %v1283 = vsel %vm1050, %v1274, 0.0
        %1284 = vadd.xlane.f32.xlu0 %v1283
        %v1285 = vpop.xlane.xlu0 %1284
        %v1286 = vsel %vm1050, %v1276, 0.0
        %1287 = vadd.xlane.f32.xlu0 %v1286
        %v1288 = vpop.xlane.xlu0 %1287
        %v1289 = vrcp.pop %v1279
        %v1290 = vrcp.pop %v1282
        %v1291 = vrcp.pop %v1285
        %v1292 = vrcp.pop %v1288
        %v1293 = vmul.f32 %v1270, %v1289
        %v1294 = vmul.f32 %v1272, %v1290
        %v1295 = vmul.f32 %v1274, %v1291
        %v1296 = vmul.f32 %v1276, %v1292
        %v1297 = vpack.c.bf16 %v1293, %v1293
        %v1298 = vpack.c.bf16 %v1294, %v1294
        %v1299 = vpack.c.bf16 %v1295, %v1295
        %v1300 = vpack.c.bf16 %v1296, %v1296
        %v1302 = vsel %vm1050, %v1297, 0
        %vm1304 = vcmask 1043456
        %v1306 = vsel %vm1304, %v1046, 0
        %1308 = vmatprep.subr.bf16.mxu0 0
        %1309 = vmatpush1.bf16.msra.mxu0 %v1306
        %1310 = vmatprep.subr.bf16.mxu0 0
        %1311 = vmatpush1.bf16.msra.mxu0 0
        %1312 = vmatprep.subr.bf16.mxu0 0
        %1313 = vmatpush1.bf16.msra.mxu0 0
        %1314 = vmatprep.subr.bf16.mxu0 0
        %1315 = vmatpush1.bf16.msra.mxu0 0
        %1316 = vmatprep.subr.bf16.mxu0 0
        %1317 = vmatpush1.bf16.msra.mxu0 0
        %1318 = vmatprep.subr.bf16.mxu0 0
        %1319 = vmatpush1.bf16.msra.mxu0 0
        %1320 = vmatprep.subr.bf16.mxu0 0
        %1321 = vmatpush1.bf16.msra.mxu0 0
        %1322 = vmatprep.subr.bf16.mxu0 0
        %1323 = vmatpush1.bf16.msra.mxu0 0
        %1324 = vmatprep.subr.bf16.mxu0 0
        %1325 = vmatpush1.bf16.msra.mxu0 0
        %1326 = vmatprep.subr.bf16.mxu0 0
        %1327 = vmatpush1.bf16.msra.mxu0 0
        %1328 = vmatprep.subr.bf16.mxu0 0
        %1329 = vmatpush1.bf16.msra.mxu0 0
        %1330 = vmatprep.subr.bf16.mxu0 0
        %1331 = vmatpush1.bf16.msra.mxu0 0
        %1332 = vmatprep.subr.bf16.mxu0 0
        %1333 = vmatpush1.bf16.msra.mxu0 0
        %1334 = vmatprep.subr.bf16.mxu0 0
        %1335 = vmatpush1.bf16.msra.mxu0 0
        %1336 = vmatprep.subr.bf16.mxu0 0
        %1337 = vmatpush1.bf16.msra.mxu0 0
        %1338 = vmatprep.subr.bf16.mxu0 0
        %1339 = vmatpush1.bf16.msra.mxu0 0
        %1340 = vmatprep.mubr.bf16.mxu0 0
        %1341 = vmatmul.mubr.bf16.gmra.mrb[0].mxu0 %v1302
        %v1342 = vpop.f32.mrb[0].mxu0
        %v1343 = vadd.f32 0.0, %v1342
        %v1344 = vpop.f32.mrb[0].mxu0
        %v1345 = vpop.f32.mrb[0].mxu0
        %v1346 = vpop.f32.mrb[0].mxu0
        %1347 = vdwg.mxu0
        %v1349 = vsel %vm1050, %v1298, 0
        %v1352 = vsel %vm1304, %v1047, 0
        %1354 = vmatprep.subr.bf16.mxu0 0
        %1355 = vmatpush1.bf16.msra.mxu0 %v1352
        %1356 = vmatprep.subr.bf16.mxu0 0
        %1357 = vmatpush1.bf16.msra.mxu0 0
        %1358 = vmatprep.subr.bf16.mxu0 0
        %1359 = vmatpush1.bf16.msra.mxu0 0
        %1360 = vmatprep.subr.bf16.mxu0 0
        %1361 = vmatpush1.bf16.msra.mxu0 0
        %1362 = vmatprep.subr.bf16.mxu0 0
        %1363 = vmatpush1.bf16.msra.mxu0 0
        %1364 = vmatprep.subr.bf16.mxu0 0
        %1365 = vmatpush1.bf16.msra.mxu0 0
        %1366 = vmatprep.subr.bf16.mxu0 0
        %1367 = vmatpush1.bf16.msra.mxu0 0
        %1368 = vmatprep.subr.bf16.mxu0 0
        %1369 = vmatpush1.bf16.msra.mxu0 0
        %1370 = vmatprep.subr.bf16.mxu0 0
        %1371 = vmatpush1.bf16.msra.mxu0 0
        %1372 = vmatprep.subr.bf16.mxu0 0
        %1373 = vmatpush1.bf16.msra.mxu0 0
        %1374 = vmatprep.subr.bf16.mxu0 0
        %1375 = vmatpush1.bf16.msra.mxu0 0
        %1376 = vmatprep.subr.bf16.mxu0 0
        %1377 = vmatpush1.bf16.msra.mxu0 0
        %1378 = vmatprep.subr.bf16.mxu0 0
        %1379 = vmatpush1.bf16.msra.mxu0 0
        %1380 = vmatprep.subr.bf16.mxu0 0
        %1381 = vmatpush1.bf16.msra.mxu0 0
        %1382 = vmatprep.subr.bf16.mxu0 0
        %1383 = vmatpush1.bf16.msra.mxu0 0
        %1384 = vmatprep.subr.bf16.mxu0 0
        %1385 = vmatpush1.bf16.msra.mxu0 0
        %1386 = vmatprep.mubr.bf16.mxu0 0
        %1387 = vmatmul.mubr.bf16.gmra.mrb[0].mxu0 %v1349
        %v1388 = vpop.f32.mrb[0].mxu0
        %v1389 = vadd.f32 0.0, %v1388
        %v1390 = vpop.f32.mrb[0].mxu0
        %v1391 = vpop.f32.mrb[0].mxu0
        %v1392 = vpop.f32.mrb[0].mxu0
        %1393 = vdwg.mxu0
        %v1395 = vsel %vm1050, %v1299, 0
        %v1398 = vsel %vm1304, %v1048, 0
        %1400 = vmatprep.subr.bf16.mxu0 0
        %1401 = vmatpush1.bf16.msra.mxu0 %v1398
        %1402 = vmatprep.subr.bf16.mxu0 0
        %1403 = vmatpush1.bf16.msra.mxu0 0
        %1404 = vmatprep.subr.bf16.mxu0 0
        %1405 = vmatpush1.bf16.msra.mxu0 0
        %1406 = vmatprep.subr.bf16.mxu0 0
        %1407 = vmatpush1.bf16.msra.mxu0 0
        %1408 = vmatprep.subr.bf16.mxu0 0
        %1409 = vmatpush1.bf16.msra.mxu0 0
        %1410 = vmatprep.subr.bf16.mxu0 0
        %1411 = vmatpush1.bf16.msra.mxu0 0
        %1412 = vmatprep.subr.bf16.mxu0 0
        %1413 = vmatpush1.bf16.msra.mxu0 0
        %1414 = vmatprep.subr.bf16.mxu0 0
        %1415 = vmatpush1.bf16.msra.mxu0 0
        %1416 = vmatprep.subr.bf16.mxu0 0
        %1417 = vmatpush1.bf16.msra.mxu0 0
        %1418 = vmatprep.subr.bf16.mxu0 0
        %1419 = vmatpush1.bf16.msra.mxu0 0
        %1420 = vmatprep.subr.bf16.mxu0 0
        %1421 = vmatpush1.bf16.msra.mxu0 0
        %1422 = vmatprep.subr.bf16.mxu0 0
        %1423 = vmatpush1.bf16.msra.mxu0 0
        %1424 = vmatprep.subr.bf16.mxu0 0
        %1425 = vmatpush1.bf16.msra.mxu0 0
        %1426 = vmatprep.subr.bf16.mxu0 0
        %1427 = vmatpush1.bf16.msra.mxu0 0
        %1428 = vmatprep.subr.bf16.mxu0 0
        %1429 = vmatpush1.bf16.msra.mxu0 0
        %1430 = vmatprep.subr.bf16.mxu0 0
        %1431 = vmatpush1.bf16.msra.mxu0 0
        %1432 = vmatprep.mubr.bf16.mxu0 0
        %1433 = vmatmul.mubr.bf16.gmra.mrb[0].mxu0 %v1395
        %v1434 = vpop.f32.mrb[0].mxu0
        %v1435 = vadd.f32 0.0, %v1434
        %v1436 = vpop.f32.mrb[0].mxu0
        %v1437 = vpop.f32.mrb[0].mxu0
        %v1438 = vpop.f32.mrb[0].mxu0
        %1439 = vdwg.mxu0
        %v1441 = vsel %vm1050, %v1300, 0
        %v1444 = vsel %vm1304, %v1049, 0
        %1446 = vmatprep.subr.bf16.mxu0 0
        %1447 = vmatpush1.bf16.msra.mxu0 %v1444
        %1448 = vmatprep.subr.bf16.mxu0 0
        %1449 = vmatpush1.bf16.msra.mxu0 0
        %1450 = vmatprep.subr.bf16.mxu0 0
        %1451 = vmatpush1.bf16.msra.mxu0 0
        %1452 = vmatprep.subr.bf16.mxu0 0
        %1453 = vmatpush1.bf16.msra.mxu0 0
        %1454 = vmatprep.subr.bf16.mxu0 0
        %1455 = vmatpush1.bf16.msra.mxu0 0
        %1456 = vmatprep.subr.bf16.mxu0 0
        %1457 = vmatpush1.bf16.msra.mxu0 0
        %1458 = vmatprep.subr.bf16.mxu0 0
        %1459 = vmatpush1.bf16.msra.mxu0 0
        %1460 = vmatprep.subr.bf16.mxu0 0
        %1461 = vmatpush1.bf16.msra.mxu0 0
        %1462 = vmatprep.subr.bf16.mxu0 0
        %1463 = vmatpush1.bf16.msra.mxu0 0
        %1464 = vmatprep.subr.bf16.mxu0 0
        %1465 = vmatpush1.bf16.msra.mxu0 0
        %1466 = vmatprep.subr.bf16.mxu0 0
        %1467 = vmatpush1.bf16.msra.mxu0 0
        %1468 = vmatprep.subr.bf16.mxu0 0
        %1469 = vmatpush1.bf16.msra.mxu0 0
        %1470 = vmatprep.subr.bf16.mxu0 0
        %1471 = vmatpush1.bf16.msra.mxu0 0
        %1472 = vmatprep.subr.bf16.mxu0 0
        %1473 = vmatpush1.bf16.msra.mxu0 0
        %1474 = vmatprep.subr.bf16.mxu0 0
        %1475 = vmatpush1.bf16.msra.mxu0 0
        %1476 = vmatprep.subr.bf16.mxu0 0
        %1477 = vmatpush1.bf16.msra.mxu0 0
        %1478 = vmatprep.mubr.bf16.mxu0 0
        %1479 = vmatmul.mubr.bf16.gmra.mrb[0].mxu0 %v1441
        %v1480 = vpop.f32.mrb[0].mxu0
        %v1481 = vadd.f32 0.0, %v1480
        %v1482 = vpop.f32.mrb[0].mxu0
        %v1483 = vpop.f32.mrb[0].mxu0
        %v1484 = vpop.f32.mrb[0].mxu0
        %1485 = vdwg.mxu0
        %1487 = vrot.lane.b32.xlu0 %v1389, 8
        %v1488 = vpop.permute.xlu0 %1487
        %1491 = vrot.lane.b32.xlu0 %v1435, 16
        %v1492 = vpop.permute.xlu0 %1491
        %1495 = vrot.lane.b32.xlu0 %v1481, 24
        %v1496 = vpop.permute.xlu0 %1495
        %v1498 = vsel %vm1050, %v1343, %v1488
        %vm1499 = vcmask 130048
        %v1500 = vsel %vm1499, %v1498, %v1492
        %vm1501 = vcmask 195584
        %v1502 = vsel %vm1501, %v1500, %v1496
        %v1503 = vpack.c.bf16 %v1502, %v1502
        %v1504 = vld [vmem:[%s9] sm:$0xf]
        %v1505 = vld [vmem:[%s9 + $0x4] sm:$0xf]
        %v1506 = vld [vmem:[%s9 + $0x8] sm:$0xf]
        %v1507 = vld [vmem:[%s9 + $0xc] sm:$0xf]
        %v1508 = vld [vmem:[#allocation11] sm:$0x1]
        %v1510 = vlaneseq
        %v1511 = vshrl.u32 %v1510, 7
        %v1512 = vsub.s32 0, %v1511
        %v1513 = vrot.slane %v1508, %v1512
        %v1519 = vunpack.c.l.b16 %v1504
        %v1520 = vunpack.c.l.b16 %v1505
        %v1521 = vunpack.c.l.b16 %v1506
        %v1522 = vunpack.c.l.b16 %v1507
        %v1523 = vpack.c.b16 %v1520, %v1519
        %v1524 = vpack.c.b16 %v1522, %v1521
        %v1528 = vsel %vm835, %v1503, 0
        %1530 = vmatprep.subr.bf16.mxu0 0
        %1531 = vmatpush1.bf16.msra.mxu0 %v1523
        %1532 = vmatprep.subr.bf16.mxu0 0
        %1533 = vmatpush1.bf16.msra.mxu0 %v1524
        %1534 = vmatprep.subr.bf16.mxu0 0
        %1535 = vmatpush1.bf16.msra.mxu0 0
        %1536 = vmatprep.subr.bf16.mxu0 0
        %1537 = vmatpush1.bf16.msra.mxu0 0
        %1538 = vmatprep.subr.bf16.mxu0 0
        %1539 = vmatpush1.bf16.msra.mxu0 0
        %1540 = vmatprep.subr.bf16.mxu0 0
        %1541 = vmatpush1.bf16.msra.mxu0 0
        %1542 = vmatprep.subr.bf16.mxu0 0
        %1543 = vmatpush1.bf16.msra.mxu0 0
        %1544 = vmatprep.subr.bf16.mxu0 0
        %1545 = vmatpush1.bf16.msra.mxu0 0
        %1546 = vmatprep.subr.bf16.mxu0 0
        %1547 = vmatpush1.bf16.msra.mxu0 0
        %1548 = vmatprep.subr.bf16.mxu0 0
        %1549 = vmatpush1.bf16.msra.mxu0 0
        %1550 = vmatprep.subr.bf16.mxu0 0
        %1551 = vmatpush1.bf16.msra.mxu0 0
        %1552 = vmatprep.subr.bf16.mxu0 0
        %1553 = vmatpush1.bf16.msra.mxu0 0
        %1554 = vmatprep.subr.bf16.mxu0 0
        %1555 = vmatpush1.bf16.msra.mxu0 0
        %1556 = vmatprep.subr.bf16.mxu0 0
        %1557 = vmatpush1.bf16.msra.mxu0 0
        %1558 = vmatprep.subr.bf16.mxu0 0
        %1559 = vmatpush1.bf16.msra.mxu0 0
        %1560 = vmatprep.subr.bf16.mxu0 0
        %1561 = vmatpush1.bf16.msra.mxu0 0
        %1562 = vmatprep.mubr.bf16.mxu0 0
        %1563 = vmatmul.mubr.bf16.gmra.mrb[0].mxu0 %v1528
        %v1564 = vpop.f32.mrb[0].mxu0
        %v1565 = vadd.f32 %v1513, %v1564
        %v1566 = vpop.f32.mrb[0].mxu0
        %v1567 = vpop.f32.mrb[0].mxu0
        %v1568 = vpop.f32.mrb[0].mxu0
        %1569 = vdwg.mxu0
        %v1570 = vadd.f32 %v1565, %v807
        %v1571 = vld [vmem:[#allocation13] sm:$0x1]
        %v1572 = vld [vmem:[#allocation14] sm:$0x1]
        %v1573 = vsel %vm835, %v1570, 0.0
        %1574 = vadd.xlane.f32.xlu0 %v1573
        %v1575 = vpop.xlane.xlu0 %1574
        %v1576 = vrcp.pop 32.0
        %v1577 = vmul.f32 %v1575, %v1576
        %v1578 = vsub.f32 %v1570, %v1577
        %v1579 = vmul.f32 %v1578, %v1578
        %v1580 = vsel %vm835, %v1579, 0.0
        %1581 = vadd.xlane.f32.xlu0 %v1580
        %v1582 = vpop.xlane.xlu0 %1581
        %v1583 = vmul.f32 %v1582, %v1576
        %v1584 = vadd.f32 %v1583, 1e-12
        %v1585 = vrsqrt.pop %v1584
        %v1586 = vmul.f32 %v1578, %v1585
        %v1588 = vlaneseq
        %v1589 = vshrl.u32 %v1588, 7
        %v1590 = vsub.s32 0, %v1589
        %v1591 = vrot.slane %v1571, %v1590
        %v1593 = vmul.f32 %v1586, %v1591
        %v1595 = vlaneseq
        %v1596 = vshrl.u32 %v1595, 7
        %v1597 = vsub.s32 0, %v1596
        %v1598 = vrot.slane %v1572, %v1597
        %v1600 = vadd.f32 %v1593, %v1598
        %v1601 = vpack.c.bf16 %v1600, %v1600
        %v1602 = vld [vmem:[%s13] sm:$0xf]
        %v1603 = vld [vmem:[%s13 + $0x4] sm:$0xf]
        %v1604 = vld [vmem:[%s13 + $0x8] sm:$0xf]
        %v1605 = vld [vmem:[%s13 + $0xc] sm:$0xf]
        %v1606 = vld [vmem:[%s14] sm:$0x1]
        %v1608 = vlaneseq
        %v1609 = vshrl.u32 %v1608, 7
        %v1610 = vsub.s32 0, %v1609
        %v1611 = vrot.slane %v1606, %v1610
        %v1617 = vunpack.c.l.b16 %v1602
        %v1618 = vunpack.c.l.b16 %v1603
        %v1619 = vunpack.c.l.b16 %v1604
        %v1620 = vunpack.c.l.b16 %v1605
        %v1621 = vpack.c.b16 %v1618, %v1617
        %v1622 = vpack.c.b16 %v1620, %v1619
        %v1626 = vsel %vm835, %v1601, 0
        %1628 = vmatprep.subr.bf16.mxu0 0
        %1629 = vmatpush1.bf16.msra.mxu0 %v1621
        %1630 = vmatprep.subr.bf16.mxu0 0
        %1631 = vmatpush1.bf16.msra.mxu0 %v1622
        %1632 = vmatprep.subr.bf16.mxu0 0
        %1633 = vmatpush1.bf16.msra.mxu0 0
        %1634 = vmatprep.subr.bf16.mxu0 0
        %1635 = vmatpush1.bf16.msra.mxu0 0
        %1636 = vmatprep.subr.bf16.mxu0 0
        %1637 = vmatpush1.bf16.msra.mxu0 0
        %1638 = vmatprep.subr.bf16.mxu0 0
        %1639 = vmatpush1.bf16.msra.mxu0 0
        %1640 = vmatprep.subr.bf16.mxu0 0
        %1641 = vmatpush1.bf16.msra.mxu0 0
        %1642 = vmatprep.subr.bf16.mxu0 0
        %1643 = vmatpush1.bf16.msra.mxu0 0
        %1644 = vmatprep.subr.bf16.mxu0 0
        %1645 = vmatpush1.bf16.msra.mxu0 0
        %1646 = vmatprep.subr.bf16.mxu0 0
        %1647 = vmatpush1.bf16.msra.mxu0 0
        %1648 = vmatprep.subr.bf16.mxu0 0
        %1649 = vmatpush1.bf16.msra.mxu0 0
        %1650 = vmatprep.subr.bf16.mxu0 0
        %1651 = vmatpush1.bf16.msra.mxu0 0
        %1652 = vmatprep.subr.bf16.mxu0 0
        %1653 = vmatpush1.bf16.msra.mxu0 0
        %1654 = vmatprep.subr.bf16.mxu0 0
        %1655 = vmatpush1.bf16.msra.mxu0 0
        %1656 = vmatprep.subr.bf16.mxu0 0
        %1657 = vmatpush1.bf16.msra.mxu0 0
        %1658 = vmatprep.subr.bf16.mxu0 0
        %1659 = vmatpush1.bf16.msra.mxu0 0
        %1660 = vmatprep.mubr.bf16.mxu0 0
        %1661 = vmatmul.mubr.bf16.gmra.mrb[0].mxu0 %v1626
        %v1662 = vpop.f32.mrb[0].mxu0
        %v1663 = vadd.f32 %v1611, %v1662
        %v1664 = vpop.f32.mrb[0].mxu0
        %v1665 = vpop.f32.mrb[0].mxu0
        %v1666 = vpop.f32.mrb[0].mxu0
        %1667 = vdwg.mxu0
        %v1668 = vmul.f32 %v1663, 0.5
        %v1669 = vrcp.pop 1.4142135
        %v1670 = vmul.f32 %v1663, %v1669
        %v1671 = verf.f32.pop %v1670
        %v1672 = vadd.f32 %v1671, 1.0
        %v1673 = vmul.f32 %v1668, %v1672
        %v1674 = vpack.c.bf16 %v1673, %v1673
        %v1675 = vld [vmem:[%s15] sm:$0xf]
        %v1676 = vld [vmem:[%s15 + $0x4] sm:$0xf]
        %v1677 = vld [vmem:[%s15 + $0x8] sm:$0xf]
        %v1678 = vld [vmem:[%s15 + $0xc] sm:$0xf]
        %v1679 = vld [vmem:[%s15 + $0x10] sm:$0xf]
        %v1680 = vld [vmem:[%s15 + $0x14] sm:$0xf]
        %v1681 = vld [vmem:[%s15 + $0x18] sm:$0xf]
        %v1682 = vld [vmem:[%s15 + $0x1c] sm:$0xf]
        %v1683 = vld [vmem:[%s16] sm:$0x1]
        %v1685 = vlaneseq
        %v1686 = vshrl.u32 %v1685, 7
        %v1687 = vsub.s32 0, %v1686
        %v1688 = vrot.slane %v1683, %v1687
        %v1698 = vunpack.c.l.b16 %v1675
        %v1699 = vunpack.c.l.b16 %v1676
        %v1700 = vunpack.c.l.b16 %v1677
        %v1701 = vunpack.c.l.b16 %v1678
        %v1702 = vunpack.c.l.b16 %v1679
        %v1703 = vunpack.c.l.b16 %v1680
        %v1704 = vunpack.c.l.b16 %v1681
        %v1705 = vunpack.c.l.b16 %v1682
        %v1706 = vpack.c.b16 %v1699, %v1698
        %v1707 = vpack.c.b16 %v1701, %v1700
        %v1708 = vpack.c.b16 %v1703, %v1702
        %v1709 = vpack.c.b16 %v1705, %v1704
        %vm1714 = vcmask 523264
        %v1716 = vsel %vm1714, %v1674, 0
        %1718 = vmatprep.subr.bf16.mxu0 0
        %1719 = vmatpush1.bf16.msra.mxu0 %v1706
        %1720 = vmatprep.subr.bf16.mxu0 0
        %1721 = vmatpush1.bf16.msra.mxu0 %v1707
        %1722 = vmatprep.subr.bf16.mxu0 0
        %1723 = vmatpush1.bf16.msra.mxu0 %v1708
        %1724 = vmatprep.subr.bf16.mxu0 0
        %1725 = vmatpush1.bf16.msra.mxu0 %v1709
        %1726 = vmatprep.subr.bf16.mxu0 0
        %1727 = vmatpush1.bf16.msra.mxu0 0
        %1728 = vmatprep.subr.bf16.mxu0 0
        %1729 = vmatpush1.bf16.msra.mxu0 0
        %1730 = vmatprep.subr.bf16.mxu0 0
        %1731 = vmatpush1.bf16.msra.mxu0 0
        %1732 = vmatprep.subr.bf16.mxu0 0
        %1733 = vmatpush1.bf16.msra.mxu0 0
        %1734 = vmatprep.subr.bf16.mxu0 0
        %1735 = vmatpush1.bf16.msra.mxu0 0
        %1736 = vmatprep.subr.bf16.mxu0 0
        %1737 = vmatpush1.bf16.msra.mxu0 0
        %1738 = vmatprep.subr.bf16.mxu0 0
        %1739 = vmatpush1.bf16.msra.mxu0 0
        %1740 = vmatprep.subr.bf16.mxu0 0
        %1741 = vmatpush1.bf16.msra.mxu0 0
        %1742 = vmatprep.subr.bf16.mxu0 0
        %1743 = vmatpush1.bf16.msra.mxu0 0
        %1744 = vmatprep.subr.bf16.mxu0 0
        %1745 = vmatpush1.bf16.msra.mxu0 0
        %1746 = vmatprep.subr.bf16.mxu0 0
        %1747 = vmatpush1.bf16.msra.mxu0 0
        %1748 = vmatprep.subr.bf16.mxu0 0
        %1749 = vmatpush1.bf16.msra.mxu0 0
        %1750 = vmatprep.mubr.bf16.mxu0 0
        %1751 = vmatmul.mubr.bf16.gmra.mrb[0].mxu0 %v1716
        %v1752 = vpop.f32.mrb[0].mxu0
        %v1753 = vadd.f32 %v1688, %v1752
        %v1754 = vpop.f32.mrb[0].mxu0
        %v1755 = vpop.f32.mrb[0].mxu0
        %v1756 = vpop.f32.mrb[0].mxu0
        %1757 = vdwg.mxu0
        %v1758 = vadd.f32 %v1753, %v1600
        %v1759 = vld [vmem:[%s17] sm:$0x1]
        %v1760 = vld [vmem:[%s18] sm:$0x1]
        %v1761 = vsel %vm835, %v1758, 0.0
        %1762 = vadd.xlane.f32.xlu0 %v1761
        %v1763 = vpop.xlane.xlu0 %1762
        %v1764 = vmul.f32 %v1763, %v1576
        %v1765 = vsub.f32 %v1758, %v1764
        %v1766 = vmul.f32 %v1765, %v1765
        %v1767 = vsel %vm835, %v1766, 0.0
        %1768 = vadd.xlane.f32.xlu0 %v1767
        %v1769 = vpop.xlane.xlu0 %1768
        %v1770 = vmul.f32 %v1769, %v1576
        %v1771 = vadd.f32 %v1770, 1e-12
        %v1772 = vrsqrt.pop %v1771
        %v1773 = vmul.f32 %v1765, %v1772
        %v1775 = vlaneseq
        %v1776 = vshrl.u32 %v1775, 7
        %v1777 = vsub.s32 0, %v1776
        %v1778 = vrot.slane %v1759, %v1777
        %v1780 = vmul.f32 %v1773, %v1778
        %v1782 = vlaneseq
        %v1783 = vshrl.u32 %v1782, 7
        %v1784 = vsub.s32 0, %v1783
        %v1785 = vrot.slane %v1760, %v1784
        %v1787 = vadd.f32 %v1780, %v1785
        %1788 = vst.msk [vmem:[%s787] sm:$0xff] %vm835, %v1787
        %s1789 = sand.u32 %s483, 1
        %s1790 = scalar_lea.sflag [#allocation4], %s1789
        %s1791 = sand.u32 %s483, 1
        %s1792 = smul.addr %s1791, 8
        %s1793 = scalar_lea.vmem [#allocation16], %s1792
        %s1794 = sand.u32 %s511, 1
        %s1795 = scalar_lea.sflag [#allocation18], %s1794
        %s1796 = sand.u32 %s511, 1
        %s1797 = smul.addr %s1796, 32
        %s1798 = scalar_lea.vmem [#allocation17], %s1797
        // Predicated region
        $region129: #{tpu_custom_call.1} parent=95 // pred_check
          %p1799 = pneg %p493
        $region130: #{tpu_custom_call.1} parent=95 // pred_check_branch
          %1801 = sbr.rel (%p1799) target = $region132
        $region131: #{tpu_custom_call.1} parent=95 // pred_region
          %s1803 = ssub.s32 128, 128
          %1804 = vsyncadd %s1790, %s1803
          %s1805 = sadd.s32 %s50, %s49
          %s1806 = smul.addr %s1805, 128
          %s1807 = scalar_lea.hbm %s19, %s1806
          %s1809 = sshll.u32 %s1793, 4
          %s1810 = int_to_ptr.vmem [resolvable:$true] %s1809
          %1812 = dma.vmem_to_hbm [thread:$0]  %s1810, 128, %s1807, %s1790
        $region132: #{tpu_custom_call.1} parent=95 // pred_fallthru
          _
        // Predicated region
        $region133: #{tpu_custom_call.1} parent=95 // pred_check
          %p1813 = pneg %p521
        $region134: #{tpu_custom_call.1} parent=95 // pred_check_branch
          %1815 = sbr.rel (%p1813) target = $region136
        $region135: #{tpu_custom_call.1} parent=95 // pred_region
          %s1817 = ssub.s32 512, 512
          %1818 = vsyncadd %s1795, %s1817
          %s1819 = smul.addr %s49, 4
          %s1820 = sadd.s32 %s50, %s1819
          %s1821 = smul.addr %s1820, 128
          %s1822 = scalar_lea.hbm %s20, %s1821
          %s1823 = sshll.u32 %s1798, 4
          %s1824 = int_to_ptr.vmem [resolvable:$true] %s1823
          %1829 = dma.vmem_to_hbm [thread:$0]  %s1824, 512, %s1822, %s1795, 128, 128, 8
        $region136: #{tpu_custom_call.1} parent=95 // pred_fallthru
          _
      $region96: #{tpu_custom_call.1} parent=5 // pred_fallthru
        _
      %p1830 = scmp.le.s32.totalorder 2, %s40
      // Predicated region
      $region137: #{tpu_custom_call.1} parent=5 // pred_check
        %p1831 = pneg %p1830
      $region138: #{tpu_custom_call.1} parent=5 // pred_check_branch
        %1833 = sbr.rel (%p1831) target = $region140
      $region139: #{tpu_custom_call.1} parent=5 // pred_region
        %s1834 = ssub.s32 %s40, 2
        // Predicated region
        $region141: #{tpu_custom_call.1} parent=139 // pred_check
          %p1835 = pneg %p499
        $region142: #{tpu_custom_call.1} parent=139 // pred_check_branch
          %1837 = sbr.rel (%p1835) target = $region144
        $region143: #{tpu_custom_call.1} parent=139 // pred_region
          %s1838 = sand.u32 %s484, 1
          %s1839 = scalar_lea.sflag [#allocation4], %s1838
          %s1840 = sand.u32 %s484, 1
          %s1841 = smul.addr %s1840, 8
          %s1842 = scalar_lea.vmem [#allocation16], %s1841
          %1843 = dma.done %s1839, 128
        $region144: #{tpu_custom_call.1} parent=139 // pred_fallthru
          _
        // Predicated region
        $region145: #{tpu_custom_call.1} parent=139 // pred_check
          %p1844 = pneg %p527
        $region146: #{tpu_custom_call.1} parent=139 // pred_check_branch
          %1846 = sbr.rel (%p1844) target = $region148
        $region147: #{tpu_custom_call.1} parent=139 // pred_region
          %s1847 = sand.u32 %s512, 1
          %s1848 = scalar_lea.sflag [#allocation18], %s1847
          %s1849 = sand.u32 %s512, 1
          %s1850 = smul.addr %s1849, 32
          %s1851 = scalar_lea.vmem [#allocation17], %s1850
          %1852 = dma.done %s1848, 512
        $region148: #{tpu_custom_call.1} parent=139 // pred_fallthru
          _
      $region140: #{tpu_custom_call.1} parent=5 // pred_fallthru
        _
    $region6: #{tpu_custom_call.1} parent=1 // loop_footer
      %s44 = sadd.s32 1, %s40
    $region7: #{tpu_custom_call.1} parent=1 // loop_footer_branch
      %39 = sbr.rel target = $region3
    $region8: #{tpu_custom_call.1} parent=1 // loop_exit
      _
    %1853 = vsyncpa [#allocation3], 1
    %s1854 = scalar_lea.sflag [#allocation3], 1
    %1855 = vsyncpa %s1854, 1
    %1856 = vsyncpa [#allocation6], 1
    %1857 = vsyncpa [#allocation9], 1
    %1858 = vsyncpa [#allocation12], 1
    %1859 = vsyncpa [#allocation15], 1
    %1860 = vsyncpa [#allocation4], 1
    %s1861 = scalar_lea.sflag [#allocation4], 1
    %1862 = vsyncpa %s1861, 1
    %1863 = vsyncpa [#allocation18], 1
    %s1864 = scalar_lea.sflag [#allocation18], 1
    %1865 = vsyncpa %s1864, 1

// kernel: tpu_custom_call.1
$region0: #{tpu_custom_call.1}
  #allocation0 [shape = 'u32[]', space=smem, size = 0x4, offset = 0x4, fixed_abs, tag = 'smem constant byte address 0x4 - core index']
  #allocation1 [shape = 'u32[144,128]{1,0:T(1,128)}', space=vmem, size = 0x12000, scoped, tag = 'internal scratch']
  %s0 = inlined_call_operand.vmem [shape: f32[2,8,32], index: 0, kind: input, shape index: {}]
  %s1 = inlined_call_operand.vmem [shape: f32[2,8,32], index: 1, kind: input, shape index: {}]
  %s2 = inlined_call_operand.hbm [shape: f32[2,1,8], index: 2, kind: input, shape index: {}]
  %s3 = inlined_call_operand.vmem [shape: bf16[32,32], index: 3, kind: input, shape index: {}]
  %s4 = inlined_call_operand.vmem [shape: f32[1,32], index: 4, kind: input, shape index: {}]
  %s5 = inlined_call_operand.hbm [shape: bf16[32,32], index: 5, kind: input, shape index: {}]
  %s6 = inlined_call_operand.hbm [shape: f32[1,32], index: 6, kind: input, shape index: {}]
  %s7 = inlined_call_operand.hbm [shape: bf16[32,32], index: 7, kind: input, shape index: {}]
  %s8 = inlined_call_operand.hbm [shape: f32[1,32], index: 8, kind: input, shape index: {}]
  %s9 = inlined_call_operand.vmem [shape: bf16[32,32], index: 9, kind: input, shape index: {}]
  %s10 = inlined_call_operand.hbm [shape: f32[1,32], index: 10, kind: input, shape index: {}]
  %s11 = inlined_call_operand.hbm [shape: f32[1,32], index: 11, kind: input, shape index: {}]
  %s12 = inlined_call_operand.hbm [shape: f32[1,32], index: 12, kind: input, shape index: {}]
  %s13 = inlined_call_operand.vmem [shape: bf16[32,64], index: 13, kind: input, shape index: {}]
  %s14 = inlined_call_operand.vmem [shape: f32[1,64], index: 14, kind: input, shape index: {}]
  %s15 = inlined_call_operand.vmem [shape: bf16[64,32], index: 15, kind: input, shape index: {}]
  %s16 = inlined_call_operand.vmem [shape: f32[1,32], index: 16, kind: input, shape index: {}]
  %s17 = inlined_call_operand.vmem [shape: f32[1,32], index: 17, kind: input, shape index: {}]
  %s18 = inlined_call_operand.vmem [shape: f32[1,32], index: 18, kind: input, shape index: {}]
  %s19 = inlined_call_operand.hbm [shape: f32[2,8,32], index: 19, kind: output, shape index: {0}]
  %s20 = inlined_call_operand.hbm [shape: f32[2,4,8,8], index: 20, kind: output, shape index: {1}]
  %21 = xla_tuple %s19, %s20
  %s22 = sld [smem:[#allocation0]]
  $region149: #{tpu_custom_call.1} parent=0
    _
  %s24 = ssub.s32 1, %s22
  %s25 = scalar_select 0, %s24, %s22
  $region1: #{tpu_custom_call.1} parent=0
    #allocation2 [shape = 'u8[1024]{0}', space=vmem, size = 0x400, scoped, tag = 'input window, operand 2']
    #allocation3 [shape = 's32[2]{0}', space=sflag, size = 0x8, scoped, tag = 'scoped memory for tpu_custom_call.1']
    #allocation4 [shape = 's32[2]{0}', space=sflag, size = 0x8, scoped, tag = 'scoped memory for tpu_custom_call.1']
    #allocation5 [shape = 'u8[8192]{0}', space=vmem, size = 0x2000, scoped, tag = 'input window, operand 5, single buffered']
    #allocation6 [shape = 's32[1]{0}', space=sflag, size = 0x4, scoped, tag = 'scoped memory for tpu_custom_call.1']
    #allocation7 [shape = 'u8[512]{0}', space=vmem, size = 0x400, scoped, tag = 'input window, operand 6, single buffered']
    #allocation8 [shape = 'u8[8192]{0}', space=vmem, size = 0x2000, scoped, tag = 'input window, operand 7, single buffered']
    #allocation9 [shape = 's32[1]{0}', space=sflag, size = 0x4, scoped, tag = 'scoped memory for tpu_custom_call.1']
    #allocation10 [shape = 'u8[512]{0}', space=vmem, size = 0x400, scoped, tag = 'input window, operand 8, single buffered']
    #allocation11 [shape = 'u8[512]{0}', space=vmem, size = 0x400, scoped, tag = 'input window, operand 10, single buffered']
    #allocation12 [shape = 's32[1]{0}', space=sflag, size = 0x4, scoped, tag = 'scoped memory for tpu_custom_call.1']
    #allocation13 [shape = 'u8[512]{0}', space=vmem, size = 0x400, scoped, tag = 'input window, operand 11, single buffered']
    #allocation14 [shape = 'u8[512]{0}', space=vmem, size = 0x400, scoped, tag = 'input window, operand 12, single buffered']
    #allocation15 [shape = 's32[1]{0}', space=sflag, size = 0x4, scoped, tag = 'scoped memory for tpu_custom_call.1']
    #allocation16 [shape = 'u8[8192]{0}', space=vmem, size = 0x2000, scoped, tag = 'output window, operand 0']
    #allocation17 [shape = 'u8[32768]{0}', space=vmem, size = 0x8000, scoped, tag = 'output window, operand 1']
    #allocation18 [shape = 's32[2]{0}', space=sflag, size = 0x8, scoped, tag = 'scoped memory for tpu_custom_call.1']
    %26 = vsyncpa [#allocation3], 0
    %s27 = scalar_lea.sflag [#allocation3], 1
    %28 = vsyncpa %s27, 0
    %29 = vsyncpa [#allocation6], 0
    %30 = vsyncpa [#allocation9], 0
    %31 = vsyncpa [#allocation12], 0
    %32 = vsyncpa [#allocation15], 0
    %33 = vsyncpa [#allocation4], 0
    %s34 = scalar_lea.sflag [#allocation4], 1
    %35 = vsyncpa %s34, 0
    %36 = vsyncpa [#allocation18], 0
    %s37 = scalar_lea.sflag [#allocation18], 1
    %38 = vsyncpa %s37, 0
    loop: start=0, step=1, limit=4
    $region2: #{tpu_custom_call.1} parent=1 // loop_pre_header
      _
    $region3: #{tpu_custom_call.1} parent=1 // loop_header
      %s40 = sphi 0, %s44
      %p41 = scmp.ge.s32.totalorder %s40, 4
      %s47 = sphi 0, %s59
      %s48 = sphi 0, %s55
      %s49 = sphi 0, %s47
      %s50 = sphi 0, %s48
      %s51 = sphi 0, %s49
      %s52 = sphi 0, %s50
      %s64 = sphi 0, %s66
      %s67 = sphi 0, %s64
      %s68 = sphi 0, %s67
      %s84 = sphi 0, %s68
      %s90 = sphi 0, %s92
      %s93 = sphi 0, %s90
      %s94 = sphi 0, %s93
      %s110 = sphi 0, %s94
      %s116 = sphi 0, %s118
      %s119 = sphi 0, %s116
      %s120 = sphi 0, %s119
      %s136 = sphi 0, %s120
      %s140 = sphi 0, %s140
      %s142 = sphi 0, %s140
      %s143 = sphi 0, %s142
      %s157 = sphi 0, %s143
      %s161 = sphi 0, %s161
      %s163 = sphi 0, %s161
      %s164 = sphi 0, %s163
      %s178 = sphi 0, %s164
      %s182 = sphi 0, %s182
      %s184 = sphi 0, %s182
      %s185 = sphi 0, %s184
      %s199 = sphi 0, %s185
      %s203 = sphi 0, %s203
      %s205 = sphi 0, %s203
      %s206 = sphi 0, %s205
      %s220 = sphi 0, %s206
      %s224 = sphi 0, %s224
      %s226 = sphi 0, %s224
      %s227 = sphi 0, %s226
      %s241 = sphi 0, %s227
      %s245 = sphi 0, %s245
      %s247 = sphi 0, %s245
      %s248 = sphi 0, %s247
      %s262 = sphi 0, %s248
      %s266 = sphi 0, %s266
      %s268 = sphi 0, %s266
      %s269 = sphi 0, %s268
      %s283 = sphi 0, %s269
      %s287 = sphi 0, %s287
      %s289 = sphi 0, %s287
      %s290 = sphi 0, %s289
      %s304 = sphi 0, %s290
      %s308 = sphi 0, %s308
      %s310 = sphi 0, %s308
      %s311 = sphi 0, %s310
      %s325 = sphi 0, %s311
      %s329 = sphi 0, %s329
      %s331 = sphi 0, %s329
      %s332 = sphi 0, %s331
      %s346 = sphi 0, %s332
      %s350 = sphi 0, %s350
      %s352 = sphi 0, %s350
      %s353 = sphi 0, %s352
      %s367 = sphi 0, %s353
      %s371 = sphi 0, %s371
      %s373 = sphi 0, %s371
      %s374 = sphi 0, %s373
      %s388 = sphi 0, %s374
      %s392 = sphi 0, %s392
      %s394 = sphi 0, %s392
      %s395 = sphi 0, %s394
      %s409 = sphi 0, %s395
      %s413 = sphi 0, %s413
      %s415 = sphi 0, %s413
      %s416 = sphi 0, %s415
      %s430 = sphi 0, %s416
      %s434 = sphi 0, %s434
      %s436 = sphi 0, %s434
      %s437 = sphi 0, %s436
      %s451 = sphi 0, %s437
      %s455 = sphi 0, %s455
      %s457 = sphi 0, %s455
      %s458 = sphi 0, %s457
      %s472 = sphi 0, %s458
      %s480 = sphi 0, %s482
      %s483 = sphi 0, %s480
      %s484 = sphi 0, %s483
      %s500 = sphi 0, %s484
      %s508 = sphi 0, %s510
      %s511 = sphi 0, %s508
      %s512 = sphi 0, %s511
      %s528 = sphi 0, %s512
    $region4: #{tpu_custom_call.1} parent=1 // loop_header_branch
      %43 = sbr.rel (%p41) target = $region8
    $region5: #{tpu_custom_call.1} parent=1 // loop_body
      %s45 = ssub.s32 %s40, 1
      %s46 = ssub.s32 %s40, 2
      %s53 = sadd.s32 1, %s48
      %p54 = scmp.ge.s32.totalorder %s53, 1
      %s55 = scalar_select %p54, 0, %s53
      %s56 = sadd.s32 1, %s47
      %s57 = scalar_select %p54, %s56, %s47
      %p58 = scmp.ge.s32.totalorder %s57, 2
      %s59 = scalar_select %p58, 0, %s57
      %s60 = ssub.s32 %s47, %s59
      %s61 = ssub.s32 %s48, %s55
      %s62 = sor.u32 %s60, %s61
      %p63 = scmp.eq.s32.totalorder %s62, 0
      %s65 = sadd.s32 %s64, 1
      %s66 = scalar_select %p63, %s64, %s65
      %p69 = pneg %p63
      %p70 = scmp.eq.s32.totalorder %s40, 1
      %p71 = por %p69, %p70
      %p72 = scmp.ne.s32.totalorder %s64, %s67
      %p73 = scmp.eq.s32.totalorder %s40, 0
      %p74 = por %p72, %p73
      %p75 = scmp.ne.s32.totalorder %s64, %s67
      %p76 = scmp.eq.s32.totalorder %s45, 1
      %p77 = por %p75, %p76
      %p78 = scmp.ne.s32.totalorder %s67, %s68
      %p79 = scmp.eq.s32.totalorder %s45, 0
      %p80 = por %p78, %p79
      %p81 = scmp.ne.s32.totalorder %s67, %s68
      %p82 = scmp.eq.s32.totalorder %s46, 1
      %p83 = por %p81, %p82
      %p85 = scmp.ne.s32.totalorder %s68, %s84
      %p86 = scmp.eq.s32.totalorder %s46, 0
      %p87 = por %p85, %p86
      %s88 = ssub.s32 %s47, %s59
      %p89 = scmp.eq.s32.totalorder %s88, 0
      %s91 = sadd.s32 %s90, 1
      %s92 = scalar_select %p89, %s90, %s91
      %p95 = pneg %p89
      %p96 = scmp.eq.s32.totalorder %s40, 1
      %p97 = por %p95, %p96
      %p98 = scmp.ne.s32.totalorder %s90, %s93
      %p99 = scmp.eq.s32.totalorder %s40, 0
      %p100 = por %p98, %p99
      %p101 = scmp.ne.s32.totalorder %s90, %s93
      %p102 = scmp.eq.s32.totalorder %s45, 1
      %p103 = por %p101, %p102
      %p104 = scmp.ne.s32.totalorder %s93, %s94
      %p105 = scmp.eq.s32.totalorder %s45, 0
      %p106 = por %p104, %p105
      %p107 = scmp.ne.s32.totalorder %s93, %s94
      %p108 = scmp.eq.s32.totalorder %s46, 1
      %p109 = por %p107, %p108
      %p111 = scmp.ne.s32.totalorder %s94, %s110
      %p112 = scmp.eq.s32.totalorder %s46, 0
      %p113 = por %p111, %p112
      %s114 = ssub.s32 %s47, %s59
      %p115 = scmp.eq.s32.totalorder %s114, 0
      %s117 = sadd.s32 %s116, 1
      %s118 = scalar_select %p115, %s116, %s117
      %p121 = pneg %p115
      %p122 = scmp.eq.s32.totalorder %s40, 1
      %p123 = por %p121, %p122
      %p124 = scmp.ne.s32.totalorder %s116, %s119
      %p125 = scmp.eq.s32.totalorder %s40, 0
      %p126 = por %p124, %p125
      %p127 = scmp.ne.s32.totalorder %s116, %s119
      %p128 = scmp.eq.s32.totalorder %s45, 1
      %p129 = por %p127, %p128
      %p130 = scmp.ne.s32.totalorder %s119, %s120
      %p131 = scmp.eq.s32.totalorder %s45, 0
      %p132 = por %p130, %p131
      %p133 = scmp.ne.s32.totalorder %s119, %s120
      %p134 = scmp.eq.s32.totalorder %s46, 1
      %p135 = por %p133, %p134
      %p137 = scmp.ne.s32.totalorder %s120, %s136
      %p138 = scmp.eq.s32.totalorder %s46, 0
      %p139 = por %p137, %p138
      %s141 = sadd.s32 %s140, 1
      %p144 = scmp.eq.s32.totalorder %s40, 1
      %p145 = scmp.ne.s32.totalorder %s140, %s142
      %p146 = scmp.eq.s32.totalorder %s40, 0
      %p147 = por %p145, %p146
      %p148 = scmp.ne.s32.totalorder %s140, %s142
      %p149 = scmp.eq.s32.totalorder %s45, 1
      %p150 = por %p148, %p149
      %p151 = scmp.ne.s32.totalorder %s142, %s143
      %p152 = scmp.eq.s32.totalorder %s45, 0
      %p153 = por %p151, %p152
      %p154 = scmp.ne.s32.totalorder %s142, %s143
      %p155 = scmp.eq.s32.totalorder %s46, 1
      %p156 = por %p154, %p155
      %p158 = scmp.ne.s32.totalorder %s143, %s157
      %p159 = scmp.eq.s32.totalorder %s46, 0
      %p160 = por %p158, %p159
      %s162 = sadd.s32 %s161, 1
      %p165 = scmp.eq.s32.totalorder %s40, 1
      %p166 = scmp.ne.s32.totalorder %s161, %s163
      %p167 = scmp.eq.s32.totalorder %s40, 0
      %p168 = por %p166, %p167
      %p169 = scmp.ne.s32.totalorder %s161, %s163
      %p170 = scmp.eq.s32.totalorder %s45, 1
      %p171 = por %p169, %p170
      %p172 = scmp.ne.s32.totalorder %s163, %s164
      %p173 = scmp.eq.s32.totalorder %s45, 0
      %p174 = por %p172, %p173
      %p175 = scmp.ne.s32.totalorder %s163, %s164
      %p176 = scmp.eq.s32.totalorder %s46, 1
      %p177 = por %p175, %p176
      %p179 = scmp.ne.s32.totalorder %s164, %s178
      %p180 = scmp.eq.s32.totalorder %s46, 0
      %p181 = por %p179, %p180
      %s183 = sadd.s32 %s182, 1
      %p186 = scmp.eq.s32.totalorder %s40, 1
      %p187 = scmp.ne.s32.totalorder %s182, %s184
      %p188 = scmp.eq.s32.totalorder %s40, 0
      %p189 = por %p187, %p188
      %p190 = scmp.ne.s32.totalorder %s182, %s184
      %p191 = scmp.eq.s32.totalorder %s45, 1
      %p192 = por %p190, %p191
      %p193 = scmp.ne.s32.totalorder %s184, %s185
      %p194 = scmp.eq.s32.totalorder %s45, 0
      %p195 = por %p193, %p194
      %p196 = scmp.ne.s32.totalorder %s184, %s185
      %p197 = scmp.eq.s32.totalorder %s46, 1
      %p198 = por %p196, %p197
      %p200 = scmp.ne.s32.totalorder %s185, %s199
      %p201 = scmp.eq.s32.totalorder %s46, 0
      %p202 = por %p200, %p201
      %s204 = sadd.s32 %s203, 1
      %p207 = scmp.eq.s32.totalorder %s40, 1
      %p208 = scmp.ne.s32.totalorder %s203, %s205
      %p209 = scmp.eq.s32.totalorder %s40, 0
      %p210 = por %p208, %p209
      %p211 = scmp.ne.s32.totalorder %s203, %s205
      %p212 = scmp.eq.s32.totalorder %s45, 1
      %p213 = por %p211, %p212
      %p214 = scmp.ne.s32.totalorder %s205, %s206
      %p215 = scmp.eq.s32.totalorder %s45, 0
      %p216 = por %p214, %p215
      %p217 = scmp.ne.s32.totalorder %s205, %s206
      %p218 = scmp.eq.s32.totalorder %s46, 1
      %p219 = por %p217, %p218
      %p221 = scmp.ne.s32.totalorder %s206, %s220
      %p222 = scmp.eq.s32.totalorder %s46, 0
      %p223 = por %p221, %p222
      %s225 = sadd.s32 %s224, 1
      %p228 = scmp.eq.s32.totalorder %s40, 1
      %p229 = scmp.ne.s32.totalorder %s224, %s226
      %p230 = scmp.eq.s32.totalorder %s40, 0
      %p231 = por %p229, %p230
      %p232 = scmp.ne.s32.totalorder %s224, %s226
      %p233 = scmp.eq.s32.totalorder %s45, 1
      %p234 = por %p232, %p233
      %p235 = scmp.ne.s32.totalorder %s226, %s227
      %p236 = scmp.eq.s32.totalorder %s45, 0
      %p237 = por %p235, %p236
      %p238 = scmp.ne.s32.totalorder %s226, %s227
      %p239 = scmp.eq.s32.totalorder %s46, 1
      %p240 = por %p238, %p239
      %p242 = scmp.ne.s32.totalorder %s227, %s241
      %p243 = scmp.eq.s32.totalorder %s46, 0
      %p244 = por %p242, %p243
      %s246 = sadd.s32 %s245, 1
      %p249 = scmp.eq.s32.totalorder %s40, 1
      %p250 = scmp.ne.s32.totalorder %s245, %s247
      %p251 = scmp.eq.s32.totalorder %s40, 0
      %p252 = por %p250, %p251
      %p253 = scmp.ne.s32.totalorder %s245, %s247
      %p254 = scmp.eq.s32.totalorder %s45, 1
      %p255 = por %p253, %p254
      %p256 = scmp.ne.s32.totalorder %s247, %s248
      %p257 = scmp.eq.s32.totalorder %s45, 0
      %p258 = por %p256, %p257
      %p259 = scmp.ne.s32.totalorder %s247, %s248
      %p260 = scmp.eq.s32.totalorder %s46, 1
      %p261 = por %p259, %p260
      %p263 = scmp.ne.s32.totalorder %s248, %s262
      %p264 = scmp.eq.s32.totalorder %s46, 0
      %p265 = por %p263, %p264
      %s267 = sadd.s32 %s266, 1
      %p270 = scmp.eq.s32.totalorder %s40, 1
      %p271 = scmp.ne.s32.totalorder %s266, %s268
      %p272 = scmp.eq.s32.totalorder %s40, 0
      %p273 = por %p271, %p272
      %p274 = scmp.ne.s32.totalorder %s266, %s268
      %p275 = scmp.eq.s32.totalorder %s45, 1
      %p276 = por %p274, %p275
      %p277 = scmp.ne.s32.totalorder %s268, %s269
      %p278 = scmp.eq.s32.totalorder %s45, 0
      %p279 = por %p277, %p278
      %p280 = scmp.ne.s32.totalorder %s268, %s269
      %p281 = scmp.eq.s32.totalorder %s46, 1
      %p282 = por %p280, %p281
      %p284 = scmp.ne.s32.totalorder %s269, %s283
      %p285 = scmp.eq.s32.totalorder %s46, 0
      %p286 = por %p284, %p285
      %s288 = sadd.s32 %s287, 1
      %p291 = scmp.eq.s32.totalorder %s40, 1
      %p292 = scmp.ne.s32.totalorder %s287, %s289
      %p293 = scmp.eq.s32.totalorder %s40, 0
      %p294 = por %p292, %p293
      %p295 = scmp.ne.s32.totalorder %s287, %s289
      %p296 = scmp.eq.s32.totalorder %s45, 1
      %p297 = por %p295, %p296
      %p298 = scmp.ne.s32.totalorder %s289, %s290
      %p299 = scmp.eq.s32.totalorder %s45, 0
      %p300 = por %p298, %p299
      %p301 = scmp.ne.s32.totalorder %s289, %s290
      %p302 = scmp.eq.s32.totalorder %s46, 1
      %p303 = por %p301, %p302
      %p305 = scmp.ne.s32.totalorder %s290, %s304
      %p306 = scmp.eq.s32.totalorder %s46, 0
      %p307 = por %p305, %p306
      %s309 = sadd.s32 %s308, 1
      %p312 = scmp.eq.s32.totalorder %s40, 1
      %p313 = scmp.ne.s32.totalorder %s308, %s310
      %p314 = scmp.eq.s32.totalorder %s40, 0
      %p315 = por %p313, %p314
      %p316 = scmp.ne.s32.totalorder %s308, %s310
      %p317 = scmp.eq.s32.totalorder %s45, 1
      %p318 = por %p316, %p317
      %p319 = scmp.ne.s32.totalorder %s310, %s311
      %p320 = scmp.eq.s32.totalorder %s45, 0
      %p321 = por %p319, %p320
      %p322 = scmp.ne.s32.totalorder %s310, %s311
      %p323 = scmp.eq.s32.totalorder %s46, 1
      %p324 = por %p322, %p323
      %p326 = scmp.ne.s32.totalorder %s311, %s325
      %p327 = scmp.eq.s32.totalorder %s46, 0
      %p328 = por %p326, %p327
      %s330 = sadd.s32 %s329, 1
      %p333 = scmp.eq.s32.totalorder %s40, 1
      %p334 = scmp.ne.s32.totalorder %s329, %s331
      %p335 = scmp.eq.s32.totalorder %s40, 0
      %p336 = por %p334, %p335
      %p337 = scmp.ne.s32.totalorder %s329, %s331
      %p338 = scmp.eq.s32.totalorder %s45, 1
      %p339 = por %p337, %p338
      %p340 = scmp.ne.s32.totalorder %s331, %s332
      %p341 = scmp.eq.s32.totalorder %s45, 0
      %p342 = por %p340, %p341
      %p343 = scmp.ne.s32.totalorder %s331, %s332
      %p344 = scmp.eq.s32.totalorder %s46, 1
      %p345 = por %p343, %p344
      %p347 = scmp.ne.s32.totalorder %s332, %s346
      %p348 = scmp.eq.s32.totalorder %s46, 0
      %p349 = por %p347, %p348
      %s351 = sadd.s32 %s350, 1
      %p354 = scmp.eq.s32.totalorder %s40, 1
      %p355 = scmp.ne.s32.totalorder %s350, %s352
      %p356 = scmp.eq.s32.totalorder %s40, 0
      %p357 = por %p355, %p356
      %p358 = scmp.ne.s32.totalorder %s350, %s352
      %p359 = scmp.eq.s32.totalorder %s45, 1
      %p360 = por %p358, %p359
      %p361 = scmp.ne.s32.totalorder %s352, %s353
      %p362 = scmp.eq.s32.totalorder %s45, 0
      %p363 = por %p361, %p362
      %p364 = scmp.ne.s32.totalorder %s352, %s353
      %p365 = scmp.eq.s32.totalorder %s46, 1
      %p366 = por %p364, %p365
      %p368 = scmp.ne.s32.totalorder %s353, %s367
      %p369 = scmp.eq.s32.totalorder %s46, 0
      %p370 = por %p368, %p369
      %s372 = sadd.s32 %s371, 1
      %p375 = scmp.eq.s32.totalorder %s40, 1
      %p376 = scmp.ne.s32.totalorder %s371, %s373
      %p377 = scmp.eq.s32.totalorder %s40, 0
      %p378 = por %p376, %p377
      %p379 = scmp.ne.s32.totalorder %s371, %s373
      %p380 = scmp.eq.s32.totalorder %s45, 1
      %p381 = por %p379, %p380
      %p382 = scmp.ne.s32.totalorder %s373, %s374
      %p383 = scmp.eq.s32.totalorder %s45, 0
      %p384 = por %p382, %p383
      %p385 = scmp.ne.s32.totalorder %s373, %s374
      %p386 = scmp.eq.s32.totalorder %s46, 1
      %p387 = por %p385, %p386
      %p389 = scmp.ne.s32.totalorder %s374, %s388
      %p390 = scmp.eq.s32.totalorder %s46, 0
      %p391 = por %p389, %p390
      %s393 = sadd.s32 %s392, 1
      %p396 = scmp.eq.s32.totalorder %s40, 1
      %p397 = scmp.ne.s32.totalorder %s392, %s394
      %p398 = scmp.eq.s32.totalorder %s40, 0
      %p399 = por %p397, %p398
      %p400 = scmp.ne.s32.totalorder %s392, %s394
      %p401 = scmp.eq.s32.totalorder %s45, 1
      %p402 = por %p400, %p401
      %p403 = scmp.ne.s32.totalorder %s394, %s395
      %p404 = scmp.eq.s32.totalorder %s45, 0
      %p405 = por %p403, %p404
      %p406 = scmp.ne.s32.totalorder %s394, %s395
      %p407 = scmp.eq.s32.totalorder %s46, 1
      %p408 = por %p406, %p407
      %p410 = scmp.ne.s32.totalorder %s395, %s409
      %p411 = scmp.eq.s32.totalorder %s46, 0
      %p412 = por %p410, %p411
      %s414 = sadd.s32 %s413, 1
      %p417 = scmp.eq.s32.totalorder %s40, 1
      %p418 = scmp.ne.s32.totalorder %s413, %s415
      %p419 = scmp.eq.s32.totalorder %s40, 0
      %p420 = por %p418, %p419
      %p421 = scmp.ne.s32.totalorder %s413, %s415
      %p422 = scmp.eq.s32.totalorder %s45, 1
      %p423 = por %p421, %p422
      %p424 = scmp.ne.s32.totalorder %s415, %s416
      %p425 = scmp.eq.s32.totalorder %s45, 0
      %p426 = por %p424, %p425
      %p427 = scmp.ne.s32.totalorder %s415, %s416
      %p428 = scmp.eq.s32.totalorder %s46, 1
      %p429 = por %p427, %p428
      %p431 = scmp.ne.s32.totalorder %s416, %s430
      %p432 = scmp.eq.s32.totalorder %s46, 0
      %p433 = por %p431, %p432
      %s435 = sadd.s32 %s434, 1
      %p438 = scmp.eq.s32.totalorder %s40, 1
      %p439 = scmp.ne.s32.totalorder %s434, %s436
      %p440 = scmp.eq.s32.totalorder %s40, 0
      %p441 = por %p439, %p440
      %p442 = scmp.ne.s32.totalorder %s434, %s436
      %p443 = scmp.eq.s32.totalorder %s45, 1
      %p444 = por %p442, %p443
      %p445 = scmp.ne.s32.totalorder %s436, %s437
      %p446 = scmp.eq.s32.totalorder %s45, 0
      %p447 = por %p445, %p446
      %p448 = scmp.ne.s32.totalorder %s436, %s437
      %p449 = scmp.eq.s32.totalorder %s46, 1
      %p450 = por %p448, %p449
      %p452 = scmp.ne.s32.totalorder %s437, %s451
      %p453 = scmp.eq.s32.totalorder %s46, 0
      %p454 = por %p452, %p453
      %s456 = sadd.s32 %s455, 1
      %p459 = scmp.eq.s32.totalorder %s40, 1
      %p460 = scmp.ne.s32.totalorder %s455, %s457
      %p461 = scmp.eq.s32.totalorder %s40, 0
      %p462 = por %p460, %p461
      %p463 = scmp.ne.s32.totalorder %s455, %s457
      %p464 = scmp.eq.s32.totalorder %s45, 1
      %p465 = por %p463, %p464
      %p466 = scmp.ne.s32.totalorder %s457, %s458
      %p467 = scmp.eq.s32.totalorder %s45, 0
      %p468 = por %p466, %p467
      %p469 = scmp.ne.s32.totalorder %s457, %s458
      %p470 = scmp.eq.s32.totalorder %s46, 1
      %p471 = por %p469, %p470
      %p473 = scmp.ne.s32.totalorder %s458, %s472
      %p474 = scmp.eq.s32.totalorder %s46, 0
      %p475 = por %p473, %p474
      %s476 = ssub.s32 %s47, %s59
      %s477 = ssub.s32 %s48, %s55
      %s478 = sor.u32 %s476, %s477
      %p479 = scmp.eq.s32.totalorder %s478, 0
      %s481 = sadd.s32 %s480, 1
      %s482 = scalar_select %p479, %s480, %s481
      %p485 = pneg %p479
      %p486 = scmp.eq.s32.totalorder %s40, 1
      %p487 = por %p485, %p486
      %p488 = scmp.ne.s32.totalorder %s480, %s483
      %p489 = scmp.eq.s32.totalorder %s40, 0
      %p490 = por %p488, %p489
      %p491 = scmp.ne.s32.totalorder %s480, %s483
      %p492 = scmp.eq.s32.totalorder %s45, 1
      %p493 = por %p491, %p492
      %p494 = scmp.ne.s32.totalorder %s483, %s484
      %p495 = scmp.eq.s32.totalorder %s45, 0
      %p496 = por %p494, %p495
      %p497 = scmp.ne.s32.totalorder %s483, %s484
      %p498 = scmp.eq.s32.totalorder %s46, 1
      %p499 = por %p497, %p498
      %p501 = scmp.ne.s32.totalorder %s484, %s500
      %p502 = scmp.eq.s32.totalorder %s46, 0
      %p503 = por %p501, %p502
      %s504 = ssub.s32 %s47, %s59
      %s505 = ssub.s32 %s48, %s55
      %s506 = sor.u32 %s504, %s505
      %p507 = scmp.eq.s32.totalorder %s506, 0
      %s509 = sadd.s32 %s508, 1
      %s510 = scalar_select %p507, %s508, %s509
      %p513 = pneg %p507
      %p514 = scmp.eq.s32.totalorder %s40, 1
      %p515 = por %p513, %p514
      %p516 = scmp.ne.s32.totalorder %s508, %s511
      %p517 = scmp.eq.s32.totalorder %s40, 0
      %p518 = por %p516, %p517
      %p519 = scmp.ne.s32.totalorder %s508, %s511
      %p520 = scmp.eq.s32.totalorder %s45, 1
      %p521 = por %p519, %p520
      %p522 = scmp.ne.s32.totalorder %s511, %s512
      %p523 = scmp.eq.s32.totalorder %s45, 0
      %p524 = por %p522, %p523
      %p525 = scmp.ne.s32.totalorder %s511, %s512
      %p526 = scmp.eq.s32.totalorder %s46, 1
      %p527 = por %p525, %p526
      %p529 = scmp.ne.s32.totalorder %s512, %s528
      %p530 = scmp.eq.s32.totalorder %s46, 0
      %p531 = por %p529, %p530
      %p532 = scmp.le.s32.totalorder 1, %s40
      %p533 = scmp.lt.s32.totalorder %s40, 3
      %p534 = pnand %p532, %p533
      %p535 = pneg %p534
      // Predicated region
      $region9: #{tpu_custom_call.1} parent=5 // pred_check
        _
      $region10: #{tpu_custom_call.1} parent=5 // pred_check_branch
        %537 = sbr.rel (%p534) target = $region12
      $region11: #{tpu_custom_call.1} parent=5 // pred_region
        %s538 = ssub.s32 %s40, 1
        // Predicated region
        $region13: #{tpu_custom_call.1} parent=11 // pred_check
          %p539 = pneg %p153
        $region14: #{tpu_custom_call.1} parent=11 // pred_check_branch
          %541 = sbr.rel (%p539) target = $region16
        $region15: #{tpu_custom_call.1} parent=11 // pred_region
          _
        $region16: #{tpu_custom_call.1} parent=11 // pred_fallthru
          _
        // Predicated region
        $region17: #{tpu_custom_call.1} parent=11 // pred_check
          %p542 = pneg %p174
        $region18: #{tpu_custom_call.1} parent=11 // pred_check_branch
          %544 = sbr.rel (%p542) target = $region20
        $region19: #{tpu_custom_call.1} parent=11 // pred_region
          _
        $region20: #{tpu_custom_call.1} parent=11 // pred_fallthru
          _
        // Predicated region
        $region21: #{tpu_custom_call.1} parent=11 // pred_check
          %p545 = pneg %p195
        $region22: #{tpu_custom_call.1} parent=11 // pred_check_branch
          %547 = sbr.rel (%p545) target = $region24
        $region23: #{tpu_custom_call.1} parent=11 // pred_region
          %s549 = ssub.s32 256, 256
          %550 = vsyncadd [#allocation6], %s549
          %s551 = sshll.u32 [#allocation5], 4
          %s552 = int_to_ptr.vmem [resolvable:$true] %s551
          %557 = dma.hbm_to_vmem [thread:$0]  %s5, 256, %s552, [#allocation6], 64, 64, 4
        $region24: #{tpu_custom_call.1} parent=11 // pred_fallthru
          _
        // Predicated region
        $region25: #{tpu_custom_call.1} parent=11 // pred_check
          %p558 = pneg %p216
        $region26: #{tpu_custom_call.1} parent=11 // pred_check_branch
          %560 = sbr.rel (%p558) target = $region28
        $region27: #{tpu_custom_call.1} parent=11 // pred_region
          %s562 = ssub.s32 16, 16
          %563 = vsyncadd [#allocation6], %s562
          %s565 = sshll.u32 [#allocation7], 4
          %s566 = int_to_ptr.vmem [resolvable:$true] %s565
          %568 = dma.hbm_to_vmem [thread:$0]  %s6, 16, %s566, [#allocation6]
        $region28: #{tpu_custom_call.1} parent=11 // pred_fallthru
          _
        // Predicated region
        $region29: #{tpu_custom_call.1} parent=11 // pred_check
          %p569 = pneg %p237
        $region30: #{tpu_custom_call.1} parent=11 // pred_check_branch
          %571 = sbr.rel (%p569) target = $region32
        $region31: #{tpu_custom_call.1} parent=11 // pred_region
          %s573 = ssub.s32 256, 256
          %574 = vsyncadd [#allocation9], %s573
          %s575 = sshll.u32 [#allocation8], 4
          %s576 = int_to_ptr.vmem [resolvable:$true] %s575
          %581 = dma.hbm_to_vmem [thread:$0]  %s7, 256, %s576, [#allocation9], 64, 64, 4
        $region32: #{tpu_custom_call.1} parent=11 // pred_fallthru
          _
        // Predicated region
        $region33: #{tpu_custom_call.1} parent=11 // pred_check
          %p582 = pneg %p258
        $region34: #{tpu_custom_call.1} parent=11 // pred_check_branch
          %584 = sbr.rel (%p582) target = $region36
        $region35: #{tpu_custom_call.1} parent=11 // pred_region
          %s586 = ssub.s32 16, 16
          %587 = vsyncadd [#allocation9], %s586
          %s589 = sshll.u32 [#allocation10], 4
          %s590 = int_to_ptr.vmem [resolvable:$true] %s589
          %592 = dma.hbm_to_vmem [thread:$0]  %s8, 16, %s590, [#allocation9]
        $region36: #{tpu_custom_call.1} parent=11 // pred_fallthru
          _
        // Predicated region
        $region37: #{tpu_custom_call.1} parent=11 // pred_check
          %p593 = pneg %p279
        $region38: #{tpu_custom_call.1} parent=11 // pred_check_branch
          %595 = sbr.rel (%p593) target = $region40
        $region39: #{tpu_custom_call.1} parent=11 // pred_region
          _
        $region40: #{tpu_custom_call.1} parent=11 // pred_fallthru
          _
        // Predicated region
        $region41: #{tpu_custom_call.1} parent=11 // pred_check
          %p596 = pneg %p300
        $region42: #{tpu_custom_call.1} parent=11 // pred_check_branch
          %598 = sbr.rel (%p596) target = $region44
        $region43: #{tpu_custom_call.1} parent=11 // pred_region
          %s600 = ssub.s32 16, 16
          %601 = vsyncadd [#allocation12], %s600
          %s603 = sshll.u32 [#allocation11], 4
          %s604 = int_to_ptr.vmem [resolvable:$true] %s603
          %606 = dma.hbm_to_vmem [thread:$0]  %s10, 16, %s604, [#allocation12]
        $region44: #{tpu_custom_call.1} parent=11 // pred_fallthru
          _
        // Predicated region
        $region45: #{tpu_custom_call.1} parent=11 // pred_check
          %p607 = pneg %p321
        $region46: #{tpu_custom_call.1} parent=11 // pred_check_branch
          %609 = sbr.rel (%p607) target = $region48
        $region47: #{tpu_custom_call.1} parent=11 // pred_region
          %s611 = ssub.s32 16, 16
          %612 = vsyncadd [#allocation12], %s611
          %s614 = sshll.u32 [#allocation13], 4
          %s615 = int_to_ptr.vmem [resolvable:$true] %s614
          %617 = dma.hbm_to_vmem [thread:$0]  %s11, 16, %s615, [#allocation12]
        $region48: #{tpu_custom_call.1} parent=11 // pred_fallthru
          _
        // Predicated region
        $region49: #{tpu_custom_call.1} parent=11 // pred_check
          %p618 = pneg %p342
        $region50: #{tpu_custom_call.1} parent=11 // pred_check_branch
          %620 = sbr.rel (%p618) target = $region52
        $region51: #{tpu_custom_call.1} parent=11 // pred_region
          %s622 = ssub.s32 16, 16
          %623 = vsyncadd [#allocation15], %s622
          %s625 = sshll.u32 [#allocation14], 4
          %s626 = int_to_ptr.vmem [resolvable:$true] %s625
          %628 = dma.hbm_to_vmem [thread:$0]  %s12, 16, %s626, [#allocation15]
        $region52: #{tpu_custom_call.1} parent=11 // pred_fallthru
          _
        // Predicated region
        $region53: #{tpu_custom_call.1} parent=11 // pred_check
          %p629 = pneg %p363
        $region54: #{tpu_custom_call.1} parent=11 // pred_check_branch
          %631 = sbr.rel (%p629) target = $region56
        $region55: #{tpu_custom_call.1} parent=11 // pred_region
          _
        $region56: #{tpu_custom_call.1} parent=11 // pred_fallthru
          _
        // Predicated region
        $region57: #{tpu_custom_call.1} parent=11 // pred_check
          %p632 = pneg %p384
        $region58: #{tpu_custom_call.1} parent=11 // pred_check_branch
          %634 = sbr.rel (%p632) target = $region60
        $region59: #{tpu_custom_call.1} parent=11 // pred_region
          _
        $region60: #{tpu_custom_call.1} parent=11 // pred_fallthru
          _
        // Predicated region
        $region61: #{tpu_custom_call.1} parent=11 // pred_check
          %p635 = pneg %p405
        $region62: #{tpu_custom_call.1} parent=11 // pred_check_branch
          %637 = sbr.rel (%p635) target = $region64
        $region63: #{tpu_custom_call.1} parent=11 // pred_region
          _
        $region64: #{tpu_custom_call.1} parent=11 // pred_fallthru
          _
        // Predicated region
        $region65: #{tpu_custom_call.1} parent=11 // pred_check
          %p638 = pneg %p426
        $region66: #{tpu_custom_call.1} parent=11 // pred_check_branch
          %640 = sbr.rel (%p638) target = $region68
        $region67: #{tpu_custom_call.1} parent=11 // pred_region
          _
        $region68: #{tpu_custom_call.1} parent=11 // pred_fallthru
          _
        // Predicated region
        $region69: #{tpu_custom_call.1} parent=11 // pred_check
          %p641 = pneg %p447
        $region70: #{tpu_custom_call.1} parent=11 // pred_check_branch
          %643 = sbr.rel (%p641) target = $region72
        $region71: #{tpu_custom_call.1} parent=11 // pred_region
          _
        $region72: #{tpu_custom_call.1} parent=11 // pred_fallthru
          _
        // Predicated region
        $region73: #{tpu_custom_call.1} parent=11 // pred_check
          %p644 = pneg %p468
        $region74: #{tpu_custom_call.1} parent=11 // pred_check_branch
          %646 = sbr.rel (%p644) target = $region76
        $region75: #{tpu_custom_call.1} parent=11 // pred_region
          _
        $region76: #{tpu_custom_call.1} parent=11 // pred_fallthru
          _
      $region12: #{tpu_custom_call.1} parent=5 // pred_fallthru
        _
      %p647 = scmp.lt.s32.totalorder %s40, 2
      // Predicated region
      $region77: #{tpu_custom_call.1} parent=5 // pred_check
        %p648 = pneg %p647
      $region78: #{tpu_custom_call.1} parent=5 // pred_check_branch
        %650 = sbr.rel (%p648) target = $region80
      $region79: #{tpu_custom_call.1} parent=5 // pred_region
        // Predicated region
        $region81: #{tpu_custom_call.1} parent=79 // pred_check
          %p651 = pneg %p74
        $region82: #{tpu_custom_call.1} parent=79 // pred_check_branch
          %653 = sbr.rel (%p651) target = $region84
        $region83: #{tpu_custom_call.1} parent=79 // pred_region
          %p654 = scmp.lt.s32.totalorder %s47, 1
          %s655 = scalar_select %p654, %s47, 1
          %p656 = scmp.lt.s32.totalorder %s48, 0
          %s657 = scalar_select %p656, %s48, 0
          %s658 = sadd.s32 %s657, %s655
          %s659 = smul.addr %s658, 8
          %s660 = scalar_lea.vmem %s0, %s659
        $region84: #{tpu_custom_call.1} parent=79 // pred_fallthru
          _
        // Predicated region
        $region85: #{tpu_custom_call.1} parent=79 // pred_check
          %p661 = pneg %p100
        $region86: #{tpu_custom_call.1} parent=79 // pred_check_branch
          %663 = sbr.rel (%p661) target = $region88
        $region87: #{tpu_custom_call.1} parent=79 // pred_region
          %p664 = scmp.lt.s32.totalorder %s47, 1
          %s665 = scalar_select %p664, %s47, 1
          %s666 = smul.addr %s665, 8
          %s667 = scalar_lea.vmem %s1, %s666
        $region88: #{tpu_custom_call.1} parent=79 // pred_fallthru
          _
        // Predicated region
        $region89: #{tpu_custom_call.1} parent=79 // pred_check
          %p668 = pneg %p126
        $region90: #{tpu_custom_call.1} parent=79 // pred_check_branch
          %670 = sbr.rel (%p668) target = $region92
        $region91: #{tpu_custom_call.1} parent=79 // pred_region
          %s671 = sand.u32 %s116, 1
          %s672 = scalar_lea.sflag [#allocation3], %s671
          %s673 = sand.u32 %s116, 1
          %s674 = scalar_lea.vmem [#allocation2], %s673
          %s676 = ssub.s32 16, 16
          %677 = vsyncadd %s672, %s676
          %s678 = smul.addr %s47, 16
          %s679 = scalar_lea.hbm %s2, %s678
          %s681 = sshll.u32 %s674, 4
          %s682 = int_to_ptr.vmem [resolvable:$true] %s681
          %684 = dma.hbm_to_vmem [thread:$0]  %s679, 16, %s682, %s672
        $region92: #{tpu_custom_call.1} parent=79 // pred_fallthru
          _
      $region80: #{tpu_custom_call.1} parent=5 // pred_fallthru
        _
      %p685 = scmp.le.s32.totalorder 1, %s40
      %p686 = scmp.lt.s32.totalorder %s40, 3
      %p687 = pnand %p685, %p686
      %p688 = pneg %p687
      // Predicated region
      $region93: #{tpu_custom_call.1} parent=5 // pred_check
        _
      $region94: #{tpu_custom_call.1} parent=5 // pred_check_branch
        %690 = sbr.rel (%p687) target = $region96
      $region95: #{tpu_custom_call.1} parent=5 // pred_region
        %s691 = ssub.s32 %s40, 1
        %s692 = sand.u32 %s119, 1
        %s693 = scalar_lea.sflag [#allocation3], %s692
        %s694 = sand.u32 %s119, 1
        %s695 = scalar_lea.vmem [#allocation2], %s694
        // Predicated region
        $region97: #{tpu_custom_call.1} parent=95 // pred_check
          %p696 = pneg %p132
        $region98: #{tpu_custom_call.1} parent=95 // pred_check_branch
          %698 = sbr.rel (%p696) target = $region100
        $region99: #{tpu_custom_call.1} parent=95 // pred_region
          %699 = dma.done %s693, 16
        $region100: #{tpu_custom_call.1} parent=95 // pred_fallthru
          _
        // Predicated region
        $region101: #{tpu_custom_call.1} parent=95 // pred_check
          %p700 = pneg %p195
        $region102: #{tpu_custom_call.1} parent=95 // pred_check_branch
          %702 = sbr.rel (%p700) target = $region104
        $region103: #{tpu_custom_call.1} parent=95 // pred_region
          %703 = dma.done [#allocation6], 256
        $region104: #{tpu_custom_call.1} parent=95 // pred_fallthru
          _
        // Predicated region
        $region105: #{tpu_custom_call.1} parent=95 // pred_check
          %p704 = pneg %p216
        $region106: #{tpu_custom_call.1} parent=95 // pred_check_branch
          %706 = sbr.rel (%p704) target = $region108
        $region107: #{tpu_custom_call.1} parent=95 // pred_region
          %707 = dma.done [#allocation6], 16
        $region108: #{tpu_custom_call.1} parent=95 // pred_fallthru
          _
        // Predicated region
        $region109: #{tpu_custom_call.1} parent=95 // pred_check
          %p708 = pneg %p237
        $region110: #{tpu_custom_call.1} parent=95 // pred_check_branch
          %710 = sbr.rel (%p708) target = $region112
        $region111: #{tpu_custom_call.1} parent=95 // pred_region
          %711 = dma.done [#allocation9], 256
        $region112: #{tpu_custom_call.1} parent=95 // pred_fallthru
          _
        // Predicated region
        $region113: #{tpu_custom_call.1} parent=95 // pred_check
          %p712 = pneg %p258
        $region114: #{tpu_custom_call.1} parent=95 // pred_check_branch
          %714 = sbr.rel (%p712) target = $region116
        $region115: #{tpu_custom_call.1} parent=95 // pred_region
          %715 = dma.done [#allocation9], 16
        $region116: #{tpu_custom_call.1} parent=95 // pred_fallthru
          _
        // Predicated region
        $region117: #{tpu_custom_call.1} parent=95 // pred_check
          %p716 = pneg %p300
        $region118: #{tpu_custom_call.1} parent=95 // pred_check_branch
          %718 = sbr.rel (%p716) target = $region120
        $region119: #{tpu_custom_call.1} parent=95 // pred_region
          %719 = dma.done [#allocation12], 16
        $region120: #{tpu_custom_call.1} parent=95 // pred_fallthru
          _
        // Predicated region
        $region121: #{tpu_custom_call.1} parent=95 // pred_check
          %p720 = pneg %p321
        $region122: #{tpu_custom_call.1} parent=95 // pred_check_branch
          %722 = sbr.rel (%p720) target = $region124
        $region123: #{tpu_custom_call.1} parent=95 // pred_region
          %723 = dma.done [#allocation12], 16
        $region124: #{tpu_custom_call.1} parent=95 // pred_fallthru
          _
        // Predicated region
        $region125: #{tpu_custom_call.1} parent=95 // pred_check
          %p724 = pneg %p342
        $region126: #{tpu_custom_call.1} parent=95 // pred_check_branch
          %726 = sbr.rel (%p724) target = $region128
        $region127: #{tpu_custom_call.1} parent=95 // pred_region
          %727 = dma.done [#allocation15], 16
        $region128: #{tpu_custom_call.1} parent=95 // pred_fallthru
          _
        %p728 = scmp.lt.s32.totalorder %s49, 1
        %s729 = scalar_select %p728, %s49, 1
        %p730 = scmp.lt.s32.totalorder %s50, 0
        %s731 = scalar_select %p730, %s50, 0
        %s732 = sadd.s32 %s731, %s729
        %s733 = smul.addr %s732, 8
        %s734 = scalar_lea.vmem %s0, %s733
        %p735 = pneg %p80
        %p736 = pneg %p77
        %p737 = scmp.lt.s32.totalorder %s49, 1
        %s738 = scalar_select %p737, %s49, 1
        %s739 = smul.addr %s738, 8
        %s740 = scalar_lea.vmem %s1, %s739
        %p741 = pneg %p106
        %p742 = pneg %p103
        %s743 = sand.u32 %s119, 1
        %s744 = scalar_lea.sflag [#allocation3], %s743
        %s745 = sand.u32 %s119, 1
        %s746 = scalar_lea.vmem [#allocation2], %s745
        %p747 = pneg %p132
        %p748 = pneg %p129
        %p749 = pneg %p153
        %p750 = pneg %p150
        %p751 = pneg %p174
        %p752 = pneg %p171
        %p753 = pneg %p195
        %p754 = pneg %p192
        %p755 = pneg %p216
        %p756 = pneg %p213
        %p757 = pneg %p237
        %p758 = pneg %p234
        %p759 = pneg %p258
        %p760 = pneg %p255
        %p761 = pneg %p279
        %p762 = pneg %p276
        %p763 = pneg %p300
        %p764 = pneg %p297
        %p765 = pneg %p321
        %p766 = pneg %p318
        %p767 = pneg %p342
        %p768 = pneg %p339
        %p769 = pneg %p363
        %p770 = pneg %p360
        %p771 = pneg %p384
        %p772 = pneg %p381
        %p773 = pneg %p405
        %p774 = pneg %p402
        %p775 = pneg %p426
        %p776 = pneg %p423
        %p777 = pneg %p447
        %p778 = pneg %p444
        %p779 = pneg %p468
        %p780 = pneg %p465
        %p781 = pneg %p496
        %p782 = pneg %p493
        %s783 = sand.u32 %s483, 1
        %s784 = scalar_lea.sflag [#allocation4], %s783
        %s785 = sand.u32 %s483, 1
        %s786 = smul.addr %s785, 8
        %s787 = scalar_lea.vmem [#allocation16], %s786
        %p788 = pneg %p524
        %p789 = pneg %p521
        %s790 = sand.u32 %s511, 1
        %s791 = scalar_lea.sflag [#allocation18], %s790
        %s792 = sand.u32 %s511, 1
        %s793 = smul.addr %s792, 32
        %s794 = scalar_lea.vmem [#allocation17], %s793
        %p795 = scmp.lt.s32.totalorder %s49, 1
        %s796 = scalar_select %p795, %s49, 1
        %p797 = scmp.lt.s32.totalorder %s50, 0
        %s798 = scalar_select %p797, %s50, 0
        %s799 = sadd.s32 %s798, %s796
        %s800 = smul.addr %s799, 8
        %s801 = scalar_lea.vmem %s0, %s800
        %p802 = scmp.lt.s32.totalorder %s49, 1
        %s803 = scalar_select %p802, %s49, 1
        %s804 = smul.addr %s803, 8
        %s805 = scalar_lea.vmem %s1, %s804
        %v807 = vld [vmem:[%s801] sm:$0xff]
        %v808 = vpack.c.bf16 %v807, %v807
        %v809 = vld [vmem:[%s805] sm:$0xff]
        %v810 = vpack.c.bf16 %v809, %v809
        %v811 = vld [vmem:[%s695] sm:$0x1]
        %v812 = vld [vmem:[%s3] sm:$0xf]
        %v813 = vld [vmem:[%s3 + $0x4] sm:$0xf]
        %v814 = vld [vmem:[%s3 + $0x8] sm:$0xf]
        %v815 = vld [vmem:[%s3 + $0xc] sm:$0xf]
        %v816 = vld [vmem:[%s4] sm:$0x1]
        %v818 = vlaneseq
        %v819 = vshrl.u32 %v818, 7
        %v820 = vsub.s32 0, %v819
        %v821 = vrot.slane %v816, %v820
        %v827 = vunpack.c.l.b16 %v812
        %v828 = vunpack.c.l.b16 %v813
        %v829 = vunpack.c.l.b16 %v814
        %v830 = vunpack.c.l.b16 %v815
        %v831 = vpack.c.b16 %v828, %v827
        %v832 = vpack.c.b16 %v830, %v829
        %vm835 = vcmask 261120
        %v837 = vsel %vm835, %v808, 0
        %839 = vmatprep.subr.bf16.mxu0 0
        %840 = vmatpush1.bf16.msra.mxu0 %v831
        %841 = vmatprep.subr.bf16.mxu0 0
        %842 = vmatpush1.bf16.msra.mxu0 %v832
        %843 = vmatprep.subr.bf16.mxu0 0
        %844 = vmatpush1.bf16.msra.mxu0 0
        %845 = vmatprep.subr.bf16.mxu0 0
        %846 = vmatpush1.bf16.msra.mxu0 0
        %847 = vmatprep.subr.bf16.mxu0 0
        %848 = vmatpush1.bf16.msra.mxu0 0
        %849 = vmatprep.subr.bf16.mxu0 0
        %850 = vmatpush1.bf16.msra.mxu0 0
        %851 = vmatprep.subr.bf16.mxu0 0
        %852 = vmatpush1.bf16.msra.mxu0 0
        %853 = vmatprep.subr.bf16.mxu0 0
        %854 = vmatpush1.bf16.msra.mxu0 0
        %855 = vmatprep.subr.bf16.mxu0 0
        %856 = vmatpush1.bf16.msra.mxu0 0
        %857 = vmatprep.subr.bf16.mxu0 0
        %858 = vmatpush1.bf16.msra.mxu0 0
        %859 = vmatprep.subr.bf16.mxu0 0
        %860 = vmatpush1.bf16.msra.mxu0 0
        %861 = vmatprep.subr.bf16.mxu0 0
        %862 = vmatpush1.bf16.msra.mxu0 0
        %863 = vmatprep.subr.bf16.mxu0 0
        %864 = vmatpush1.bf16.msra.mxu0 0
        %865 = vmatprep.subr.bf16.mxu0 0
        %866 = vmatpush1.bf16.msra.mxu0 0
        %867 = vmatprep.subr.bf16.mxu0 0
        %868 = vmatpush1.bf16.msra.mxu0 0
        %869 = vmatprep.subr.bf16.mxu0 0
        %870 = vmatpush1.bf16.msra.mxu0 0
        %871 = vmatprep.mubr.bf16.mxu0 0
        %872 = vmatmul.mubr.bf16.gmra.mrb[0].mxu0 %v837
        %v873 = vpop.f32.mrb[0].mxu0
        %v874 = vadd.f32 %v821, %v873
        %v875 = vpop.f32.mrb[0].mxu0
        %v876 = vpop.f32.mrb[0].mxu0
        %v877 = vpop.f32.mrb[0].mxu0
        %878 = vdwg.mxu0
        %v879 = vld [vmem:[#allocation5] sm:$0xf]
        %v880 = vld [vmem:[#allocation5 + $0x4] sm:$0xf]
        %v881 = vld [vmem:[#allocation5 + $0x8] sm:$0xf]
        %v882 = vld [vmem:[#allocation5 + $0xc] sm:$0xf]
        %v883 = vld [vmem:[#allocation7] sm:$0x1]
        %v885 = vlaneseq
        %v886 = vshrl.u32 %v885, 7
        %v887 = vsub.s32 0, %v886
        %v888 = vrot.slane %v883, %v887
        %v894 = vunpack.c.l.b16 %v879
        %v895 = vunpack.c.l.b16 %v880
        %v896 = vunpack.c.l.b16 %v881
        %v897 = vunpack.c.l.b16 %v882
        %v898 = vpack.c.b16 %v895, %v894
        %v899 = vpack.c.b16 %v897, %v896
        %v903 = vsel %vm835, %v810, 0
        %905 = vmatprep.subr.bf16.mxu0 0
        %906 = vmatpush1.bf16.msra.mxu0 %v898
        %907 = vmatprep.subr.bf16.mxu0 0
        %908 = vmatpush1.bf16.msra.mxu0 %v899
        %909 = vmatprep.subr.bf16.mxu0 0
        %910 = vmatpush1.bf16.msra.mxu0 0
        %911 = vmatprep.subr.bf16.mxu0 0
        %912 = vmatpush1.bf16.msra.mxu0 0
        %913 = vmatprep.subr.bf16.mxu0 0
        %914 = vmatpush1.bf16.msra.mxu0 0
        %915 = vmatprep.subr.bf16.mxu0 0
        %916 = vmatpush1.bf16.msra.mxu0 0
        %917 = vmatprep.subr.bf16.mxu0 0
        %918 = vmatpush1.bf16.msra.mxu0 0
        %919 = vmatprep.subr.bf16.mxu0 0
        %920 = vmatpush1.bf16.msra.mxu0 0
        %921 = vmatprep.subr.bf16.mxu0 0
        %922 = vmatpush1.bf16.msra.mxu0 0
        %923 = vmatprep.subr.bf16.mxu0 0
        %924 = vmatpush1.bf16.msra.mxu0 0
        %925 = vmatprep.subr.bf16.mxu0 0
        %926 = vmatpush1.bf16.msra.mxu0 0
        %927 = vmatprep.subr.bf16.mxu0 0
        %928 = vmatpush1.bf16.msra.mxu0 0
        %929 = vmatprep.subr.bf16.mxu0 0
        %930 = vmatpush1.bf16.msra.mxu0 0
        %931 = vmatprep.subr.bf16.mxu0 0
        %932 = vmatpush1.bf16.msra.mxu0 0
        %933 = vmatprep.subr.bf16.mxu0 0
        %934 = vmatpush1.bf16.msra.mxu0 0
        %935 = vmatprep.subr.bf16.mxu0 0
        %936 = vmatpush1.bf16.msra.mxu0 0
        %937 = vmatprep.mubr.bf16.mxu0 0
        %938 = vmatmul.mubr.bf16.gmra.mrb[0].mxu0 %v903
        %v939 = vpop.f32.mrb[0].mxu0
        %v940 = vadd.f32 %v888, %v939
        %v941 = vpop.f32.mrb[0].mxu0
        %v942 = vpop.f32.mrb[0].mxu0
        %v943 = vpop.f32.mrb[0].mxu0
        %944 = vdwg.mxu0
        %v945 = vld [vmem:[#allocation8] sm:$0xf]
        %v946 = vld [vmem:[#allocation8 + $0x4] sm:$0xf]
        %v947 = vld [vmem:[#allocation8 + $0x8] sm:$0xf]
        %v948 = vld [vmem:[#allocation8 + $0xc] sm:$0xf]
        %v949 = vld [vmem:[#allocation10] sm:$0x1]
        %v951 = vlaneseq
        %v952 = vshrl.u32 %v951, 7
        %v953 = vsub.s32 0, %v952
        %v954 = vrot.slane %v949, %v953
        %v960 = vunpack.c.l.b16 %v945
        %v961 = vunpack.c.l.b16 %v946
        %v962 = vunpack.c.l.b16 %v947
        %v963 = vunpack.c.l.b16 %v948
        %v964 = vpack.c.b16 %v961, %v960
        %v965 = vpack.c.b16 %v963, %v962
        %968 = vmatprep.subr.bf16.mxu0 0
        %969 = vmatpush1.bf16.msra.mxu0 %v964
        %970 = vmatprep.subr.bf16.mxu0 0
        %971 = vmatpush1.bf16.msra.mxu0 %v965
        %972 = vmatprep.subr.bf16.mxu0 0
        %973 = vmatpush1.bf16.msra.mxu0 0
        %974 = vmatprep.subr.bf16.mxu0 0
        %975 = vmatpush1.bf16.msra.mxu0 0
        %976 = vmatprep.subr.bf16.mxu0 0
        %977 = vmatpush1.bf16.msra.mxu0 0
        %978 = vmatprep.subr.bf16.mxu0 0
        %979 = vmatpush1.bf16.msra.mxu0 0
        %980 = vmatprep.subr.bf16.mxu0 0
        %981 = vmatpush1.bf16.msra.mxu0 0
        %982 = vmatprep.subr.bf16.mxu0 0
        %983 = vmatpush1.bf16.msra.mxu0 0
        %984 = vmatprep.subr.bf16.mxu0 0
        %985 = vmatpush1.bf16.msra.mxu0 0
        %986 = vmatprep.subr.bf16.mxu0 0
        %987 = vmatpush1.bf16.msra.mxu0 0
        %988 = vmatprep.subr.bf16.mxu0 0
        %989 = vmatpush1.bf16.msra.mxu0 0
        %990 = vmatprep.subr.bf16.mxu0 0
        %991 = vmatpush1.bf16.msra.mxu0 0
        %992 = vmatprep.subr.bf16.mxu0 0
        %993 = vmatpush1.bf16.msra.mxu0 0
        %994 = vmatprep.subr.bf16.mxu0 0
        %995 = vmatpush1.bf16.msra.mxu0 0
        %996 = vmatprep.subr.bf16.mxu0 0
        %997 = vmatpush1.bf16.msra.mxu0 0
        %998 = vmatprep.subr.bf16.mxu0 0
        %999 = vmatpush1.bf16.msra.mxu0 0
        %1000 = vmatprep.mubr.bf16.mxu0 0
        %1001 = vmatmul.mubr.bf16.gmra.mrb[0].mxu0 %v903
        %v1002 = vpop.f32.mrb[0].mxu0
        %v1003 = vadd.f32 %v954, %v1002
        %v1004 = vpop.f32.mrb[0].mxu0
        %v1005 = vpop.f32.mrb[0].mxu0
        %v1006 = vpop.f32.mrb[0].mxu0
        %1007 = vdwg.mxu0
        %1009 = vrot.lane.b32.xlu0 %v874, 120
        %v1010 = vpop.permute.xlu0 %1009
        %1012 = vrot.lane.b32.xlu0 %v874, 112
        %v1013 = vpop.permute.xlu0 %1012
        %1015 = vrot.lane.b32.xlu0 %v874, 104
        %v1016 = vpop.permute.xlu0 %1015
        %v1018 = vpack.c.bf16 %v874, %v874
        %v1019 = vpack.c.bf16 %v1010, %v1010
        %v1020 = vpack.c.bf16 %v1013, %v1013
        %v1021 = vpack.c.bf16 %v1016, %v1016
        %1023 = vrot.lane.b32.xlu0 %v940, 120
        %v1024 = vpop.permute.xlu0 %1023
        %1026 = vrot.lane.b32.xlu0 %v940, 112
        %v1027 = vpop.permute.xlu0 %1026
        %1029 = vrot.lane.b32.xlu0 %v940, 104
        %v1030 = vpop.permute.xlu0 %1029
        %v1032 = vpack.c.bf16 %v940, %v940
        %v1033 = vpack.c.bf16 %v1024, %v1024
        %v1034 = vpack.c.bf16 %v1027, %v1027
        %v1035 = vpack.c.bf16 %v1030, %v1030
        %1037 = vrot.lane.b32.xlu0 %v1003, 120
        %v1038 = vpop.permute.xlu0 %1037
        %1040 = vrot.lane.b32.xlu0 %v1003, 112
        %v1041 = vpop.permute.xlu0 %1040
        %1043 = vrot.lane.b32.xlu0 %v1003, 104
        %v1044 = vpop.permute.xlu0 %1043
        %v1046 = vpack.c.bf16 %v1003, %v1003
        %v1047 = vpack.c.bf16 %v1038, %v1038
        %v1048 = vpack.c.bf16 %v1041, %v1041
        %v1049 = vpack.c.bf16 %v1044, %v1044
        %vm1050 = vcmask 64512
        %v1052 = vsel %vm1050, %v1018, 0
        %v1055 = vsel %vm1050, %v1032, 0
        %1057 = vmatprep.subr.bf16.mxu0 0
        %1058 = vmatpush1.bf16.xpose.msra.mxu0 %v1055
        %1059 = vmatprep.subr.bf16.mxu0 0
        %1060 = vmatpush1.bf16.xpose.msra.mxu0 0
        %1061 = vmatprep.subr.bf16.mxu0 0
        %1062 = vmatpush1.bf16.xpose.msra.mxu0 0
        %1063 = vmatprep.subr.bf16.mxu0 0
        %1064 = vmatpush1.bf16.xpose.msra.mxu0 0
        %1065 = vmatprep.subr.bf16.mxu0 0
        %1066 = vmatpush1.bf16.xpose.msra.mxu0 0
        %1067 = vmatprep.subr.bf16.mxu0 0
        %1068 = vmatpush1.bf16.xpose.msra.mxu0 0
        %1069 = vmatprep.subr.bf16.mxu0 0
        %1070 = vmatpush1.bf16.xpose.msra.mxu0 0
        %1071 = vmatprep.subr.bf16.mxu0 0
        %1072 = vmatpush1.bf16.xpose.msra.mxu0 0
        %1073 = vmatprep.subr.bf16.mxu0 0
        %1074 = vmatpush1.bf16.xpose.msra.mxu0 0
        %1075 = vmatprep.subr.bf16.mxu0 0
        %1076 = vmatpush1.bf16.xpose.msra.mxu0 0
        %1077 = vmatprep.subr.bf16.mxu0 0
        %1078 = vmatpush1.bf16.xpose.msra.mxu0 0
        %1079 = vmatprep.subr.bf16.mxu0 0
        %1080 = vmatpush1.bf16.xpose.msra.mxu0 0
        %1081 = vmatprep.subr.bf16.mxu0 0
        %1082 = vmatpush1.bf16.xpose.msra.mxu0 0
        %1083 = vmatprep.subr.bf16.mxu0 0
        %1084 = vmatpush1.bf16.xpose.msra.mxu0 0
        %1085 = vmatprep.subr.bf16.mxu0 0
        %1086 = vmatpush1.bf16.xpose.msra.mxu0 0
        %1087 = vmatprep.subr.bf16.mxu0 0
        %1088 = vmatpush1.bf16.xpose.msra.mxu0 0
        %1089 = vmatprep.mubr.bf16.mxu0 0
        %1090 = vmatmul.mubr.bf16.gmra.mrb[0].mxu0 %v1052
        %v1091 = vpop.f32.mrb[0].mxu0
        %v1092 = vadd.f32 0.0, %v1091
        %v1093 = vpop.f32.mrb[0].mxu0
        %v1094 = vpop.f32.mrb[0].mxu0
        %v1095 = vpop.f32.mrb[0].mxu0
        %1096 = vdwg.mxu0
        %v1098 = vsel %vm1050, %v1019, 0
        %v1101 = vsel %vm1050, %v1033, 0
        %1103 = vmatprep.subr.bf16.mxu0 0
        %1104 = vmatpush1.bf16.xpose.msra.mxu0 %v1101
        %1105 = vmatprep.subr.bf16.mxu0 0
        %1106 = vmatpush1.bf16.xpose.msra.mxu0 0
        %1107 = vmatprep.subr.bf16.mxu0 0
        %1108 = vmatpush1.bf16.xpose.msra.mxu0 0
        %1109 = vmatprep.subr.bf16.mxu0 0
        %1110 = vmatpush1.bf16.xpose.msra.mxu0 0
        %1111 = vmatprep.subr.bf16.mxu0 0
        %1112 = vmatpush1.bf16.xpose.msra.mxu0 0
        %1113 = vmatprep.subr.bf16.mxu0 0
        %1114 = vmatpush1.bf16.xpose.msra.mxu0 0
        %1115 = vmatprep.subr.bf16.mxu0 0
        %1116 = vmatpush1.bf16.xpose.msra.mxu0 0
        %1117 = vmatprep.subr.bf16.mxu0 0
        %1118 = vmatpush1.bf16.xpose.msra.mxu0 0
        %1119 = vmatprep.subr.bf16.mxu0 0
        %1120 = vmatpush1.bf16.xpose.msra.mxu0 0
        %1121 = vmatprep.subr.bf16.mxu0 0
        %1122 = vmatpush1.bf16.xpose.msra.mxu0 0
        %1123 = vmatprep.subr.bf16.mxu0 0
        %1124 = vmatpush1.bf16.xpose.msra.mxu0 0
        %1125 = vmatprep.subr.bf16.mxu0 0
        %1126 = vmatpush1.bf16.xpose.msra.mxu0 0
        %1127 = vmatprep.subr.bf16.mxu0 0
        %1128 = vmatpush1.bf16.xpose.msra.mxu0 0
        %1129 = vmatprep.subr.bf16.mxu0 0
        %1130 = vmatpush1.bf16.xpose.msra.mxu0 0
        %1131 = vmatprep.subr.bf16.mxu0 0
        %1132 = vmatpush1.bf16.xpose.msra.mxu0 0
        %1133 = vmatprep.subr.bf16.mxu0 0
        %1134 = vmatpush1.bf16.xpose.msra.mxu0 0
        %1135 = vmatprep.mubr.bf16.mxu0 0
        %1136 = vmatmul.mubr.bf16.gmra.mrb[0].mxu0 %v1098
        %v1137 = vpop.f32.mrb[0].mxu0
        %v1138 = vadd.f32 0.0, %v1137
        %v1139 = vpop.f32.mrb[0].mxu0
        %v1140 = vpop.f32.mrb[0].mxu0
        %v1141 = vpop.f32.mrb[0].mxu0
        %1142 = vdwg.mxu0
        %v1144 = vsel %vm1050, %v1020, 0
        %v1147 = vsel %vm1050, %v1034, 0
        %1149 = vmatprep.subr.bf16.mxu0 0
        %1150 = vmatpush1.bf16.xpose.msra.mxu0 %v1147
        %1151 = vmatprep.subr.bf16.mxu0 0
        %1152 = vmatpush1.bf16.xpose.msra.mxu0 0
        %1153 = vmatprep.subr.bf16.mxu0 0
        %1154 = vmatpush1.bf16.xpose.msra.mxu0 0
        %1155 = vmatprep.subr.bf16.mxu0 0
        %1156 = vmatpush1.bf16.xpose.msra.mxu0 0
        %1157 = vmatprep.subr.bf16.mxu0 0
        %1158 = vmatpush1.bf16.xpose.msra.mxu0 0
        %1159 = vmatprep.subr.bf16.mxu0 0
        %1160 = vmatpush1.bf16.xpose.msra.mxu0 0
        %1161 = vmatprep.subr.bf16.mxu0 0
        %1162 = vmatpush1.bf16.xpose.msra.mxu0 0
        %1163 = vmatprep.subr.bf16.mxu0 0
        %1164 = vmatpush1.bf16.xpose.msra.mxu0 0
        %1165 = vmatprep.subr.bf16.mxu0 0
        %1166 = vmatpush1.bf16.xpose.msra.mxu0 0
        %1167 = vmatprep.subr.bf16.mxu0 0
        %1168 = vmatpush1.bf16.xpose.msra.mxu0 0
        %1169 = vmatprep.subr.bf16.mxu0 0
        %1170 = vmatpush1.bf16.xpose.msra.mxu0 0
        %1171 = vmatprep.subr.bf16.mxu0 0
        %1172 = vmatpush1.bf16.xpose.msra.mxu0 0
        %1173 = vmatprep.subr.bf16.mxu0 0
        %1174 = vmatpush1.bf16.xpose.msra.mxu0 0
        %1175 = vmatprep.subr.bf16.mxu0 0
        %1176 = vmatpush1.bf16.xpose.msra.mxu0 0
        %1177 = vmatprep.subr.bf16.mxu0 0
        %1178 = vmatpush1.bf16.xpose.msra.mxu0 0
        %1179 = vmatprep.subr.bf16.mxu0 0
        %1180 = vmatpush1.bf16.xpose.msra.mxu0 0
        %1181 = vmatprep.mubr.bf16.mxu0 0
        %1182 = vmatmul.mubr.bf16.gmra.mrb[0].mxu0 %v1144
        %v1183 = vpop.f32.mrb[0].mxu0
        %v1184 = vadd.f32 0.0, %v1183
        %v1185 = vpop.f32.mrb[0].mxu0
        %v1186 = vpop.f32.mrb[0].mxu0
        %v1187 = vpop.f32.mrb[0].mxu0
        %1188 = vdwg.mxu0
        %v1190 = vsel %vm1050, %v1021, 0
        %v1193 = vsel %vm1050, %v1035, 0
        %1195 = vmatprep.subr.bf16.mxu0 0
        %1196 = vmatpush1.bf16.xpose.msra.mxu0 %v1193
        %1197 = vmatprep.subr.bf16.mxu0 0
        %1198 = vmatpush1.bf16.xpose.msra.mxu0 0
        %1199 = vmatprep.subr.bf16.mxu0 0
        %1200 = vmatpush1.bf16.xpose.msra.mxu0 0
        %1201 = vmatprep.subr.bf16.mxu0 0
        %1202 = vmatpush1.bf16.xpose.msra.mxu0 0
        %1203 = vmatprep.subr.bf16.mxu0 0
        %1204 = vmatpush1.bf16.xpose.msra.mxu0 0
        %1205 = vmatprep.subr.bf16.mxu0 0
        %1206 = vmatpush1.bf16.xpose.msra.mxu0 0
        %1207 = vmatprep.subr.bf16.mxu0 0
        %1208 = vmatpush1.bf16.xpose.msra.mxu0 0
        %1209 = vmatprep.subr.bf16.mxu0 0
        %1210 = vmatpush1.bf16.xpose.msra.mxu0 0
        %1211 = vmatprep.subr.bf16.mxu0 0
        %1212 = vmatpush1.bf16.xpose.msra.mxu0 0
        %1213 = vmatprep.subr.bf16.mxu0 0
        %1214 = vmatpush1.bf16.xpose.msra.mxu0 0
        %1215 = vmatprep.subr.bf16.mxu0 0
        %1216 = vmatpush1.bf16.xpose.msra.mxu0 0
        %1217 = vmatprep.subr.bf16.mxu0 0
        %1218 = vmatpush1.bf16.xpose.msra.mxu0 0
        %1219 = vmatprep.subr.bf16.mxu0 0
        %1220 = vmatpush1.bf16.xpose.msra.mxu0 0
        %1221 = vmatprep.subr.bf16.mxu0 0
        %1222 = vmatpush1.bf16.xpose.msra.mxu0 0
        %1223 = vmatprep.subr.bf16.mxu0 0
        %1224 = vmatpush1.bf16.xpose.msra.mxu0 0
        %1225 = vmatprep.subr.bf16.mxu0 0
        %1226 = vmatpush1.bf16.xpose.msra.mxu0 0
        %1227 = vmatprep.mubr.bf16.mxu0 0
        %1228 = vmatmul.mubr.bf16.gmra.mrb[0].mxu0 %v1190
        %v1229 = vpop.f32.mrb[0].mxu0
        %v1230 = vadd.f32 0.0, %v1229
        %v1231 = vpop.f32.mrb[0].mxu0
        %v1232 = vpop.f32.mrb[0].mxu0
        %v1233 = vpop.f32.mrb[0].mxu0
        %1234 = vdwg.mxu0
        %v1235 = vmul.f32 %v1092, 0.35355338
        %v1236 = vmul.f32 %v1138, 0.35355338
        %v1237 = vmul.f32 %v1184, 0.35355338
        %v1238 = vmul.f32 %v1230, 0.35355338
        %v1240 = vlaneseq
        %v1241 = vshrl.u32 %v1240, 7
        %v1242 = vsub.s32 0, %v1241
        %v1243 = vrot.slane %v811, %v1242
        %v1245 = vadd.f32 %v1235, %v1243
        %v1246 = vadd.f32 %v1236, %v1243
        %v1247 = vadd.f32 %v1237, %v1243
        %v1248 = vadd.f32 %v1238, %v1243
        %1249 = vst.msk [vmem:[%s794] sm:$0xff] %vm1050, %v1245
        %1250 = vst.msk [vmem:[%s794 + $0x8] sm:$0xff] %vm1050, %v1246
        %1251 = vst.msk [vmem:[%s794 + $0x10] sm:$0xff] %vm1050, %v1247
        %1252 = vst.msk [vmem:[%s794 + $0x18] sm:$0xff] %vm1050, %v1248
        %v1253 = vsel %vm1050, %v1245, -inf
        %1254 = vmax.xlane.f32.xlu0 %v1253
        %v1255 = vpop.xlane.xlu0 %1254
        %v1256 = vsel %vm1050, %v1246, -inf
        %1257 = vmax.xlane.f32.xlu0 %v1256
        %v1258 = vpop.xlane.xlu0 %1257
        %v1259 = vsel %vm1050, %v1247, -inf
        %1260 = vmax.xlane.f32.xlu0 %v1259
        %v1261 = vpop.xlane.xlu0 %1260
        %v1262 = vsel %vm1050, %v1248, -inf
        %1263 = vmax.xlane.f32.xlu0 %v1262
        %v1264 = vpop.xlane.xlu0 %1263
        %v1265 = vsub.f32 %v1245, %v1255
        %v1266 = vsub.f32 %v1246, %v1258
        %v1267 = vsub.f32 %v1247, %v1261
        %v1268 = vsub.f32 %v1248, %v1264
        %v1269 = vmul.f32 %v1265, 1.442695
        %v1270 = vpow.pop %v1269
        %v1271 = vmul.f32 %v1266, 1.442695
        %v1272 = vpow.pop %v1271
        %v1273 = vmul.f32 %v1267, 1.442695
        %v1274 = vpow.pop %v1273
        %v1275 = vmul.f32 %v1268, 1.442695
        %v1276 = vpow.pop %v1275
        %v1277 = vsel %vm1050, %v1270, 0.0
        %1278 = vadd.xlane.f32.xlu0 %v1277
        %v1279 = vpop.xlane.xlu0 %1278
        %v1280 = vsel %vm1050, %v1272, 0.0
        %1281 = vadd.xlane.f32.xlu0 %v1280
        %v1282 = vpop.xlane.xlu0 %1281
        %v1283 = vsel %vm1050, %v1274, 0.0
        %1284 = vadd.xlane.f32.xlu0 %v1283
        %v1285 = vpop.xlane.xlu0 %1284
        %v1286 = vsel %vm1050, %v1276, 0.0
        %1287 = vadd.xlane.f32.xlu0 %v1286
        %v1288 = vpop.xlane.xlu0 %1287
        %v1289 = vrcp.pop %v1279
        %v1290 = vrcp.pop %v1282
        %v1291 = vrcp.pop %v1285
        %v1292 = vrcp.pop %v1288
        %v1293 = vmul.f32 %v1270, %v1289
        %v1294 = vmul.f32 %v1272, %v1290
        %v1295 = vmul.f32 %v1274, %v1291
        %v1296 = vmul.f32 %v1276, %v1292
        %v1297 = vpack.c.bf16 %v1293, %v1293
        %v1298 = vpack.c.bf16 %v1294, %v1294
        %v1299 = vpack.c.bf16 %v1295, %v1295
        %v1300 = vpack.c.bf16 %v1296, %v1296
        %v1302 = vsel %vm1050, %v1297, 0
        %vm1304 = vcmask 1043456
        %v1306 = vsel %vm1304, %v1046, 0
        %1308 = vmatprep.subr.bf16.mxu0 0
        %1309 = vmatpush1.bf16.msra.mxu0 %v1306
        %1310 = vmatprep.subr.bf16.mxu0 0
        %1311 = vmatpush1.bf16.msra.mxu0 0
        %1312 = vmatprep.subr.bf16.mxu0 0
        %1313 = vmatpush1.bf16.msra.mxu0 0
        %1314 = vmatprep.subr.bf16.mxu0 0
        %1315 = vmatpush1.bf16.msra.mxu0 0
        %1316 = vmatprep.subr.bf16.mxu0 0
        %1317 = vmatpush1.bf16.msra.mxu0 0
        %1318 = vmatprep.subr.bf16.mxu0 0
        %1319 = vmatpush1.bf16.msra.mxu0 0
        %1320 = vmatprep.subr.bf16.mxu0 0
        %1321 = vmatpush1.bf16.msra.mxu0 0
        %1322 = vmatprep.subr.bf16.mxu0 0
        %1323 = vmatpush1.bf16.msra.mxu0 0
        %1324 = vmatprep.subr.bf16.mxu0 0
        %1325 = vmatpush1.bf16.msra.mxu0 0
        %1326 = vmatprep.subr.bf16.mxu0 0
        %1327 = vmatpush1.bf16.msra.mxu0 0
        %1328 = vmatprep.subr.bf16.mxu0 0
        %1329 = vmatpush1.bf16.msra.mxu0 0
        %1330 = vmatprep.subr.bf16.mxu0 0
        %1331 = vmatpush1.bf16.msra.mxu0 0
        %1332 = vmatprep.subr.bf16.mxu0 0
        %1333 = vmatpush1.bf16.msra.mxu0 0
        %1334 = vmatprep.subr.bf16.mxu0 0
        %1335 = vmatpush1.bf16.msra.mxu0 0
        %1336 = vmatprep.subr.bf16.mxu0 0
        %1337 = vmatpush1.bf16.msra.mxu0 0
        %1338 = vmatprep.subr.bf16.mxu0 0
        %1339 = vmatpush1.bf16.msra.mxu0 0
        %1340 = vmatprep.mubr.bf16.mxu0 0
        %1341 = vmatmul.mubr.bf16.gmra.mrb[0].mxu0 %v1302
        %v1342 = vpop.f32.mrb[0].mxu0
        %v1343 = vadd.f32 0.0, %v1342
        %v1344 = vpop.f32.mrb[0].mxu0
        %v1345 = vpop.f32.mrb[0].mxu0
        %v1346 = vpop.f32.mrb[0].mxu0
        %1347 = vdwg.mxu0
        %v1349 = vsel %vm1050, %v1298, 0
        %v1352 = vsel %vm1304, %v1047, 0
        %1354 = vmatprep.subr.bf16.mxu0 0
        %1355 = vmatpush1.bf16.msra.mxu0 %v1352
        %1356 = vmatprep.subr.bf16.mxu0 0
        %1357 = vmatpush1.bf16.msra.mxu0 0
        %1358 = vmatprep.subr.bf16.mxu0 0
        %1359 = vmatpush1.bf16.msra.mxu0 0
        %1360 = vmatprep.subr.bf16.mxu0 0
        %1361 = vmatpush1.bf16.msra.mxu0 0
        %1362 = vmatprep.subr.bf16.mxu0 0
        %1363 = vmatpush1.bf16.msra.mxu0 0
        %1364 = vmatprep.subr.bf16.mxu0 0
        %1365 = vmatpush1.bf16.msra.mxu0 0
        %1366 = vmatprep.subr.bf16.mxu0 0
        %1367 = vmatpush1.bf16.msra.mxu0 0
        %1368 = vmatprep.subr.bf16.mxu0 0
        %1369 = vmatpush1.bf16.msra.mxu0 0
        %1370 = vmatprep.subr.bf16.mxu0 0
        %1371 = vmatpush1.bf16.msra.mxu0 0
        %1372 = vmatprep.subr.bf16.mxu0 0
        %1373 = vmatpush1.bf16.msra.mxu0 0
        %1374 = vmatprep.subr.bf16.mxu0 0
        %1375 = vmatpush1.bf16.msra.mxu0 0
        %1376 = vmatprep.subr.bf16.mxu0 0
        %1377 = vmatpush1.bf16.msra.mxu0 0
        %1378 = vmatprep.subr.bf16.mxu0 0
        %1379 = vmatpush1.bf16.msra.mxu0 0
        %1380 = vmatprep.subr.bf16.mxu0 0
        %1381 = vmatpush1.bf16.msra.mxu0 0
        %1382 = vmatprep.subr.bf16.mxu0 0
        %1383 = vmatpush1.bf16.msra.mxu0 0
        %1384 = vmatprep.subr.bf16.mxu0 0
        %1385 = vmatpush1.bf16.msra.mxu0 0
        %1386 = vmatprep.mubr.bf16.mxu0 0
        %1387 = vmatmul.mubr.bf16.gmra.mrb[0].mxu0 %v1349
        %v1388 = vpop.f32.mrb[0].mxu0
        %v1389 = vadd.f32 0.0, %v1388
        %v1390 = vpop.f32.mrb[0].mxu0
        %v1391 = vpop.f32.mrb[0].mxu0
        %v1392 = vpop.f32.mrb[0].mxu0
        %1393 = vdwg.mxu0
        %v1395 = vsel %vm1050, %v1299, 0
        %v1398 = vsel %vm1304, %v1048, 0
        %1400 = vmatprep.subr.bf16.mxu0 0
        %1401 = vmatpush1.bf16.msra.mxu0 %v1398
        %1402 = vmatprep.subr.bf16.mxu0 0
        %1403 = vmatpush1.bf16.msra.mxu0 0
        %1404 = vmatprep.subr.bf16.mxu0 0
        %1405 = vmatpush1.bf16.msra.mxu0 0
        %1406 = vmatprep.subr.bf16.mxu0 0
        %1407 = vmatpush1.bf16.msra.mxu0 0
        %1408 = vmatprep.subr.bf16.mxu0 0
        %1409 = vmatpush1.bf16.msra.mxu0 0
        %1410 = vmatprep.subr.bf16.mxu0 0
        %1411 = vmatpush1.bf16.msra.mxu0 0
        %1412 = vmatprep.subr.bf16.mxu0 0
        %1413 = vmatpush1.bf16.msra.mxu0 0
        %1414 = vmatprep.subr.bf16.mxu0 0
        %1415 = vmatpush1.bf16.msra.mxu0 0
        %1416 = vmatprep.subr.bf16.mxu0 0
        %1417 = vmatpush1.bf16.msra.mxu0 0
        %1418 = vmatprep.subr.bf16.mxu0 0
        %1419 = vmatpush1.bf16.msra.mxu0 0
        %1420 = vmatprep.subr.bf16.mxu0 0
        %1421 = vmatpush1.bf16.msra.mxu0 0
        %1422 = vmatprep.subr.bf16.mxu0 0
        %1423 = vmatpush1.bf16.msra.mxu0 0
        %1424 = vmatprep.subr.bf16.mxu0 0
        %1425 = vmatpush1.bf16.msra.mxu0 0
        %1426 = vmatprep.subr.bf16.mxu0 0
        %1427 = vmatpush1.bf16.msra.mxu0 0
        %1428 = vmatprep.subr.bf16.mxu0 0
        %1429 = vmatpush1.bf16.msra.mxu0 0
        %1430 = vmatprep.subr.bf16.mxu0 0
        %1431 = vmatpush1.bf16.msra.mxu0 0
        %1432 = vmatprep.mubr.bf16.mxu0 0
        %1433 = vmatmul.mubr.bf16.gmra.mrb[0].mxu0 %v1395
        %v1434 = vpop.f32.mrb[0].mxu0
        %v1435 = vadd.f32 0.0, %v1434
        %v1436 = vpop.f32.mrb[0].mxu0
        %v1437 = vpop.f32.mrb[0].mxu0
        %v1438 = vpop.f32.mrb[0].mxu0
        %1439 = vdwg.mxu0
        %v1441 = vsel %vm1050, %v1300, 0
        %v1444 = vsel %vm1304, %v1049, 0
        %1446 = vmatprep.subr.bf16.mxu0 0
        %1447 = vmatpush1.bf16.msra.mxu0 %v1444
        %1448 = vmatprep.subr.bf16.mxu0 0
        %1449 = vmatpush1.bf16.msra.mxu0 0
        %1450 = vmatprep.subr.bf16.mxu0 0
        %1451 = vmatpush1.bf16.msra.mxu0 0
        %1452 = vmatprep.subr.bf16.mxu0 0
        %1453 = vmatpush1.bf16.msra.mxu0 0
        %1454 = vmatprep.subr.bf16.mxu0 0
        %1455 = vmatpush1.bf16.msra.mxu0 0
        %1456 = vmatprep.subr.bf16.mxu0 0
        %1457 = vmatpush1.bf16.msra.mxu0 0
        %1458 = vmatprep.subr.bf16.mxu0 0
        %1459 = vmatpush1.bf16.msra.mxu0 0
        %1460 = vmatprep.subr.bf16.mxu0 0
        %1461 = vmatpush1.bf16.msra.mxu0 0
        %1462 = vmatprep.subr.bf16.mxu0 0
        %1463 = vmatpush1.bf16.msra.mxu0 0
        %1464 = vmatprep.subr.bf16.mxu0 0
        %1465 = vmatpush1.bf16.msra.mxu0 0
        %1466 = vmatprep.subr.bf16.mxu0 0
        %1467 = vmatpush1.bf16.msra.mxu0 0
        %1468 = vmatprep.subr.bf16.mxu0 0
        %1469 = vmatpush1.bf16.msra.mxu0 0
        %1470 = vmatprep.subr.bf16.mxu0 0
        %1471 = vmatpush1.bf16.msra.mxu0 0
        %1472 = vmatprep.subr.bf16.mxu0 0
        %1473 = vmatpush1.bf16.msra.mxu0 0
        %1474 = vmatprep.subr.bf16.mxu0 0
        %1475 = vmatpush1.bf16.msra.mxu0 0
        %1476 = vmatprep.subr.bf16.mxu0 0
        %1477 = vmatpush1.bf16.msra.mxu0 0
        %1478 = vmatprep.mubr.bf16.mxu0 0
        %1479 = vmatmul.mubr.bf16.gmra.mrb[0].mxu0 %v1441
        %v1480 = vpop.f32.mrb[0].mxu0
        %v1481 = vadd.f32 0.0, %v1480
        %v1482 = vpop.f32.mrb[0].mxu0
        %v1483 = vpop.f32.mrb[0].mxu0
        %v1484 = vpop.f32.mrb[0].mxu0
        %1485 = vdwg.mxu0
        %1487 = vrot.lane.b32.xlu0 %v1389, 8
        %v1488 = vpop.permute.xlu0 %1487
        %1491 = vrot.lane.b32.xlu0 %v1435, 16
        %v1492 = vpop.permute.xlu0 %1491
        %1495 = vrot.lane.b32.xlu0 %v1481, 24
        %v1496 = vpop.permute.xlu0 %1495
        %v1498 = vsel %vm1050, %v1343, %v1488
        %vm1499 = vcmask 130048
        %v1500 = vsel %vm1499, %v1498, %v1492
        %vm1501 = vcmask 195584
        %v1502 = vsel %vm1501, %v1500, %v1496
        %v1503 = vpack.c.bf16 %v1502, %v1502
        %v1504 = vld [vmem:[%s9] sm:$0xf]
        %v1505 = vld [vmem:[%s9 + $0x4] sm:$0xf]
        %v1506 = vld [vmem:[%s9 + $0x8] sm:$0xf]
        %v1507 = vld [vmem:[%s9 + $0xc] sm:$0xf]
        %v1508 = vld [vmem:[#allocation11] sm:$0x1]
        %v1510 = vlaneseq
        %v1511 = vshrl.u32 %v1510, 7
        %v1512 = vsub.s32 0, %v1511
        %v1513 = vrot.slane %v1508, %v1512
        %v1519 = vunpack.c.l.b16 %v1504
        %v1520 = vunpack.c.l.b16 %v1505
        %v1521 = vunpack.c.l.b16 %v1506
        %v1522 = vunpack.c.l.b16 %v1507
        %v1523 = vpack.c.b16 %v1520, %v1519
        %v1524 = vpack.c.b16 %v1522, %v1521
        %v1528 = vsel %vm835, %v1503, 0
        %1530 = vmatprep.subr.bf16.mxu0 0
        %1531 = vmatpush1.bf16.msra.mxu0 %v1523
        %1532 = vmatprep.subr.bf16.mxu0 0
        %1533 = vmatpush1.bf16.msra.mxu0 %v1524
        %1534 = vmatprep.subr.bf16.mxu0 0
        %1535 = vmatpush1.bf16.msra.mxu0 0
        %1536 = vmatprep.subr.bf16.mxu0 0
        %1537 = vmatpush1.bf16.msra.mxu0 0
        %1538 = vmatprep.subr.bf16.mxu0 0
        %1539 = vmatpush1.bf16.msra.mxu0 0
        %1540 = vmatprep.subr.bf16.mxu0 0
        %1541 = vmatpush1.bf16.msra.mxu0 0
        %1542 = vmatprep.subr.bf16.mxu0 0
        %1543 = vmatpush1.bf16.msra.mxu0 0
        %1544 = vmatprep.subr.bf16.mxu0 0
        %1545 = vmatpush1.bf16.msra.mxu0 0
        %1546 = vmatprep.subr.bf16.mxu0 0
        %1547 = vmatpush1.bf16.msra.mxu0 0
        %1548 = vmatprep.subr.bf16.mxu0 0
        %1549 = vmatpush1.bf16.msra.mxu0 0
        %1550 = vmatprep.subr.bf16.mxu0 0
        %1551 = vmatpush1.bf16.msra.mxu0 0
        %1552 = vmatprep.subr.bf16.mxu0 0
        %1553 = vmatpush1.bf16.msra.mxu0 0
        %1554 = vmatprep.subr.bf16.mxu0 0
        %1555 = vmatpush1.bf16.msra.mxu0 0
        %1556 = vmatprep.subr.bf16.mxu0 0
        %1557 = vmatpush1.bf16.msra.mxu0 0
        %1558 = vmatprep.subr.bf16.mxu0 0
        %1559 = vmatpush1.bf16.msra.mxu0 0
        %1560 = vmatprep.subr.bf16.mxu0 0
        %1561 = vmatpush1.bf16.msra.mxu0 0
        %1562 = vmatprep.mubr.bf16.mxu0 0
        %1563 = vmatmul.mubr.bf16.gmra.mrb[0].mxu0 %v1528
        %v1564 = vpop.f32.mrb[0].mxu0
        %v1565 = vadd.f32 %v1513, %v1564
        %v1566 = vpop.f32.mrb[0].mxu0
        %v1567 = vpop.f32.mrb[0].mxu0
        %v1568 = vpop.f32.mrb[0].mxu0
        %1569 = vdwg.mxu0
        %v1570 = vadd.f32 %v1565, %v807
        %v1571 = vld [vmem:[#allocation13] sm:$0x1]
        %v1572 = vld [vmem:[#allocation14] sm:$0x1]
        %v1573 = vsel %vm835, %v1570, 0.0
        %1574 = vadd.xlane.f32.xlu0 %v1573
        %v1575 = vpop.xlane.xlu0 %1574
        %v1576 = vrcp.pop 32.0
        %v1577 = vmul.f32 %v1575, %v1576
        %v1578 = vsub.f32 %v1570, %v1577
        %v1579 = vmul.f32 %v1578, %v1578
        %v1580 = vsel %vm835, %v1579, 0.0
        %1581 = vadd.xlane.f32.xlu0 %v1580
        %v1582 = vpop.xlane.xlu0 %1581
        %v1583 = vmul.f32 %v1582, %v1576
        %v1584 = vadd.f32 %v1583, 1e-12
        %v1585 = vrsqrt.pop %v1584
        %v1586 = vmul.f32 %v1578, %v1585
        %v1588 = vlaneseq
        %v1589 = vshrl.u32 %v1588, 7
        %v1590 = vsub.s32 0, %v1589
        %v1591 = vrot.slane %v1571, %v1590
        %v1593 = vmul.f32 %v1586, %v1591
        %v1595 = vlaneseq
        %v1596 = vshrl.u32 %v1595, 7
        %v1597 = vsub.s32 0, %v1596
        %v1598 = vrot.slane %v1572, %v1597
        %v1600 = vadd.f32 %v1593, %v1598
        %v1601 = vpack.c.bf16 %v1600, %v1600
        %v1602 = vld [vmem:[%s13] sm:$0xf]
        %v1603 = vld [vmem:[%s13 + $0x4] sm:$0xf]
        %v1604 = vld [vmem:[%s13 + $0x8] sm:$0xf]
        %v1605 = vld [vmem:[%s13 + $0xc] sm:$0xf]
        %v1606 = vld [vmem:[%s14] sm:$0x1]
        %v1608 = vlaneseq
        %v1609 = vshrl.u32 %v1608, 7
        %v1610 = vsub.s32 0, %v1609
        %v1611 = vrot.slane %v1606, %v1610
        %v1617 = vunpack.c.l.b16 %v1602
        %v1618 = vunpack.c.l.b16 %v1603
        %v1619 = vunpack.c.l.b16 %v1604
        %v1620 = vunpack.c.l.b16 %v1605
        %v1621 = vpack.c.b16 %v1618, %v1617
        %v1622 = vpack.c.b16 %v1620, %v1619
        %v1626 = vsel %vm835, %v1601, 0
        %1628 = vmatprep.subr.bf16.mxu0 0
        %1629 = vmatpush1.bf16.msra.mxu0 %v1621
        %1630 = vmatprep.subr.bf16.mxu0 0
        %1631 = vmatpush1.bf16.msra.mxu0 %v1622
        %1632 = vmatprep.subr.bf16.mxu0 0
        %1633 = vmatpush1.bf16.msra.mxu0 0
        %1634 = vmatprep.subr.bf16.mxu0 0
        %1635 = vmatpush1.bf16.msra.mxu0 0
        %1636 = vmatprep.subr.bf16.mxu0 0
        %1637 = vmatpush1.bf16.msra.mxu0 0
        %1638 = vmatprep.subr.bf16.mxu0 0
        %1639 = vmatpush1.bf16.msra.mxu0 0
        %1640 = vmatprep.subr.bf16.mxu0 0
        %1641 = vmatpush1.bf16.msra.mxu0 0
        %1642 = vmatprep.subr.bf16.mxu0 0
        %1643 = vmatpush1.bf16.msra.mxu0 0
        %1644 = vmatprep.subr.bf16.mxu0 0
        %1645 = vmatpush1.bf16.msra.mxu0 0
        %1646 = vmatprep.subr.bf16.mxu0 0
        %1647 = vmatpush1.bf16.msra.mxu0 0
        %1648 = vmatprep.subr.bf16.mxu0 0
        %1649 = vmatpush1.bf16.msra.mxu0 0
        %1650 = vmatprep.subr.bf16.mxu0 0
        %1651 = vmatpush1.bf16.msra.mxu0 0
        %1652 = vmatprep.subr.bf16.mxu0 0
        %1653 = vmatpush1.bf16.msra.mxu0 0
        %1654 = vmatprep.subr.bf16.mxu0 0
        %1655 = vmatpush1.bf16.msra.mxu0 0
        %1656 = vmatprep.subr.bf16.mxu0 0
        %1657 = vmatpush1.bf16.msra.mxu0 0
        %1658 = vmatprep.subr.bf16.mxu0 0
        %1659 = vmatpush1.bf16.msra.mxu0 0
        %1660 = vmatprep.mubr.bf16.mxu0 0
        %1661 = vmatmul.mubr.bf16.gmra.mrb[0].mxu0 %v1626
        %v1662 = vpop.f32.mrb[0].mxu0
        %v1663 = vadd.f32 %v1611, %v1662
        %v1664 = vpop.f32.mrb[0].mxu0
        %v1665 = vpop.f32.mrb[0].mxu0
        %v1666 = vpop.f32.mrb[0].mxu0
        %1667 = vdwg.mxu0
        %v1668 = vmul.f32 %v1663, 0.5
        %v1669 = vrcp.pop 1.4142135
        %v1670 = vmul.f32 %v1663, %v1669
        %v1671 = verf.f32.pop %v1670
        %v1672 = vadd.f32 %v1671, 1.0
        %v1673 = vmul.f32 %v1668, %v1672
        %v1674 = vpack.c.bf16 %v1673, %v1673
        %v1675 = vld [vmem:[%s15] sm:$0xf]
        %v1676 = vld [vmem:[%s15 + $0x4] sm:$0xf]
        %v1677 = vld [vmem:[%s15 + $0x8] sm:$0xf]
        %v1678 = vld [vmem:[%s15 + $0xc] sm:$0xf]
        %v1679 = vld [vmem:[%s15 + $0x10] sm:$0xf]
        %v1680 = vld [vmem:[%s15 + $0x14] sm:$0xf]
        %v1681 = vld [vmem:[%s15 + $0x18] sm:$0xf]
        %v1682 = vld [vmem:[%s15 + $0x1c] sm:$0xf]
        %v1683 = vld [vmem:[%s16] sm:$0x1]
        %v1685 = vlaneseq
        %v1686 = vshrl.u32 %v1685, 7
        %v1687 = vsub.s32 0, %v1686
        %v1688 = vrot.slane %v1683, %v1687
        %v1698 = vunpack.c.l.b16 %v1675
        %v1699 = vunpack.c.l.b16 %v1676
        %v1700 = vunpack.c.l.b16 %v1677
        %v1701 = vunpack.c.l.b16 %v1678
        %v1702 = vunpack.c.l.b16 %v1679
        %v1703 = vunpack.c.l.b16 %v1680
        %v1704 = vunpack.c.l.b16 %v1681
        %v1705 = vunpack.c.l.b16 %v1682
        %v1706 = vpack.c.b16 %v1699, %v1698
        %v1707 = vpack.c.b16 %v1701, %v1700
        %v1708 = vpack.c.b16 %v1703, %v1702
        %v1709 = vpack.c.b16 %v1705, %v1704
        %vm1714 = vcmask 523264
        %v1716 = vsel %vm1714, %v1674, 0
        %1718 = vmatprep.subr.bf16.mxu0 0
        %1719 = vmatpush1.bf16.msra.mxu0 %v1706
        %1720 = vmatprep.subr.bf16.mxu0 0
        %1721 = vmatpush1.bf16.msra.mxu0 %v1707
        %1722 = vmatprep.subr.bf16.mxu0 0
        %1723 = vmatpush1.bf16.msra.mxu0 %v1708
        %1724 = vmatprep.subr.bf16.mxu0 0
        %1725 = vmatpush1.bf16.msra.mxu0 %v1709
        %1726 = vmatprep.subr.bf16.mxu0 0
        %1727 = vmatpush1.bf16.msra.mxu0 0
        %1728 = vmatprep.subr.bf16.mxu0 0
        %1729 = vmatpush1.bf16.msra.mxu0 0
        %1730 = vmatprep.subr.bf16.mxu0 0
        %1731 = vmatpush1.bf16.msra.mxu0 0
        %1732 = vmatprep.subr.bf16.mxu0 0
        %1733 = vmatpush1.bf16.msra.mxu0 0
        %1734 = vmatprep.subr.bf16.mxu0 0
        %1735 = vmatpush1.bf16.msra.mxu0 0
        %1736 = vmatprep.subr.bf16.mxu0 0
        %1737 = vmatpush1.bf16.msra.mxu0 0
        %1738 = vmatprep.subr.bf16.mxu0 0
        %1739 = vmatpush1.bf16.msra.mxu0 0
        %1740 = vmatprep.subr.bf16.mxu0 0
        %1741 = vmatpush1.bf16.msra.mxu0 0
        %1742 = vmatprep.subr.bf16.mxu0 0
        %1743 = vmatpush1.bf16.msra.mxu0 0
        %1744 = vmatprep.subr.bf16.mxu0 0
        %1745 = vmatpush1.bf16.msra.mxu0 0
        %1746 = vmatprep.subr.bf16.mxu0 0
        %1747 = vmatpush1.bf16.msra.mxu0 0
        %1748 = vmatprep.subr.bf16.mxu0 0
        %1749 = vmatpush1.bf16.msra.mxu0 0
        %1750 = vmatprep.mubr.bf16.mxu0 0
        %1751 = vmatmul.mubr.bf16.gmra.mrb[0].mxu0 %v1716
        %v1752 = vpop.f32.mrb[0].mxu0
        %v1753 = vadd.f32 %v1688, %v1752
        %v1754 = vpop.f32.mrb[0].mxu0
        %v1755 = vpop.f32.mrb[0].mxu0
        %v1756 = vpop.f32.mrb[0].mxu0
        %1757 = vdwg.mxu0
        %v1758 = vadd.f32 %v1753, %v1600
        %v1759 = vld [vmem:[%s17] sm:$0x1]
        %v1760 = vld [vmem:[%s18] sm:$0x1]
        %v1761 = vsel %vm835, %v1758, 0.0
        %1762 = vadd.xlane.f32.xlu0 %v1761
        %v1763 = vpop.xlane.xlu0 %1762
        %v1764 = vmul.f32 %v1763, %v1576
        %v1765 = vsub.f32 %v1758, %v1764
        %v1766 = vmul.f32 %v1765, %v1765
        %v1767 = vsel %vm835, %v1766, 0.0
        %1768 = vadd.xlane.f32.xlu0 %v1767
        %v1769 = vpop.xlane.xlu0 %1768
        %v1770 = vmul.f32 %v1769, %v1576
        %v1771 = vadd.f32 %v1770, 1e-12
        %v1772 = vrsqrt.pop %v1771
        %v1773 = vmul.f32 %v1765, %v1772
        %v1775 = vlaneseq
        %v1776 = vshrl.u32 %v1775, 7
        %v1777 = vsub.s32 0, %v1776
        %v1778 = vrot.slane %v1759, %v1777
        %v1780 = vmul.f32 %v1773, %v1778
        %v1782 = vlaneseq
        %v1783 = vshrl.u32 %v1782, 7
        %v1784 = vsub.s32 0, %v1783
        %v1785 = vrot.slane %v1760, %v1784
        %v1787 = vadd.f32 %v1780, %v1785
        %1788 = vst.msk [vmem:[%s787] sm:$0xff] %vm835, %v1787
        %s1789 = sand.u32 %s483, 1
        %s1790 = scalar_lea.sflag [#allocation4], %s1789
        %s1791 = sand.u32 %s483, 1
        %s1792 = smul.addr %s1791, 8
        %s1793 = scalar_lea.vmem [#allocation16], %s1792
        %s1794 = sand.u32 %s511, 1
        %s1795 = scalar_lea.sflag [#allocation18], %s1794
        %s1796 = sand.u32 %s511, 1
        %s1797 = smul.addr %s1796, 32
        %s1798 = scalar_lea.vmem [#allocation17], %s1797
        // Predicated region
        $region129: #{tpu_custom_call.1} parent=95 // pred_check
          %p1799 = pneg %p493
        $region130: #{tpu_custom_call.1} parent=95 // pred_check_branch
          %1801 = sbr.rel (%p1799) target = $region132
        $region131: #{tpu_custom_call.1} parent=95 // pred_region
          %s1803 = ssub.s32 128, 128
          %1804 = vsyncadd %s1790, %s1803
          %s1805 = sadd.s32 %s50, %s49
          %s1806 = smul.addr %s1805, 128
          %s1807 = scalar_lea.hbm %s19, %s1806
          %s1809 = sshll.u32 %s1793, 4
          %s1810 = int_to_ptr.vmem [resolvable:$true] %s1809
          %1812 = dma.vmem_to_hbm [thread:$0]  %s1810, 128, %s1807, %s1790
        $region132: #{tpu_custom_call.1} parent=95 // pred_fallthru
          _
        // Predicated region
        $region133: #{tpu_custom_call.1} parent=95 // pred_check
          %p1813 = pneg %p521
        $region134: #{tpu_custom_call.1} parent=95 // pred_check_branch
          %1815 = sbr.rel (%p1813) target = $region136
        $region135: #{tpu_custom_call.1} parent=95 // pred_region
          %s1817 = ssub.s32 512, 512
          %1818 = vsyncadd %s1795, %s1817
          %s1819 = smul.addr %s49, 4
          %s1820 = sadd.s32 %s50, %s1819
          %s1821 = smul.addr %s1820, 128
          %s1822 = scalar_lea.hbm %s20, %s1821
          %s1823 = sshll.u32 %s1798, 4
          %s1824 = int_to_ptr.vmem [resolvable:$true] %s1823
          %1829 = dma.vmem_to_hbm [thread:$0]  %s1824, 512, %s1822, %s1795, 128, 128, 8
        $region136: #{tpu_custom_call.1} parent=95 // pred_fallthru
          _
      $region96: #{tpu_custom_call.1} parent=5 // pred_fallthru
        _
      %p1830 = scmp.le.s32.totalorder 2, %s40
      // Predicated region
      $region137: #{tpu_custom_call.1} parent=5 // pred_check
        %p1831 = pneg %p1830
      $region138: #{tpu_custom_call.1} parent=5 // pred_check_branch
        %1833 = sbr.rel (%p1831) target = $region140
      $region139: #{tpu_custom_call.1} parent=5 // pred_region
        %s1834 = ssub.s32 %s40, 2
        // Predicated region
        $region141: #{tpu_custom_call.1} parent=139 // pred_check
          %p1835 = pneg %p499
        $region142: #{tpu_custom_call.1} parent=139 // pred_check_branch
          %1837 = sbr.rel (%p1835) target = $region144
        $region143: #{tpu_custom_call.1} parent=139 // pred_region
          %s1838 = sand.u32 %s484, 1
          %s1839 = scalar_lea.sflag [#allocation4], %s1838
          %s1840 = sand.u32 %s484, 1
          %s1841 = smul.addr %s1840, 8
          %s1842 = scalar_lea.vmem [#allocation16], %s1841
          %1843 = dma.done %s1839, 128
        $region144: #{tpu_custom_call.1} parent=139 // pred_fallthru
          _
        // Predicated region
        $region145: #{tpu_custom_call.1} parent=139 // pred_check
          %p1844 = pneg %p527
        $region146: #{tpu_custom_call.1} parent=139 // pred_check_branch
          %1846 = sbr.rel (%p1844) target = $region148
        $region147: #{tpu_custom_call.1} parent=139 // pred_region
          %s1847 = sand.u32 %s512, 1
          %s1848 = scalar_lea.sflag [#allocation18], %s1847
          %s1849 = sand.u32 %s512, 1
          %s1850 = smul.addr %s1849, 32
          %s1851 = scalar_lea.vmem [#allocation17], %s1850
          %1852 = dma.done %s1848, 512
        $region148: #{tpu_custom_call.1} parent=139 // pred_fallthru
          _
      $region140: #{tpu_custom_call.1} parent=5 // pred_fallthru
        _
    $region6: #{tpu_custom_call.1} parent=1 // loop_footer
      %s44 = sadd.s32 1, %s40
    $region7: #{tpu_custom_call.1} parent=1 // loop_footer_branch
      %39 = sbr.rel target = $region3
    $region8: #{tpu_custom_call.1} parent=1 // loop_exit
      _
    %1853 = vsyncpa [#allocation3], 1
    %s1854 = scalar_lea.sflag [#allocation3], 1
    %1855 = vsyncpa %s1854, 1
    %1856 = vsyncpa [#allocation6], 1
    %1857 = vsyncpa [#allocation9], 1
    %1858 = vsyncpa [#allocation12], 1
    %1859 = vsyncpa [#allocation15], 1
    %1860 = vsyncpa [#allocation4], 1
    %s1861 = scalar_lea.sflag [#allocation4], 1
    %1862 = vsyncpa %s1861, 1
    %1863 = vsyncpa [#allocation18], 1
    %s1864 = scalar_lea.sflag [#allocation18], 1
    %1865 = vsyncpa %s1864, 1

</llo_original>
